<compile_context>
chip_gen: v6e
topology: v6e:2x2x1
jax: 0.10.0
libtpu: 0.0.40
codegen_flags: <defaults>
</compile_context>

<pallas_src>
import jax
import jax.numpy as jnp
from jax.experimental import pallas as pl
from jax.experimental.pallas import tpu as pltpu

_NEG_INF = -1e9
_PROCESSING_STEPS = 6


# ----------------------------------------------------------------------------
# Fused kernel: GAT x3 -> Set2Set(6) -> MLP
# ----------------------------------------------------------------------------
def _critic_fused_kernel(
    # graph inputs
    x_ref, adj_ref, mask_ref,
    # 3 x GATConv params: weight (Fin,H), att (2,H) [row0=src,row1=dst], bias (1,H)
    gw1_ref, ga1_ref, gb1_ref,
    gw2_ref, ga2_ref, gb2_ref,
    gw3_ref, ga3_ref, gb3_ref,
    # Set2Set LSTM params (per-gate, pre-transposed): w_ih (4,2H,H), w_hh (4,H,H), bias (4,H)
    wih_ref, whh_ref, bg_ref,
    # MLP params
    mw1_ref, mb1_ref, mw2_ref, mb2_ref, mw3_ref, mb3_ref,
    # output
    out_ref,
):
    f32 = jnp.float32
    bf16 = jnp.bfloat16

    # Masks live in HBM as int8 (4x smaller DMA); compare in f32 on-chip.
    adj_mask = adj_ref[...].astype(f32) > 0.0            # (N, N) bool, loaded ONCE, reused 3x
    graph_mask = mask_ref[...].astype(f32) > 0.0         # (G, N) bool

    # --- GAT: 3 single-head GATConv layers + ReLU ----------------------------
    def gat_layer(h_in, w_ref, att_ref, bias_ref):
        h = jnp.dot(h_in.astype(bf16), w_ref[...].astype(bf16),
                    preferred_element_type=f32)                       # (N, H) f32
        h_bf = h.astype(bf16)                                         # single cast, reused 2x
        att = att_ref[...]                                            # (2, H) f32
        s_dst = jnp.sum(h * att[1:2, :], axis=1, keepdims=True)       # (N, 1)  VPU+XLU
        # (1, N) lane row produced directly by the MXU -- no sublane->lane transpose.
        s_src = jax.lax.dot_general(att[0:1, :].astype(bf16), h_bf,
                                    (((1,), (1,)), ((), ())),
                                    preferred_element_type=f32)       # (1, N)
        e = s_dst + s_src                                             # e[i,j] = a_dst.h_i + a_src.h_j
        e = jnp.where(e > 0, e, 0.2 * e)                              # LeakyReLU(0.2)
        # Self-loops guarantee >=1 valid entry per row (no all-masked rows).
        e = jnp.where(adj_mask, e, _NEG_INF)
        e = e - jnp.max(e, axis=1, keepdims=True)                     # softmax over senders j (f32)
        p = jnp.exp(e)
        inv = pl.reciprocal(jnp.sum(p, axis=1, keepdims=True), approx=True)  # EUP
        alpha = p * inv
        out = jnp.dot(alpha.astype(bf16), h_bf,
                      preferred_element_type=f32) + bias_ref[...]
        return jnp.maximum(out, 0.0)                                  # ReLU after each layer

    h = gat_layer(x_ref[...].astype(f32), gw1_ref, ga1_ref, gb1_ref)
    h = gat_layer(h, gw2_ref, ga2_ref, gb2_ref)
    h = gat_layer(h, gw3_ref, ga3_ref, gb3_ref)                       # (N, H)

    # --- Set2Set pooling (processing_steps = 6), LSTM(2H -> H) ---------------
    nodes_bf16 = h.astype(bf16)                                       # hoisted out of the loop
    wih = [wih_ref[k].astype(bf16) for k in range(4)]                 # each (2H, H), pre-transposed
    whh = [whh_ref[k].astype(bf16) for k in range(4)]                 # each (H, H), pre-transposed
    bgs = bg_ref[...]                                                 # (4, H) f32 = b_ih + b_hh
    bias_rows = [bgs[k:k + 1, :] for k in range(4)]                   # hoisted loop-invariant slices

    G = mask_ref.shape[0]
    H = h.shape[1]
    q_star = jnp.zeros((G, 2 * H), f32)
    h_t = jnp.zeros((G, H), f32)
    c_t = jnp.zeros((G, H), f32)

    for _ in range(_PROCESSING_STEPS):                                # static unroll
        qs_bf = q_star.astype(bf16)
        ht_bf = h_t.astype(bf16)

        def gate(k):                                                  # (G, H) f32, no lane-misaligned slices
            return (jnp.dot(qs_bf, wih[k], preferred_element_type=f32)
                    + jnp.dot(ht_bf, whh[k], preferred_element_type=f32)
                    + bias_rows[k])

        i_g = jax.nn.sigmoid(gate(0))                                 # PyTorch LSTM gate order i,f,g,o
        f_g = jax.nn.sigmoid(gate(1))
        g_g = jnp.tanh(gate(2))
        o_g = jax.nn.sigmoid(gate(3))
        c_t = f_g * c_t + i_g * g_g
        h_t = o_g * jnp.tanh(c_t)
        q = h_t                                                       # (G, H)

        # attention logits s[g, n] = q_g . x_n  (contract H vs H -- no x.T)
        s = jax.lax.dot_general(q.astype(bf16), nodes_bf16,
                                (((1,), (1,)), ((), ())),
                                preferred_element_type=f32)           # (G, N)
        s = jnp.where(graph_mask, s, _NEG_INF)                        # per-graph softmax over own nodes
        s = s - jnp.max(s, axis=1, keepdims=True)
        p = jnp.exp(s)
        inv = pl.reciprocal(jnp.sum(p, axis=1, keepdims=True), approx=True)  # EUP
        a = p * inv
        r = jnp.dot(a.astype(bf16), nodes_bf16,
                    preferred_element_type=f32)                       # (G, H) readout
        q_star = jnp.concatenate([q, r], axis=1)                      # (G, 2H)

    # --- MLP head: Linear(2H,H) ReLU  Linear(H,H) ReLU  Linear(H,1) ----------
    m1 = jnp.dot(q_star.astype(bf16), mw1_ref[...].astype(bf16),
                 preferred_element_type=f32) + mb1_ref[...]
    m1 = jnp.maximum(m1, 0.0)
    m2 = jnp.dot(m1.astype(bf16), mw2_ref[...].astype(bf16),
                 preferred_element_type=f32) + mb2_ref[...]
    m2 = jnp.maximum(m2, 0.0)
    # Final Linear(H, 1) as a VPU multiply + lane reduction (no 1-column matmul).
    out_ref[...] = jnp.sum(m2 * mw3_ref[...], axis=1, keepdims=True) + mb3_ref[...]


# ----------------------------------------------------------------------------
# Wrapper: one pallas_call for the whole critic forward
# ----------------------------------------------------------------------------
def rtgn_gat_critic_forward(params, x, adj_i8, batch_mask_i8):
    H = params["gat"][0]["w"].shape[1]
    G = batch_mask_i8.shape[0]

    inputs = [x, adj_i8, batch_mask_i8]
    for layer in params["gat"]:
        att = jnp.concatenate([layer["att_src"], layer["att_dst"]], axis=0)   # (2, H)
        inputs += [layer["w"], att, layer["bias"]]

    # PyTorch nn.LSTM layout: weight_ih (4H, 2H), weight_hh (4H, H), gates i,f,g,o.
    # Split per gate and pre-transpose ONCE here (host side) so the kernel never
    # transposes or slices gates inside the 6-step unroll.
    w_ih = params["lstm"]["w_ih"].reshape(4, H, 2 * H).transpose(0, 2, 1)     # (4, 2H, H)
    w_hh = params["lstm"]["w_hh"].reshape(4, H, H).transpose(0, 2, 1)         # (4, H, H)
    b_g = (params["lstm"]["b_ih"] + params["lstm"]["b_hh"]).reshape(4, H)     # (4, H)
    inputs += [w_ih, w_hh, b_g]

    inputs += [params["mlp"]["w1"], params["mlp"]["b1"],
               params["mlp"]["w2"], params["mlp"]["b2"],
               params["mlp"]["w3"].reshape(1, H),                             # row form for VPU reduce
               params["mlp"]["b3"]]

    return pl.pallas_call(
        _critic_fused_kernel,
        out_shape=jax.ShapeDtypeStruct((G, 1), jnp.float32),
        in_specs=[pl.BlockSpec(memory_space=pltpu.MemorySpace.VMEM)] * len(inputs),
        out_specs=pl.BlockSpec(memory_space=pltpu.MemorySpace.VMEM),
        compiler_params=pltpu.CompilerParams(vmem_limit_bytes=32 * 1024 * 1024),
    )(*inputs)


# ----------------------------------------------------------------------------
# Parameter init (matches PyTorch layer shapes)
# ----------------------------------------------------------------------------
def init_params(key, node_dim, hidden_dim):
    ks = jax.random.split(key, 16)
    scale = 0.1
    gat_layers = []
    fin = node_dim
    for l in range(3):
        k0, k1, k2 = jax.random.split(ks[l], 3)
        gat_layers.append(dict(
            w=scale * jax.random.normal(k0, (fin, hidden_dim), jnp.float32),
            att_src=scale * jax.random.normal(k1, (1, hidden_dim), jnp.float32),
            att_dst=scale * jax.random.normal(k2, (1, hidden_dim), jnp.float32),
            bias=jnp.zeros((1, hidden_dim), jnp.float32),
        ))
        fin = hidden_dim
    lstm = dict(
        w_ih=scale * jax.random.normal(ks[4], (4 * hidden_dim, 2 * hidden_dim), jnp.float32),
        w_hh=scale * jax.random.normal(ks[5], (4 * hidden_dim, hidden_dim), jnp.float32),
        b_ih=jnp.zeros((1, 4 * hidden_dim), jnp.float32),
        b_hh=jnp.zeros((1, 4 * hidden_dim), jnp.float32),
    )
    mlp_p = dict(
        w1=scale * jax.random.normal(ks[6], (2 * hidden_dim, hidden_dim), jnp.float32),
        b1=jnp.zeros((1, hidden_dim), jnp.float32),
        w2=scale * jax.random.normal(ks[7], (hidden_dim, hidden_dim), jnp.float32),
        b2=jnp.zeros((1, hidden_dim), jnp.float32),
        w3=scale * jax.random.normal(ks[8], (hidden_dim, 1), jnp.float32),
        b3=jnp.zeros((1, 1), jnp.float32),
    )
    return dict(gat=gat_layers, lstm=lstm, mlp=mlp_p)


if __name__ == "__main__":
    key = jax.random.PRNGKey(0)
    node_dim = 16
    hidden_dim = 32
    num_graphs = 2
    nodes_per_graph = 8
    n_nodes = num_graphs * nodes_per_graph          # 16 total nodes

    k_x, k_p = jax.random.split(key)
    # Node features (data.x)
    x = jax.random.normal(k_x, (n_nodes, node_dim), jnp.float32)

    # Dense adjacency: per-graph ring (undirected) + self loops. adj[i,j]=1
    # means node i receives a message from node j. Stored as int8.
    adj = jnp.zeros((n_nodes, n_nodes), jnp.float32)
    for g in range(num_graphs):
        base = g * nodes_per_graph
        for u in range(nodes_per_graph):
            i = base + u
            j = base + (u + 1) % nodes_per_graph
            adj = adj.at[i, j].set(1.0)
            adj = adj.at[j, i].set(1.0)
    adj = adj + jnp.eye(n_nodes, dtype=jnp.float32)          # self loops (GATConv default)
    adj_i8 = (adj > 0).astype(jnp.int8)

    # data.batch as a one-hot (G, N) int8 mask.
    batch = jnp.repeat(jnp.arange(num_graphs), nodes_per_graph)
    batch_mask_i8 = (batch[None, :] == jnp.arange(num_graphs)[:, None]).astype(jnp.int8)

    params = init_params(k_p, node_dim, hidden_dim)

    # obs = (data, nonring, nrbidx, torsion_list_sizes); only `data` is used
    # by the critic forward — the other three are ignored, as in PyTorch.
    v = rtgn_gat_critic_forward(params, x, adj_i8, batch_mask_i8)
    v = jax.block_until_ready(v)
    assert v.shape == (num_graphs, 1)
    print("KERNEL_OK")
</pallas_src>

<mosaic_0001>
module attributes {stable_mosaic.version = 11 : i64} {
  func.func @_critic_fused_kernel(%arg0: memref<16x16xf32, #tpu.memory_space<vmem>>, %arg1: memref<16x16xi8, #tpu.memory_space<vmem>>, %arg2: memref<2x16xi8, #tpu.memory_space<vmem>>, %arg3: memref<16x32xf32, #tpu.memory_space<vmem>>, %arg4: memref<2x32xf32, #tpu.memory_space<vmem>>, %arg5: memref<1x32xf32, #tpu.memory_space<vmem>>, %arg6: memref<32x32xf32, #tpu.memory_space<vmem>>, %arg7: memref<2x32xf32, #tpu.memory_space<vmem>>, %arg8: memref<1x32xf32, #tpu.memory_space<vmem>>, %arg9: memref<32x32xf32, #tpu.memory_space<vmem>>, %arg10: memref<2x32xf32, #tpu.memory_space<vmem>>, %arg11: memref<1x32xf32, #tpu.memory_space<vmem>>, %arg12: memref<4x64x32xf32, #tpu.memory_space<vmem>>, %arg13: memref<4x32x32xf32, #tpu.memory_space<vmem>>, %arg14: memref<4x32xf32, #tpu.memory_space<vmem>>, %arg15: memref<64x32xf32, #tpu.memory_space<vmem>>, %arg16: memref<1x32xf32, #tpu.memory_space<vmem>>, %arg17: memref<32x32xf32, #tpu.memory_space<vmem>>, %arg18: memref<1x32xf32, #tpu.memory_space<vmem>>, %arg19: memref<1x32xf32, #tpu.memory_space<vmem>>, %arg20: memref<1x1xf32, #tpu.memory_space<vmem>>, %arg21: memref<2x1xf32, #tpu.memory_space<vmem>>) attributes {dimension_semantics = [], scalar_prefetch = 0 : i64, scratch_operands = 0 : i64, tpu.core_type = #tpu.core_type<tc>} {
    %c0 = arith.constant 0 : index
    %c0_0 = arith.constant 0 : index
    %0 = vector.load %arg1[%c0, %c0_0] : memref<16x16xi8, #tpu.memory_space<vmem>>, vector<16x16xi8>
    %1 = arith.sitofp %0 : vector<16x16xi8> to vector<16x16xf32>
    %cst = arith.constant 0.000000e+00 : f32
    %2 = vector.broadcast %cst : f32 to vector<16x16xf32>
    %3 = arith.cmpf ogt, %1, %2 : vector<16x16xf32>
    %c0_1 = arith.constant 0 : index
    %c0_2 = arith.constant 0 : index
    %4 = vector.load %arg2[%c0_1, %c0_2] : memref<2x16xi8, #tpu.memory_space<vmem>>, vector<2x16xi8>
    %5 = arith.sitofp %4 : vector<2x16xi8> to vector<2x16xf32>
    %cst_3 = arith.constant 0.000000e+00 : f32
    %6 = vector.broadcast %cst_3 : f32 to vector<2x16xf32>
    %7 = arith.cmpf ogt, %5, %6 : vector<2x16xf32>
    %c0_4 = arith.constant 0 : index
    %c0_5 = arith.constant 0 : index
    %8 = vector.load %arg0[%c0_4, %c0_5] : memref<16x16xf32, #tpu.memory_space<vmem>>, vector<16x16xf32>
    %9 = arith.truncf %8 : vector<16x16xf32> to vector<16x16xbf16>
    %c0_6 = arith.constant 0 : index
    %c0_7 = arith.constant 0 : index
    %10 = vector.load %arg3[%c0_6, %c0_7] : memref<16x32xf32, #tpu.memory_space<vmem>>, vector<16x32xf32>
    %11 = arith.truncf %10 : vector<16x32xf32> to vector<16x32xbf16>
    %cst_8 = arith.constant dense<0.000000e+00> : vector<16x32xf32>
    %12 = tpu.matmul %9, %11, %cst_8 {dimension_numbers = #tpu.dot_dimension_numbers<[1], [0], [0], [1], [0, 0, 1, 1], [], []>} : vector<16x16xbf16>, vector<16x32xbf16>, vector<16x32xf32> -> vector<16x32xf32>
    %13 = arith.truncf %12 : vector<16x32xf32> to vector<16x32xbf16>
    %c0_9 = arith.constant 0 : index
    %c0_10 = arith.constant 0 : index
    %14 = vector.load %arg4[%c0_9, %c0_10] : memref<2x32xf32, #tpu.memory_space<vmem>>, vector<2x32xf32>
    %15 = vector.extract_strided_slice %14 {offsets = [1, 0], sizes = [1, 32], strides = [1, 1]} : vector<2x32xf32> to vector<1x32xf32>
    %16 = vector.broadcast %15 : vector<1x32xf32> to vector<16x32xf32>
    %17 = arith.mulf %12, %16 : vector<16x32xf32>
    %cst_11 = arith.constant dense<0.000000e+00> : vector<16xf32>
    %18 = vector.multi_reduction <add>, %17, %cst_11 [1] : vector<16x32xf32> to vector<16xf32>
    %19 = vector.shape_cast %18 : vector<16xf32> to vector<16x1xf32>
    %20 = vector.extract_strided_slice %14 {offsets = [0, 0], sizes = [1, 32], strides = [1, 1]} : vector<2x32xf32> to vector<1x32xf32>
    %21 = arith.truncf %20 : vector<1x32xf32> to vector<1x32xbf16>
    %cst_12 = arith.constant dense<0.000000e+00> : vector<1x16xf32>
    %22 = tpu.matmul %21, %13, %cst_12 {dimension_numbers = #tpu.dot_dimension_numbers<[1], [1], [0], [0], [0, 0, 1, 0], [], []>} : vector<1x32xbf16>, vector<16x32xbf16>, vector<1x16xf32> -> vector<1x16xf32>
    %23 = vector.broadcast %19 : vector<16x1xf32> to vector<16x16xf32>
    %24 = vector.broadcast %22 : vector<1x16xf32> to vector<16x16xf32>
    %25 = arith.addf %23, %24 : vector<16x16xf32>
    %cst_13 = arith.constant 0.000000e+00 : f32
    %26 = vector.broadcast %cst_13 : f32 to vector<16x16xf32>
    %27 = arith.cmpf ogt, %25, %26 : vector<16x16xf32>
    %cst_14 = arith.constant 2.000000e-01 : f32
    %28 = vector.broadcast %cst_14 : f32 to vector<16x16xf32>
    %29 = arith.mulf %28, %25 : vector<16x16xf32>
    %30 = arith.select %27, %25, %29 : vector<16x16xi1>, vector<16x16xf32>
    %cst_15 = arith.constant -1.000000e+09 : f32
    %31 = vector.broadcast %cst_15 : f32 to vector<16x16xf32>
    %32 = arith.select %3, %30, %31 : vector<16x16xi1>, vector<16x16xf32>
    %cst_16 = arith.constant dense<0xFF800000> : vector<16xf32>
    %33 = vector.multi_reduction <maximumf>, %32, %cst_16 [1] : vector<16x16xf32> to vector<16xf32>
    %34 = vector.shape_cast %33 : vector<16xf32> to vector<16x1xf32>
    %35 = vector.broadcast %34 : vector<16x1xf32> to vector<16x16xf32>
    %36 = arith.subf %32, %35 : vector<16x16xf32>
    %37 = math.exp %36 : vector<16x16xf32>
    %cst_17 = arith.constant dense<0.000000e+00> : vector<16xf32>
    %38 = vector.multi_reduction <add>, %37, %cst_17 [1] : vector<16x16xf32> to vector<16xf32>
    %39 = vector.shape_cast %38 : vector<16xf32> to vector<16x1xf32>
    %40 = tpu.reciprocal %39 {approx = true} : vector<16x1xf32> -> vector<16x1xf32>
    %41 = vector.broadcast %40 : vector<16x1xf32> to vector<16x16xf32>
    %42 = arith.mulf %37, %41 : vector<16x16xf32>
    %43 = arith.truncf %42 : vector<16x16xf32> to vector<16x16xbf16>
    %cst_18 = arith.constant dense<0.000000e+00> : vector<16x32xf32>
    %44 = tpu.matmul %43, %13, %cst_18 {dimension_numbers = #tpu.dot_dimension_numbers<[1], [0], [0], [1], [0, 0, 1, 1], [], []>} : vector<16x16xbf16>, vector<16x32xbf16>, vector<16x32xf32> -> vector<16x32xf32>
    %c0_19 = arith.constant 0 : index
    %c0_20 = arith.constant 0 : index
    %45 = vector.load %arg5[%c0_19, %c0_20] : memref<1x32xf32, #tpu.memory_space<vmem>>, vector<1x32xf32>
    %46 = vector.broadcast %45 : vector<1x32xf32> to vector<16x32xf32>
    %47 = arith.addf %44, %46 : vector<16x32xf32>
    %cst_21 = arith.constant 0.000000e+00 : f32
    %48 = vector.broadcast %cst_21 : f32 to vector<16x32xf32>
    %49 = arith.maximumf %47, %48 : vector<16x32xf32>
    %50 = arith.truncf %49 : vector<16x32xf32> to vector<16x32xbf16>
    %c0_22 = arith.constant 0 : index
    %c0_23 = arith.constant 0 : index
    %51 = vector.load %arg6[%c0_22, %c0_23] : memref<32x32xf32, #tpu.memory_space<vmem>>, vector<32x32xf32>
    %52 = arith.truncf %51 : vector<32x32xf32> to vector<32x32xbf16>
    %cst_24 = arith.constant dense<0.000000e+00> : vector<16x32xf32>
    %53 = tpu.matmul %50, %52, %cst_24 {dimension_numbers = #tpu.dot_dimension_numbers<[1], [0], [0], [1], [0, 0, 1, 1], [], []>} : vector<16x32xbf16>, vector<32x32xbf16>, vector<16x32xf32> -> vector<16x32xf32>
    %54 = arith.truncf %53 : vector<16x32xf32> to vector<16x32xbf16>
    %c0_25 = arith.constant 0 : index
    %c0_26 = arith.constant 0 : index
    %55 = vector.load %arg7[%c0_25, %c0_26] : memref<2x32xf32, #tpu.memory_space<vmem>>, vector<2x32xf32>
    %56 = vector.extract_strided_slice %55 {offsets = [1, 0], sizes = [1, 32], strides = [1, 1]} : vector<2x32xf32> to vector<1x32xf32>
    %57 = vector.broadcast %56 : vector<1x32xf32> to vector<16x32xf32>
    %58 = arith.mulf %53, %57 : vector<16x32xf32>
    %cst_27 = arith.constant dense<0.000000e+00> : vector<16xf32>
    %59 = vector.multi_reduction <add>, %58, %cst_27 [1] : vector<16x32xf32> to vector<16xf32>
    %60 = vector.shape_cast %59 : vector<16xf32> to vector<16x1xf32>
    %61 = vector.extract_strided_slice %55 {offsets = [0, 0], sizes = [1, 32], strides = [1, 1]} : vector<2x32xf32> to vector<1x32xf32>
    %62 = arith.truncf %61 : vector<1x32xf32> to vector<1x32xbf16>
    %cst_28 = arith.constant dense<0.000000e+00> : vector<1x16xf32>
    %63 = tpu.matmul %62, %54, %cst_28 {dimension_numbers = #tpu.dot_dimension_numbers<[1], [1], [0], [0], [0, 0, 1, 0], [], []>} : vector<1x32xbf16>, vector<16x32xbf16>, vector<1x16xf32> -> vector<1x16xf32>
    %64 = vector.broadcast %60 : vector<16x1xf32> to vector<16x16xf32>
    %65 = vector.broadcast %63 : vector<1x16xf32> to vector<16x16xf32>
    %66 = arith.addf %64, %65 : vector<16x16xf32>
    %cst_29 = arith.constant 0.000000e+00 : f32
    %67 = vector.broadcast %cst_29 : f32 to vector<16x16xf32>
    %68 = arith.cmpf ogt, %66, %67 : vector<16x16xf32>
    %cst_30 = arith.constant 2.000000e-01 : f32
    %69 = vector.broadcast %cst_30 : f32 to vector<16x16xf32>
    %70 = arith.mulf %69, %66 : vector<16x16xf32>
    %71 = arith.select %68, %66, %70 : vector<16x16xi1>, vector<16x16xf32>
    %cst_31 = arith.constant -1.000000e+09 : f32
    %72 = vector.broadcast %cst_31 : f32 to vector<16x16xf32>
    %73 = arith.select %3, %71, %72 : vector<16x16xi1>, vector<16x16xf32>
    %cst_32 = arith.constant dense<0xFF800000> : vector<16xf32>
    %74 = vector.multi_reduction <maximumf>, %73, %cst_32 [1] : vector<16x16xf32> to vector<16xf32>
    %75 = vector.shape_cast %74 : vector<16xf32> to vector<16x1xf32>
    %76 = vector.broadcast %75 : vector<16x1xf32> to vector<16x16xf32>
    %77 = arith.subf %73, %76 : vector<16x16xf32>
    %78 = math.exp %77 : vector<16x16xf32>
    %cst_33 = arith.constant dense<0.000000e+00> : vector<16xf32>
    %79 = vector.multi_reduction <add>, %78, %cst_33 [1] : vector<16x16xf32> to vector<16xf32>
    %80 = vector.shape_cast %79 : vector<16xf32> to vector<16x1xf32>
    %81 = tpu.reciprocal %80 {approx = true} : vector<16x1xf32> -> vector<16x1xf32>
    %82 = vector.broadcast %81 : vector<16x1xf32> to vector<16x16xf32>
    %83 = arith.mulf %78, %82 : vector<16x16xf32>
    %84 = arith.truncf %83 : vector<16x16xf32> to vector<16x16xbf16>
    %cst_34 = arith.constant dense<0.000000e+00> : vector<16x32xf32>
    %85 = tpu.matmul %84, %54, %cst_34 {dimension_numbers = #tpu.dot_dimension_numbers<[1], [0], [0], [1], [0, 0, 1, 1], [], []>} : vector<16x16xbf16>, vector<16x32xbf16>, vector<16x32xf32> -> vector<16x32xf32>
    %c0_35 = arith.constant 0 : index
    %c0_36 = arith.constant 0 : index
    %86 = vector.load %arg8[%c0_35, %c0_36] : memref<1x32xf32, #tpu.memory_space<vmem>>, vector<1x32xf32>
    %87 = vector.broadcast %86 : vector<1x32xf32> to vector<16x32xf32>
    %88 = arith.addf %85, %87 : vector<16x32xf32>
    %cst_37 = arith.constant 0.000000e+00 : f32
    %89 = vector.broadcast %cst_37 : f32 to vector<16x32xf32>
    %90 = arith.maximumf %88, %89 : vector<16x32xf32>
    %91 = arith.truncf %90 : vector<16x32xf32> to vector<16x32xbf16>
    %c0_38 = arith.constant 0 : index
    %c0_39 = arith.constant 0 : index
    %92 = vector.load %arg9[%c0_38, %c0_39] : memref<32x32xf32, #tpu.memory_space<vmem>>, vector<32x32xf32>
    %93 = arith.truncf %92 : vector<32x32xf32> to vector<32x32xbf16>
    %cst_40 = arith.constant dense<0.000000e+00> : vector<16x32xf32>
    %94 = tpu.matmul %91, %93, %cst_40 {dimension_numbers = #tpu.dot_dimension_numbers<[1], [0], [0], [1], [0, 0, 1, 1], [], []>} : vector<16x32xbf16>, vector<32x32xbf16>, vector<16x32xf32> -> vector<16x32xf32>
    %95 = arith.truncf %94 : vector<16x32xf32> to vector<16x32xbf16>
    %c0_41 = arith.constant 0 : index
    %c0_42 = arith.constant 0 : index
    %96 = vector.load %arg10[%c0_41, %c0_42] : memref<2x32xf32, #tpu.memory_space<vmem>>, vector<2x32xf32>
    %97 = vector.extract_strided_slice %96 {offsets = [1, 0], sizes = [1, 32], strides = [1, 1]} : vector<2x32xf32> to vector<1x32xf32>
    %98 = vector.broadcast %97 : vector<1x32xf32> to vector<16x32xf32>
    %99 = arith.mulf %94, %98 : vector<16x32xf32>
    %cst_43 = arith.constant dense<0.000000e+00> : vector<16xf32>
    %100 = vector.multi_reduction <add>, %99, %cst_43 [1] : vector<16x32xf32> to vector<16xf32>
    %101 = vector.shape_cast %100 : vector<16xf32> to vector<16x1xf32>
    %102 = vector.extract_strided_slice %96 {offsets = [0, 0], sizes = [1, 32], strides = [1, 1]} : vector<2x32xf32> to vector<1x32xf32>
    %103 = arith.truncf %102 : vector<1x32xf32> to vector<1x32xbf16>
    %cst_44 = arith.constant dense<0.000000e+00> : vector<1x16xf32>
    %104 = tpu.matmul %103, %95, %cst_44 {dimension_numbers = #tpu.dot_dimension_numbers<[1], [1], [0], [0], [0, 0, 1, 0], [], []>} : vector<1x32xbf16>, vector<16x32xbf16>, vector<1x16xf32> -> vector<1x16xf32>
    %105 = vector.broadcast %101 : vector<16x1xf32> to vector<16x16xf32>
    %106 = vector.broadcast %104 : vector<1x16xf32> to vector<16x16xf32>
    %107 = arith.addf %105, %106 : vector<16x16xf32>
    %cst_45 = arith.constant 0.000000e+00 : f32
    %108 = vector.broadcast %cst_45 : f32 to vector<16x16xf32>
    %109 = arith.cmpf ogt, %107, %108 : vector<16x16xf32>
    %cst_46 = arith.constant 2.000000e-01 : f32
    %110 = vector.broadcast %cst_46 : f32 to vector<16x16xf32>
    %111 = arith.mulf %110, %107 : vector<16x16xf32>
    %112 = arith.select %109, %107, %111 : vector<16x16xi1>, vector<16x16xf32>
    %cst_47 = arith.constant -1.000000e+09 : f32
    %113 = vector.broadcast %cst_47 : f32 to vector<16x16xf32>
    %114 = arith.select %3, %112, %113 : vector<16x16xi1>, vector<16x16xf32>
    %cst_48 = arith.constant dense<0xFF800000> : vector<16xf32>
    %115 = vector.multi_reduction <maximumf>, %114, %cst_48 [1] : vector<16x16xf32> to vector<16xf32>
    %116 = vector.shape_cast %115 : vector<16xf32> to vector<16x1xf32>
    %117 = vector.broadcast %116 : vector<16x1xf32> to vector<16x16xf32>
    %118 = arith.subf %114, %117 : vector<16x16xf32>
    %119 = math.exp %118 : vector<16x16xf32>
    %cst_49 = arith.constant dense<0.000000e+00> : vector<16xf32>
    %120 = vector.multi_reduction <add>, %119, %cst_49 [1] : vector<16x16xf32> to vector<16xf32>
    %121 = vector.shape_cast %120 : vector<16xf32> to vector<16x1xf32>
    %122 = tpu.reciprocal %121 {approx = true} : vector<16x1xf32> -> vector<16x1xf32>
    %123 = vector.broadcast %122 : vector<16x1xf32> to vector<16x16xf32>
    %124 = arith.mulf %119, %123 : vector<16x16xf32>
    %125 = arith.truncf %124 : vector<16x16xf32> to vector<16x16xbf16>
    %cst_50 = arith.constant dense<0.000000e+00> : vector<16x32xf32>
    %126 = tpu.matmul %125, %95, %cst_50 {dimension_numbers = #tpu.dot_dimension_numbers<[1], [0], [0], [1], [0, 0, 1, 1], [], []>} : vector<16x16xbf16>, vector<16x32xbf16>, vector<16x32xf32> -> vector<16x32xf32>
    %c0_51 = arith.constant 0 : index
    %c0_52 = arith.constant 0 : index
    %127 = vector.load %arg11[%c0_51, %c0_52] : memref<1x32xf32, #tpu.memory_space<vmem>>, vector<1x32xf32>
    %128 = vector.broadcast %127 : vector<1x32xf32> to vector<16x32xf32>
    %129 = arith.addf %126, %128 : vector<16x32xf32>
    %cst_53 = arith.constant 0.000000e+00 : f32
    %130 = vector.broadcast %cst_53 : f32 to vector<16x32xf32>
    %131 = arith.maximumf %129, %130 : vector<16x32xf32>
    %132 = arith.truncf %131 : vector<16x32xf32> to vector<16x32xbf16>
    %c0_54 = arith.constant 0 : index
    %c0_55 = arith.constant 0 : index
    %c0_56 = arith.constant 0 : index
    %133 = vector.load %arg12[%c0_54, %c0_55, %c0_56] : memref<4x64x32xf32, #tpu.memory_space<vmem>>, vector<1x64x32xf32>
    %134 = vector.shape_cast %133 : vector<1x64x32xf32> to vector<64x32xf32>
    %135 = arith.truncf %134 : vector<64x32xf32> to vector<64x32xbf16>
    %c1 = arith.constant 1 : index
    %c0_57 = arith.constant 0 : index
    %c0_58 = arith.constant 0 : index
    %136 = vector.load %arg12[%c1, %c0_57, %c0_58] : memref<4x64x32xf32, #tpu.memory_space<vmem>>, vector<1x64x32xf32>
    %137 = vector.shape_cast %136 : vector<1x64x32xf32> to vector<64x32xf32>
    %138 = arith.truncf %137 : vector<64x32xf32> to vector<64x32xbf16>
    %c2 = arith.constant 2 : index
    %c0_59 = arith.constant 0 : index
    %c0_60 = arith.constant 0 : index
    %139 = vector.load %arg12[%c2, %c0_59, %c0_60] : memref<4x64x32xf32, #tpu.memory_space<vmem>>, vector<1x64x32xf32>
    %140 = vector.shape_cast %139 : vector<1x64x32xf32> to vector<64x32xf32>
    %141 = arith.truncf %140 : vector<64x32xf32> to vector<64x32xbf16>
    %c3 = arith.constant 3 : index
    %c0_61 = arith.constant 0 : index
    %c0_62 = arith.constant 0 : index
    %142 = vector.load %arg12[%c3, %c0_61, %c0_62] : memref<4x64x32xf32, #tpu.memory_space<vmem>>, vector<1x64x32xf32>
    %143 = vector.shape_cast %142 : vector<1x64x32xf32> to vector<64x32xf32>
    %144 = arith.truncf %143 : vector<64x32xf32> to vector<64x32xbf16>
    %c0_63 = arith.constant 0 : index
    %c0_64 = arith.constant 0 : index
    %c0_65 = arith.constant 0 : index
    %145 = vector.load %arg13[%c0_63, %c0_64, %c0_65] : memref<4x32x32xf32, #tpu.memory_space<vmem>>, vector<1x32x32xf32>
    %146 = vector.shape_cast %145 : vector<1x32x32xf32> to vector<32x32xf32>
    %147 = arith.truncf %146 : vector<32x32xf32> to vector<32x32xbf16>
    %c1_66 = arith.constant 1 : index
    %c0_67 = arith.constant 0 : index
    %c0_68 = arith.constant 0 : index
    %148 = vector.load %arg13[%c1_66, %c0_67, %c0_68] : memref<4x32x32xf32, #tpu.memory_space<vmem>>, vector<1x32x32xf32>
    %149 = vector.shape_cast %148 : vector<1x32x32xf32> to vector<32x32xf32>
    %150 = arith.truncf %149 : vector<32x32xf32> to vector<32x32xbf16>
    %c2_69 = arith.constant 2 : index
    %c0_70 = arith.constant 0 : index
    %c0_71 = arith.constant 0 : index
    %151 = vector.load %arg13[%c2_69, %c0_70, %c0_71] : memref<4x32x32xf32, #tpu.memory_space<vmem>>, vector<1x32x32xf32>
    %152 = vector.shape_cast %151 : vector<1x32x32xf32> to vector<32x32xf32>
    %153 = arith.truncf %152 : vector<32x32xf32> to vector<32x32xbf16>
    %c3_72 = arith.constant 3 : index
    %c0_73 = arith.constant 0 : index
    %c0_74 = arith.constant 0 : index
    %154 = vector.load %arg13[%c3_72, %c0_73, %c0_74] : memref<4x32x32xf32, #tpu.memory_space<vmem>>, vector<1x32x32xf32>
    %155 = vector.shape_cast %154 : vector<1x32x32xf32> to vector<32x32xf32>
    %156 = arith.truncf %155 : vector<32x32xf32> to vector<32x32xbf16>
    %c0_75 = arith.constant 0 : index
    %c0_76 = arith.constant 0 : index
    %157 = vector.load %arg14[%c0_75, %c0_76] : memref<4x32xf32, #tpu.memory_space<vmem>>, vector<4x32xf32>
    %158 = vector.extract_strided_slice %157 {offsets = [0, 0], sizes = [1, 32], strides = [1, 1]} : vector<4x32xf32> to vector<1x32xf32>
    %159 = vector.extract_strided_slice %157 {offsets = [1, 0], sizes = [1, 32], strides = [1, 1]} : vector<4x32xf32> to vector<1x32xf32>
    %160 = vector.extract_strided_slice %157 {offsets = [2, 0], sizes = [1, 32], strides = [1, 1]} : vector<4x32xf32> to vector<1x32xf32>
    %161 = vector.extract_strided_slice %157 {offsets = [3, 0], sizes = [1, 32], strides = [1, 1]} : vector<4x32xf32> to vector<1x32xf32>
    %cst_77 = arith.constant 0.000000e+00 : f32
    %162 = vector.broadcast %cst_77 : f32 to vector<2x64xf32>
    %cst_78 = arith.constant 0.000000e+00 : f32
    %163 = vector.broadcast %cst_78 : f32 to vector<2x32xf32>
    %cst_79 = arith.constant 0.000000e+00 : f32
    %164 = vector.broadcast %cst_79 : f32 to vector<2x32xf32>
    %165 = arith.truncf %162 : vector<2x64xf32> to vector<2x64xbf16>
    %166 = arith.truncf %163 : vector<2x32xf32> to vector<2x32xbf16>
    %cst_80 = arith.constant dense<0.000000e+00> : vector<2x32xf32>
    %167 = tpu.matmul %165, %135, %cst_80 {dimension_numbers = #tpu.dot_dimension_numbers<[1], [0], [0], [1], [0, 0, 1, 1], [], []>} : vector<2x64xbf16>, vector<64x32xbf16>, vector<2x32xf32> -> vector<2x32xf32>
    %cst_81 = arith.constant dense<0.000000e+00> : vector<2x32xf32>
    %168 = tpu.matmul %166, %147, %cst_81 {dimension_numbers = #tpu.dot_dimension_numbers<[1], [0], [0], [1], [0, 0, 1, 1], [], []>} : vector<2x32xbf16>, vector<32x32xbf16>, vector<2x32xf32> -> vector<2x32xf32>
    %169 = arith.addf %167, %168 : vector<2x32xf32>
    %170 = vector.broadcast %158 : vector<1x32xf32> to vector<2x32xf32>
    %171 = arith.addf %169, %170 : vector<2x32xf32>
    %172 = arith.negf %171 : vector<2x32xf32>
    %173 = math.exp %172 : vector<2x32xf32>
    %cst_82 = arith.constant 1.000000e+00 : f32
    %174 = vector.broadcast %cst_82 : f32 to vector<2x32xf32>
    %175 = arith.addf %174, %173 : vector<2x32xf32>
    %176 = arith.divf %174, %175 : vector<2x32xf32>
    %cst_83 = arith.constant dense<0.000000e+00> : vector<2x32xf32>
    %177 = tpu.matmul %165, %138, %cst_83 {dimension_numbers = #tpu.dot_dimension_numbers<[1], [0], [0], [1], [0, 0, 1, 1], [], []>} : vector<2x64xbf16>, vector<64x32xbf16>, vector<2x32xf32> -> vector<2x32xf32>
    %cst_84 = arith.constant dense<0.000000e+00> : vector<2x32xf32>
    %178 = tpu.matmul %166, %150, %cst_84 {dimension_numbers = #tpu.dot_dimension_numbers<[1], [0], [0], [1], [0, 0, 1, 1], [], []>} : vector<2x32xbf16>, vector<32x32xbf16>, vector<2x32xf32> -> vector<2x32xf32>
    %179 = arith.addf %177, %178 : vector<2x32xf32>
    %180 = vector.broadcast %159 : vector<1x32xf32> to vector<2x32xf32>
    %181 = arith.addf %179, %180 : vector<2x32xf32>
    %182 = arith.negf %181 : vector<2x32xf32>
    %183 = math.exp %182 : vector<2x32xf32>
    %cst_85 = arith.constant 1.000000e+00 : f32
    %184 = vector.broadcast %cst_85 : f32 to vector<2x32xf32>
    %185 = arith.addf %184, %183 : vector<2x32xf32>
    %186 = arith.divf %184, %185 : vector<2x32xf32>
    %cst_86 = arith.constant dense<0.000000e+00> : vector<2x32xf32>
    %187 = tpu.matmul %165, %141, %cst_86 {dimension_numbers = #tpu.dot_dimension_numbers<[1], [0], [0], [1], [0, 0, 1, 1], [], []>} : vector<2x64xbf16>, vector<64x32xbf16>, vector<2x32xf32> -> vector<2x32xf32>
    %cst_87 = arith.constant dense<0.000000e+00> : vector<2x32xf32>
    %188 = tpu.matmul %166, %153, %cst_87 {dimension_numbers = #tpu.dot_dimension_numbers<[1], [0], [0], [1], [0, 0, 1, 1], [], []>} : vector<2x32xbf16>, vector<32x32xbf16>, vector<2x32xf32> -> vector<2x32xf32>
    %189 = arith.addf %187, %188 : vector<2x32xf32>
    %190 = vector.broadcast %160 : vector<1x32xf32> to vector<2x32xf32>
    %191 = arith.addf %189, %190 : vector<2x32xf32>
    %192 = math.tanh %191 : vector<2x32xf32>
    %cst_88 = arith.constant dense<0.000000e+00> : vector<2x32xf32>
    %193 = tpu.matmul %165, %144, %cst_88 {dimension_numbers = #tpu.dot_dimension_numbers<[1], [0], [0], [1], [0, 0, 1, 1], [], []>} : vector<2x64xbf16>, vector<64x32xbf16>, vector<2x32xf32> -> vector<2x32xf32>
    %cst_89 = arith.constant dense<0.000000e+00> : vector<2x32xf32>
    %194 = tpu.matmul %166, %156, %cst_89 {dimension_numbers = #tpu.dot_dimension_numbers<[1], [0], [0], [1], [0, 0, 1, 1], [], []>} : vector<2x32xbf16>, vector<32x32xbf16>, vector<2x32xf32> -> vector<2x32xf32>
    %195 = arith.addf %193, %194 : vector<2x32xf32>
    %196 = vector.broadcast %161 : vector<1x32xf32> to vector<2x32xf32>
    %197 = arith.addf %195, %196 : vector<2x32xf32>
    %198 = arith.negf %197 : vector<2x32xf32>
    %199 = math.exp %198 : vector<2x32xf32>
    %cst_90 = arith.constant 1.000000e+00 : f32
    %200 = vector.broadcast %cst_90 : f32 to vector<2x32xf32>
    %201 = arith.addf %200, %199 : vector<2x32xf32>
    %202 = arith.divf %200, %201 : vector<2x32xf32>
    %203 = arith.mulf %186, %164 : vector<2x32xf32>
    %204 = arith.mulf %176, %192 : vector<2x32xf32>
    %205 = arith.addf %203, %204 : vector<2x32xf32>
    %206 = math.tanh %205 : vector<2x32xf32>
    %207 = arith.mulf %202, %206 : vector<2x32xf32>
    %208 = arith.truncf %207 : vector<2x32xf32> to vector<2x32xbf16>
    %cst_91 = arith.constant dense<0.000000e+00> : vector<2x16xf32>
    %209 = tpu.matmul %208, %132, %cst_91 {dimension_numbers = #tpu.dot_dimension_numbers<[1], [1], [0], [0], [0, 0, 1, 0], [], []>} : vector<2x32xbf16>, vector<16x32xbf16>, vector<2x16xf32> -> vector<2x16xf32>
    %cst_92 = arith.constant -1.000000e+09 : f32
    %210 = vector.broadcast %cst_92 : f32 to vector<2x16xf32>
    %211 = arith.select %7, %209, %210 : vector<2x16xi1>, vector<2x16xf32>
    %cst_93 = arith.constant dense<0xFF800000> : vector<2xf32>
    %212 = vector.multi_reduction <maximumf>, %211, %cst_93 [1] : vector<2x16xf32> to vector<2xf32>
    %213 = vector.shape_cast %212 : vector<2xf32> to vector<2x1xf32>
    %214 = vector.broadcast %213 : vector<2x1xf32> to vector<2x16xf32>
    %215 = arith.subf %211, %214 : vector<2x16xf32>
    %216 = math.exp %215 : vector<2x16xf32>
    %cst_94 = arith.constant dense<0.000000e+00> : vector<2xf32>
    %217 = vector.multi_reduction <add>, %216, %cst_94 [1] : vector<2x16xf32> to vector<2xf32>
    %218 = vector.shape_cast %217 : vector<2xf32> to vector<2x1xf32>
    %219 = tpu.reciprocal %218 {approx = true} : vector<2x1xf32> -> vector<2x1xf32>
    %220 = vector.broadcast %219 : vector<2x1xf32> to vector<2x16xf32>
    %221 = arith.mulf %216, %220 : vector<2x16xf32>
    %222 = arith.truncf %221 : vector<2x16xf32> to vector<2x16xbf16>
    %cst_95 = arith.constant dense<0.000000e+00> : vector<2x32xf32>
    %223 = tpu.matmul %222, %132, %cst_95 {dimension_numbers = #tpu.dot_dimension_numbers<[1], [0], [0], [1], [0, 0, 1, 1], [], []>} : vector<2x16xbf16>, vector<16x32xbf16>, vector<2x32xf32> -> vector<2x32xf32>
    %224 = tpu.concatenate %207, %223 in 1 : vector<2x32xf32>, vector<2x32xf32> -> vector<2x64xf32>
    %225 = arith.truncf %224 : vector<2x64xf32> to vector<2x64xbf16>
    %226 = arith.truncf %207 : vector<2x32xf32> to vector<2x32xbf16>
    %cst_96 = arith.constant dense<0.000000e+00> : vector<2x32xf32>
    %227 = tpu.matmul %225, %135, %cst_96 {dimension_numbers = #tpu.dot_dimension_numbers<[1], [0], [0], [1], [0, 0, 1, 1], [], []>} : vector<2x64xbf16>, vector<64x32xbf16>, vector<2x32xf32> -> vector<2x32xf32>
    %cst_97 = arith.constant dense<0.000000e+00> : vector<2x32xf32>
    %228 = tpu.matmul %226, %147, %cst_97 {dimension_numbers = #tpu.dot_dimension_numbers<[1], [0], [0], [1], [0, 0, 1, 1], [], []>} : vector<2x32xbf16>, vector<32x32xbf16>, vector<2x32xf32> -> vector<2x32xf32>
    %229 = arith.addf %227, %228 : vector<2x32xf32>
    %230 = vector.broadcast %158 : vector<1x32xf32> to vector<2x32xf32>
    %231 = arith.addf %229, %230 : vector<2x32xf32>
    %232 = arith.negf %231 : vector<2x32xf32>
    %233 = math.exp %232 : vector<2x32xf32>
    %cst_98 = arith.constant 1.000000e+00 : f32
    %234 = vector.broadcast %cst_98 : f32 to vector<2x32xf32>
    %235 = arith.addf %234, %233 : vector<2x32xf32>
    %236 = arith.divf %234, %235 : vector<2x32xf32>
    %cst_99 = arith.constant dense<0.000000e+00> : vector<2x32xf32>
    %237 = tpu.matmul %225, %138, %cst_99 {dimension_numbers = #tpu.dot_dimension_numbers<[1], [0], [0], [1], [0, 0, 1, 1], [], []>} : vector<2x64xbf16>, vector<64x32xbf16>, vector<2x32xf32> -> vector<2x32xf32>
    %cst_100 = arith.constant dense<0.000000e+00> : vector<2x32xf32>
    %238 = tpu.matmul %226, %150, %cst_100 {dimension_numbers = #tpu.dot_dimension_numbers<[1], [0], [0], [1], [0, 0, 1, 1], [], []>} : vector<2x32xbf16>, vector<32x32xbf16>, vector<2x32xf32> -> vector<2x32xf32>
    %239 = arith.addf %237, %238 : vector<2x32xf32>
    %240 = vector.broadcast %159 : vector<1x32xf32> to vector<2x32xf32>
    %241 = arith.addf %239, %240 : vector<2x32xf32>
    %242 = arith.negf %241 : vector<2x32xf32>
    %243 = math.exp %242 : vector<2x32xf32>
    %cst_101 = arith.constant 1.000000e+00 : f32
    %244 = vector.broadcast %cst_101 : f32 to vector<2x32xf32>
    %245 = arith.addf %244, %243 : vector<2x32xf32>
    %246 = arith.divf %244, %245 : vector<2x32xf32>
    %cst_102 = arith.constant dense<0.000000e+00> : vector<2x32xf32>
    %247 = tpu.matmul %225, %141, %cst_102 {dimension_numbers = #tpu.dot_dimension_numbers<[1], [0], [0], [1], [0, 0, 1, 1], [], []>} : vector<2x64xbf16>, vector<64x32xbf16>, vector<2x32xf32> -> vector<2x32xf32>
    %cst_103 = arith.constant dense<0.000000e+00> : vector<2x32xf32>
    %248 = tpu.matmul %226, %153, %cst_103 {dimension_numbers = #tpu.dot_dimension_numbers<[1], [0], [0], [1], [0, 0, 1, 1], [], []>} : vector<2x32xbf16>, vector<32x32xbf16>, vector<2x32xf32> -> vector<2x32xf32>
    %249 = arith.addf %247, %248 : vector<2x32xf32>
    %250 = vector.broadcast %160 : vector<1x32xf32> to vector<2x32xf32>
    %251 = arith.addf %249, %250 : vector<2x32xf32>
    %252 = math.tanh %251 : vector<2x32xf32>
    %cst_104 = arith.constant dense<0.000000e+00> : vector<2x32xf32>
    %253 = tpu.matmul %225, %144, %cst_104 {dimension_numbers = #tpu.dot_dimension_numbers<[1], [0], [0], [1], [0, 0, 1, 1], [], []>} : vector<2x64xbf16>, vector<64x32xbf16>, vector<2x32xf32> -> vector<2x32xf32>
    %cst_105 = arith.constant dense<0.000000e+00> : vector<2x32xf32>
    %254 = tpu.matmul %226, %156, %cst_105 {dimension_numbers = #tpu.dot_dimension_numbers<[1], [0], [0], [1], [0, 0, 1, 1], [], []>} : vector<2x32xbf16>, vector<32x32xbf16>, vector<2x32xf32> -> vector<2x32xf32>
    %255 = arith.addf %253, %254 : vector<2x32xf32>
    %256 = vector.broadcast %161 : vector<1x32xf32> to vector<2x32xf32>
    %257 = arith.addf %255, %256 : vector<2x32xf32>
    %258 = arith.negf %257 : vector<2x32xf32>
    %259 = math.exp %258 : vector<2x32xf32>
    %cst_106 = arith.constant 1.000000e+00 : f32
    %260 = vector.broadcast %cst_106 : f32 to vector<2x32xf32>
    %261 = arith.addf %260, %259 : vector<2x32xf32>
    %262 = arith.divf %260, %261 : vector<2x32xf32>
    %263 = arith.mulf %246, %205 : vector<2x32xf32>
    %264 = arith.mulf %236, %252 : vector<2x32xf32>
    %265 = arith.addf %263, %264 : vector<2x32xf32>
    %266 = math.tanh %265 : vector<2x32xf32>
    %267 = arith.mulf %262, %266 : vector<2x32xf32>
    %268 = arith.truncf %267 : vector<2x32xf32> to vector<2x32xbf16>
    %cst_107 = arith.constant dense<0.000000e+00> : vector<2x16xf32>
    %269 = tpu.matmul %268, %132, %cst_107 {dimension_numbers = #tpu.dot_dimension_numbers<[1], [1], [0], [0], [0, 0, 1, 0], [], []>} : vector<2x32xbf16>, vector<16x32xbf16>, vector<2x16xf32> -> vector<2x16xf32>
    %cst_108 = arith.constant -1.000000e+09 : f32
    %270 = vector.broadcast %cst_108 : f32 to vector<2x16xf32>
    %271 = arith.select %7, %269, %270 : vector<2x16xi1>, vector<2x16xf32>
    %cst_109 = arith.constant dense<0xFF800000> : vector<2xf32>
    %272 = vector.multi_reduction <maximumf>, %271, %cst_109 [1] : vector<2x16xf32> to vector<2xf32>
    %273 = vector.shape_cast %272 : vector<2xf32> to vector<2x1xf32>
    %274 = vector.broadcast %273 : vector<2x1xf32> to vector<2x16xf32>
    %275 = arith.subf %271, %274 : vector<2x16xf32>
    %276 = math.exp %275 : vector<2x16xf32>
    %cst_110 = arith.constant dense<0.000000e+00> : vector<2xf32>
    %277 = vector.multi_reduction <add>, %276, %cst_110 [1] : vector<2x16xf32> to vector<2xf32>
    %278 = vector.shape_cast %277 : vector<2xf32> to vector<2x1xf32>
    %279 = tpu.reciprocal %278 {approx = true} : vector<2x1xf32> -> vector<2x1xf32>
    %280 = vector.broadcast %279 : vector<2x1xf32> to vector<2x16xf32>
    %281 = arith.mulf %276, %280 : vector<2x16xf32>
    %282 = arith.truncf %281 : vector<2x16xf32> to vector<2x16xbf16>
    %cst_111 = arith.constant dense<0.000000e+00> : vector<2x32xf32>
    %283 = tpu.matmul %282, %132, %cst_111 {dimension_numbers = #tpu.dot_dimension_numbers<[1], [0], [0], [1], [0, 0, 1, 1], [], []>} : vector<2x16xbf16>, vector<16x32xbf16>, vector<2x32xf32> -> vector<2x32xf32>
    %284 = tpu.concatenate %267, %283 in 1 : vector<2x32xf32>, vector<2x32xf32> -> vector<2x64xf32>
    %285 = arith.truncf %284 : vector<2x64xf32> to vector<2x64xbf16>
    %286 = arith.truncf %267 : vector<2x32xf32> to vector<2x32xbf16>
    %cst_112 = arith.constant dense<0.000000e+00> : vector<2x32xf32>
    %287 = tpu.matmul %285, %135, %cst_112 {dimension_numbers = #tpu.dot_dimension_numbers<[1], [0], [0], [1], [0, 0, 1, 1], [], []>} : vector<2x64xbf16>, vector<64x32xbf16>, vector<2x32xf32> -> vector<2x32xf32>
    %cst_113 = arith.constant dense<0.000000e+00> : vector<2x32xf32>
    %288 = tpu.matmul %286, %147, %cst_113 {dimension_numbers = #tpu.dot_dimension_numbers<[1], [0], [0], [1], [0, 0, 1, 1], [], []>} : vector<2x32xbf16>, vector<32x32xbf16>, vector<2x32xf32> -> vector<2x32xf32>
    %289 = arith.addf %287, %288 : vector<2x32xf32>
    %290 = vector.broadcast %158 : vector<1x32xf32> to vector<2x32xf32>
    %291 = arith.addf %289, %290 : vector<2x32xf32>
    %292 = arith.negf %291 : vector<2x32xf32>
    %293 = math.exp %292 : vector<2x32xf32>
    %cst_114 = arith.constant 1.000000e+00 : f32
    %294 = vector.broadcast %cst_114 : f32 to vector<2x32xf32>
    %295 = arith.addf %294, %293 : vector<2x32xf32>
    %296 = arith.divf %294, %295 : vector<2x32xf32>
    %cst_115 = arith.constant dense<0.000000e+00> : vector<2x32xf32>
    %297 = tpu.matmul %285, %138, %cst_115 {dimension_numbers = #tpu.dot_dimension_numbers<[1], [0], [0], [1], [0, 0, 1, 1], [], []>} : vector<2x64xbf16>, vector<64x32xbf16>, vector<2x32xf32> -> vector<2x32xf32>
    %cst_116 = arith.constant dense<0.000000e+00> : vector<2x32xf32>
    %298 = tpu.matmul %286, %150, %cst_116 {dimension_numbers = #tpu.dot_dimension_numbers<[1], [0], [0], [1], [0, 0, 1, 1], [], []>} : vector<2x32xbf16>, vector<32x32xbf16>, vector<2x32xf32> -> vector<2x32xf32>
    %299 = arith.addf %297, %298 : vector<2x32xf32>
    %300 = vector.broadcast %159 : vector<1x32xf32> to vector<2x32xf32>
    %301 = arith.addf %299, %300 : vector<2x32xf32>
    %302 = arith.negf %301 : vector<2x32xf32>
    %303 = math.exp %302 : vector<2x32xf32>
    %cst_117 = arith.constant 1.000000e+00 : f32
    %304 = vector.broadcast %cst_117 : f32 to vector<2x32xf32>
    %305 = arith.addf %304, %303 : vector<2x32xf32>
    %306 = arith.divf %304, %305 : vector<2x32xf32>
    %cst_118 = arith.constant dense<0.000000e+00> : vector<2x32xf32>
    %307 = tpu.matmul %285, %141, %cst_118 {dimension_numbers = #tpu.dot_dimension_numbers<[1], [0], [0], [1], [0, 0, 1, 1], [], []>} : vector<2x64xbf16>, vector<64x32xbf16>, vector<2x32xf32> -> vector<2x32xf32>
    %cst_119 = arith.constant dense<0.000000e+00> : vector<2x32xf32>
    %308 = tpu.matmul %286, %153, %cst_119 {dimension_numbers = #tpu.dot_dimension_numbers<[1], [0], [0], [1], [0, 0, 1, 1], [], []>} : vector<2x32xbf16>, vector<32x32xbf16>, vector<2x32xf32> -> vector<2x32xf32>
    %309 = arith.addf %307, %308 : vector<2x32xf32>
    %310 = vector.broadcast %160 : vector<1x32xf32> to vector<2x32xf32>
    %311 = arith.addf %309, %310 : vector<2x32xf32>
    %312 = math.tanh %311 : vector<2x32xf32>
    %cst_120 = arith.constant dense<0.000000e+00> : vector<2x32xf32>
    %313 = tpu.matmul %285, %144, %cst_120 {dimension_numbers = #tpu.dot_dimension_numbers<[1], [0], [0], [1], [0, 0, 1, 1], [], []>} : vector<2x64xbf16>, vector<64x32xbf16>, vector<2x32xf32> -> vector<2x32xf32>
    %cst_121 = arith.constant dense<0.000000e+00> : vector<2x32xf32>
    %314 = tpu.matmul %286, %156, %cst_121 {dimension_numbers = #tpu.dot_dimension_numbers<[1], [0], [0], [1], [0, 0, 1, 1], [], []>} : vector<2x32xbf16>, vector<32x32xbf16>, vector<2x32xf32> -> vector<2x32xf32>
    %315 = arith.addf %313, %314 : vector<2x32xf32>
    %316 = vector.broadcast %161 : vector<1x32xf32> to vector<2x32xf32>
    %317 = arith.addf %315, %316 : vector<2x32xf32>
    %318 = arith.negf %317 : vector<2x32xf32>
    %319 = math.exp %318 : vector<2x32xf32>
    %cst_122 = arith.constant 1.000000e+00 : f32
    %320 = vector.broadcast %cst_122 : f32 to vector<2x32xf32>
    %321 = arith.addf %320, %319 : vector<2x32xf32>
    %322 = arith.divf %320, %321 : vector<2x32xf32>
    %323 = arith.mulf %306, %265 : vector<2x32xf32>
    %324 = arith.mulf %296, %312 : vector<2x32xf32>
    %325 = arith.addf %323, %324 : vector<2x32xf32>
    %326 = math.tanh %325 : vector<2x32xf32>
    %327 = arith.mulf %322, %326 : vector<2x32xf32>
    %328 = arith.truncf %327 : vector<2x32xf32> to vector<2x32xbf16>
    %cst_123 = arith.constant dense<0.000000e+00> : vector<2x16xf32>
    %329 = tpu.matmul %328, %132, %cst_123 {dimension_numbers = #tpu.dot_dimension_numbers<[1], [1], [0], [0], [0, 0, 1, 0], [], []>} : vector<2x32xbf16>, vector<16x32xbf16>, vector<2x16xf32> -> vector<2x16xf32>
    %cst_124 = arith.constant -1.000000e+09 : f32
    %330 = vector.broadcast %cst_124 : f32 to vector<2x16xf32>
    %331 = arith.select %7, %329, %330 : vector<2x16xi1>, vector<2x16xf32>
    %cst_125 = arith.constant dense<0xFF800000> : vector<2xf32>
    %332 = vector.multi_reduction <maximumf>, %331, %cst_125 [1] : vector<2x16xf32> to vector<2xf32>
    %333 = vector.shape_cast %332 : vector<2xf32> to vector<2x1xf32>
    %334 = vector.broadcast %333 : vector<2x1xf32> to vector<2x16xf32>
    %335 = arith.subf %331, %334 : vector<2x16xf32>
    %336 = math.exp %335 : vector<2x16xf32>
    %cst_126 = arith.constant dense<0.000000e+00> : vector<2xf32>
    %337 = vector.multi_reduction <add>, %336, %cst_126 [1] : vector<2x16xf32> to vector<2xf32>
    %338 = vector.shape_cast %337 : vector<2xf32> to vector<2x1xf32>
    %339 = tpu.reciprocal %338 {approx = true} : vector<2x1xf32> -> vector<2x1xf32>
    %340 = vector.broadcast %339 : vector<2x1xf32> to vector<2x16xf32>
    %341 = arith.mulf %336, %340 : vector<2x16xf32>
    %342 = arith.truncf %341 : vector<2x16xf32> to vector<2x16xbf16>
    %cst_127 = arith.constant dense<0.000000e+00> : vector<2x32xf32>
    %343 = tpu.matmul %342, %132, %cst_127 {dimension_numbers = #tpu.dot_dimension_numbers<[1], [0], [0], [1], [0, 0, 1, 1], [], []>} : vector<2x16xbf16>, vector<16x32xbf16>, vector<2x32xf32> -> vector<2x32xf32>
    %344 = tpu.concatenate %327, %343 in 1 : vector<2x32xf32>, vector<2x32xf32> -> vector<2x64xf32>
    %345 = arith.truncf %344 : vector<2x64xf32> to vector<2x64xbf16>
    %346 = arith.truncf %327 : vector<2x32xf32> to vector<2x32xbf16>
    %cst_128 = arith.constant dense<0.000000e+00> : vector<2x32xf32>
    %347 = tpu.matmul %345, %135, %cst_128 {dimension_numbers = #tpu.dot_dimension_numbers<[1], [0], [0], [1], [0, 0, 1, 1], [], []>} : vector<2x64xbf16>, vector<64x32xbf16>, vector<2x32xf32> -> vector<2x32xf32>
    %cst_129 = arith.constant dense<0.000000e+00> : vector<2x32xf32>
    %348 = tpu.matmul %346, %147, %cst_129 {dimension_numbers = #tpu.dot_dimension_numbers<[1], [0], [0], [1], [0, 0, 1, 1], [], []>} : vector<2x32xbf16>, vector<32x32xbf16>, vector<2x32xf32> -> vector<2x32xf32>
    %349 = arith.addf %347, %348 : vector<2x32xf32>
    %350 = vector.broadcast %158 : vector<1x32xf32> to vector<2x32xf32>
    %351 = arith.addf %349, %350 : vector<2x32xf32>
    %352 = arith.negf %351 : vector<2x32xf32>
    %353 = math.exp %352 : vector<2x32xf32>
    %cst_130 = arith.constant 1.000000e+00 : f32
    %354 = vector.broadcast %cst_130 : f32 to vector<2x32xf32>
    %355 = arith.addf %354, %353 : vector<2x32xf32>
    %356 = arith.divf %354, %355 : vector<2x32xf32>
    %cst_131 = arith.constant dense<0.000000e+00> : vector<2x32xf32>
    %357 = tpu.matmul %345, %138, %cst_131 {dimension_numbers = #tpu.dot_dimension_numbers<[1], [0], [0], [1], [0, 0, 1, 1], [], []>} : vector<2x64xbf16>, vector<64x32xbf16>, vector<2x32xf32> -> vector<2x32xf32>
    %cst_132 = arith.constant dense<0.000000e+00> : vector<2x32xf32>
    %358 = tpu.matmul %346, %150, %cst_132 {dimension_numbers = #tpu.dot_dimension_numbers<[1], [0], [0], [1], [0, 0, 1, 1], [], []>} : vector<2x32xbf16>, vector<32x32xbf16>, vector<2x32xf32> -> vector<2x32xf32>
    %359 = arith.addf %357, %358 : vector<2x32xf32>
    %360 = vector.broadcast %159 : vector<1x32xf32> to vector<2x32xf32>
    %361 = arith.addf %359, %360 : vector<2x32xf32>
    %362 = arith.negf %361 : vector<2x32xf32>
    %363 = math.exp %362 : vector<2x32xf32>
    %cst_133 = arith.constant 1.000000e+00 : f32
    %364 = vector.broadcast %cst_133 : f32 to vector<2x32xf32>
    %365 = arith.addf %364, %363 : vector<2x32xf32>
    %366 = arith.divf %364, %365 : vector<2x32xf32>
    %cst_134 = arith.constant dense<0.000000e+00> : vector<2x32xf32>
    %367 = tpu.matmul %345, %141, %cst_134 {dimension_numbers = #tpu.dot_dimension_numbers<[1], [0], [0], [1], [0, 0, 1, 1], [], []>} : vector<2x64xbf16>, vector<64x32xbf16>, vector<2x32xf32> -> vector<2x32xf32>
    %cst_135 = arith.constant dense<0.000000e+00> : vector<2x32xf32>
    %368 = tpu.matmul %346, %153, %cst_135 {dimension_numbers = #tpu.dot_dimension_numbers<[1], [0], [0], [1], [0, 0, 1, 1], [], []>} : vector<2x32xbf16>, vector<32x32xbf16>, vector<2x32xf32> -> vector<2x32xf32>
    %369 = arith.addf %367, %368 : vector<2x32xf32>
    %370 = vector.broadcast %160 : vector<1x32xf32> to vector<2x32xf32>
    %371 = arith.addf %369, %370 : vector<2x32xf32>
    %372 = math.tanh %371 : vector<2x32xf32>
    %cst_136 = arith.constant dense<0.000000e+00> : vector<2x32xf32>
    %373 = tpu.matmul %345, %144, %cst_136 {dimension_numbers = #tpu.dot_dimension_numbers<[1], [0], [0], [1], [0, 0, 1, 1], [], []>} : vector<2x64xbf16>, vector<64x32xbf16>, vector<2x32xf32> -> vector<2x32xf32>
    %cst_137 = arith.constant dense<0.000000e+00> : vector<2x32xf32>
    %374 = tpu.matmul %346, %156, %cst_137 {dimension_numbers = #tpu.dot_dimension_numbers<[1], [0], [0], [1], [0, 0, 1, 1], [], []>} : vector<2x32xbf16>, vector<32x32xbf16>, vector<2x32xf32> -> vector<2x32xf32>
    %375 = arith.addf %373, %374 : vector<2x32xf32>
    %376 = vector.broadcast %161 : vector<1x32xf32> to vector<2x32xf32>
    %377 = arith.addf %375, %376 : vector<2x32xf32>
    %378 = arith.negf %377 : vector<2x32xf32>
    %379 = math.exp %378 : vector<2x32xf32>
    %cst_138 = arith.constant 1.000000e+00 : f32
    %380 = vector.broadcast %cst_138 : f32 to vector<2x32xf32>
    %381 = arith.addf %380, %379 : vector<2x32xf32>
    %382 = arith.divf %380, %381 : vector<2x32xf32>
    %383 = arith.mulf %366, %325 : vector<2x32xf32>
    %384 = arith.mulf %356, %372 : vector<2x32xf32>
    %385 = arith.addf %383, %384 : vector<2x32xf32>
    %386 = math.tanh %385 : vector<2x32xf32>
    %387 = arith.mulf %382, %386 : vector<2x32xf32>
    %388 = arith.truncf %387 : vector<2x32xf32> to vector<2x32xbf16>
    %cst_139 = arith.constant dense<0.000000e+00> : vector<2x16xf32>
    %389 = tpu.matmul %388, %132, %cst_139 {dimension_numbers = #tpu.dot_dimension_numbers<[1], [1], [0], [0], [0, 0, 1, 0], [], []>} : vector<2x32xbf16>, vector<16x32xbf16>, vector<2x16xf32> -> vector<2x16xf32>
    %cst_140 = arith.constant -1.000000e+09 : f32
    %390 = vector.broadcast %cst_140 : f32 to vector<2x16xf32>
    %391 = arith.select %7, %389, %390 : vector<2x16xi1>, vector<2x16xf32>
    %cst_141 = arith.constant dense<0xFF800000> : vector<2xf32>
    %392 = vector.multi_reduction <maximumf>, %391, %cst_141 [1] : vector<2x16xf32> to vector<2xf32>
    %393 = vector.shape_cast %392 : vector<2xf32> to vector<2x1xf32>
    %394 = vector.broadcast %393 : vector<2x1xf32> to vector<2x16xf32>
    %395 = arith.subf %391, %394 : vector<2x16xf32>
    %396 = math.exp %395 : vector<2x16xf32>
    %cst_142 = arith.constant dense<0.000000e+00> : vector<2xf32>
    %397 = vector.multi_reduction <add>, %396, %cst_142 [1] : vector<2x16xf32> to vector<2xf32>
    %398 = vector.shape_cast %397 : vector<2xf32> to vector<2x1xf32>
    %399 = tpu.reciprocal %398 {approx = true} : vector<2x1xf32> -> vector<2x1xf32>
    %400 = vector.broadcast %399 : vector<2x1xf32> to vector<2x16xf32>
    %401 = arith.mulf %396, %400 : vector<2x16xf32>
    %402 = arith.truncf %401 : vector<2x16xf32> to vector<2x16xbf16>
    %cst_143 = arith.constant dense<0.000000e+00> : vector<2x32xf32>
    %403 = tpu.matmul %402, %132, %cst_143 {dimension_numbers = #tpu.dot_dimension_numbers<[1], [0], [0], [1], [0, 0, 1, 1], [], []>} : vector<2x16xbf16>, vector<16x32xbf16>, vector<2x32xf32> -> vector<2x32xf32>
    %404 = tpu.concatenate %387, %403 in 1 : vector<2x32xf32>, vector<2x32xf32> -> vector<2x64xf32>
    %405 = arith.truncf %404 : vector<2x64xf32> to vector<2x64xbf16>
    %406 = arith.truncf %387 : vector<2x32xf32> to vector<2x32xbf16>
    %cst_144 = arith.constant dense<0.000000e+00> : vector<2x32xf32>
    %407 = tpu.matmul %405, %135, %cst_144 {dimension_numbers = #tpu.dot_dimension_numbers<[1], [0], [0], [1], [0, 0, 1, 1], [], []>} : vector<2x64xbf16>, vector<64x32xbf16>, vector<2x32xf32> -> vector<2x32xf32>
    %cst_145 = arith.constant dense<0.000000e+00> : vector<2x32xf32>
    %408 = tpu.matmul %406, %147, %cst_145 {dimension_numbers = #tpu.dot_dimension_numbers<[1], [0], [0], [1], [0, 0, 1, 1], [], []>} : vector<2x32xbf16>, vector<32x32xbf16>, vector<2x32xf32> -> vector<2x32xf32>
    %409 = arith.addf %407, %408 : vector<2x32xf32>
    %410 = vector.broadcast %158 : vector<1x32xf32> to vector<2x32xf32>
    %411 = arith.addf %409, %410 : vector<2x32xf32>
    %412 = arith.negf %411 : vector<2x32xf32>
    %413 = math.exp %412 : vector<2x32xf32>
    %cst_146 = arith.constant 1.000000e+00 : f32
    %414 = vector.broadcast %cst_146 : f32 to vector<2x32xf32>
    %415 = arith.addf %414, %413 : vector<2x32xf32>
    %416 = arith.divf %414, %415 : vector<2x32xf32>
    %cst_147 = arith.constant dense<0.000000e+00> : vector<2x32xf32>
    %417 = tpu.matmul %405, %138, %cst_147 {dimension_numbers = #tpu.dot_dimension_numbers<[1], [0], [0], [1], [0, 0, 1, 1], [], []>} : vector<2x64xbf16>, vector<64x32xbf16>, vector<2x32xf32> -> vector<2x32xf32>
    %cst_148 = arith.constant dense<0.000000e+00> : vector<2x32xf32>
    %418 = tpu.matmul %406, %150, %cst_148 {dimension_numbers = #tpu.dot_dimension_numbers<[1], [0], [0], [1], [0, 0, 1, 1], [], []>} : vector<2x32xbf16>, vector<32x32xbf16>, vector<2x32xf32> -> vector<2x32xf32>
    %419 = arith.addf %417, %418 : vector<2x32xf32>
    %420 = vector.broadcast %159 : vector<1x32xf32> to vector<2x32xf32>
    %421 = arith.addf %419, %420 : vector<2x32xf32>
    %422 = arith.negf %421 : vector<2x32xf32>
    %423 = math.exp %422 : vector<2x32xf32>
    %cst_149 = arith.constant 1.000000e+00 : f32
    %424 = vector.broadcast %cst_149 : f32 to vector<2x32xf32>
    %425 = arith.addf %424, %423 : vector<2x32xf32>
    %426 = arith.divf %424, %425 : vector<2x32xf32>
    %cst_150 = arith.constant dense<0.000000e+00> : vector<2x32xf32>
    %427 = tpu.matmul %405, %141, %cst_150 {dimension_numbers = #tpu.dot_dimension_numbers<[1], [0], [0], [1], [0, 0, 1, 1], [], []>} : vector<2x64xbf16>, vector<64x32xbf16>, vector<2x32xf32> -> vector<2x32xf32>
    %cst_151 = arith.constant dense<0.000000e+00> : vector<2x32xf32>
    %428 = tpu.matmul %406, %153, %cst_151 {dimension_numbers = #tpu.dot_dimension_numbers<[1], [0], [0], [1], [0, 0, 1, 1], [], []>} : vector<2x32xbf16>, vector<32x32xbf16>, vector<2x32xf32> -> vector<2x32xf32>
    %429 = arith.addf %427, %428 : vector<2x32xf32>
    %430 = vector.broadcast %160 : vector<1x32xf32> to vector<2x32xf32>
    %431 = arith.addf %429, %430 : vector<2x32xf32>
    %432 = math.tanh %431 : vector<2x32xf32>
    %cst_152 = arith.constant dense<0.000000e+00> : vector<2x32xf32>
    %433 = tpu.matmul %405, %144, %cst_152 {dimension_numbers = #tpu.dot_dimension_numbers<[1], [0], [0], [1], [0, 0, 1, 1], [], []>} : vector<2x64xbf16>, vector<64x32xbf16>, vector<2x32xf32> -> vector<2x32xf32>
    %cst_153 = arith.constant dense<0.000000e+00> : vector<2x32xf32>
    %434 = tpu.matmul %406, %156, %cst_153 {dimension_numbers = #tpu.dot_dimension_numbers<[1], [0], [0], [1], [0, 0, 1, 1], [], []>} : vector<2x32xbf16>, vector<32x32xbf16>, vector<2x32xf32> -> vector<2x32xf32>
    %435 = arith.addf %433, %434 : vector<2x32xf32>
    %436 = vector.broadcast %161 : vector<1x32xf32> to vector<2x32xf32>
    %437 = arith.addf %435, %436 : vector<2x32xf32>
    %438 = arith.negf %437 : vector<2x32xf32>
    %439 = math.exp %438 : vector<2x32xf32>
    %cst_154 = arith.constant 1.000000e+00 : f32
    %440 = vector.broadcast %cst_154 : f32 to vector<2x32xf32>
    %441 = arith.addf %440, %439 : vector<2x32xf32>
    %442 = arith.divf %440, %441 : vector<2x32xf32>
    %443 = arith.mulf %426, %385 : vector<2x32xf32>
    %444 = arith.mulf %416, %432 : vector<2x32xf32>
    %445 = arith.addf %443, %444 : vector<2x32xf32>
    %446 = math.tanh %445 : vector<2x32xf32>
    %447 = arith.mulf %442, %446 : vector<2x32xf32>
    %448 = arith.truncf %447 : vector<2x32xf32> to vector<2x32xbf16>
    %cst_155 = arith.constant dense<0.000000e+00> : vector<2x16xf32>
    %449 = tpu.matmul %448, %132, %cst_155 {dimension_numbers = #tpu.dot_dimension_numbers<[1], [1], [0], [0], [0, 0, 1, 0], [], []>} : vector<2x32xbf16>, vector<16x32xbf16>, vector<2x16xf32> -> vector<2x16xf32>
    %cst_156 = arith.constant -1.000000e+09 : f32
    %450 = vector.broadcast %cst_156 : f32 to vector<2x16xf32>
    %451 = arith.select %7, %449, %450 : vector<2x16xi1>, vector<2x16xf32>
    %cst_157 = arith.constant dense<0xFF800000> : vector<2xf32>
    %452 = vector.multi_reduction <maximumf>, %451, %cst_157 [1] : vector<2x16xf32> to vector<2xf32>
    %453 = vector.shape_cast %452 : vector<2xf32> to vector<2x1xf32>
    %454 = vector.broadcast %453 : vector<2x1xf32> to vector<2x16xf32>
    %455 = arith.subf %451, %454 : vector<2x16xf32>
    %456 = math.exp %455 : vector<2x16xf32>
    %cst_158 = arith.constant dense<0.000000e+00> : vector<2xf32>
    %457 = vector.multi_reduction <add>, %456, %cst_158 [1] : vector<2x16xf32> to vector<2xf32>
    %458 = vector.shape_cast %457 : vector<2xf32> to vector<2x1xf32>
    %459 = tpu.reciprocal %458 {approx = true} : vector<2x1xf32> -> vector<2x1xf32>
    %460 = vector.broadcast %459 : vector<2x1xf32> to vector<2x16xf32>
    %461 = arith.mulf %456, %460 : vector<2x16xf32>
    %462 = arith.truncf %461 : vector<2x16xf32> to vector<2x16xbf16>
    %cst_159 = arith.constant dense<0.000000e+00> : vector<2x32xf32>
    %463 = tpu.matmul %462, %132, %cst_159 {dimension_numbers = #tpu.dot_dimension_numbers<[1], [0], [0], [1], [0, 0, 1, 1], [], []>} : vector<2x16xbf16>, vector<16x32xbf16>, vector<2x32xf32> -> vector<2x32xf32>
    %464 = tpu.concatenate %447, %463 in 1 : vector<2x32xf32>, vector<2x32xf32> -> vector<2x64xf32>
    %465 = arith.truncf %464 : vector<2x64xf32> to vector<2x64xbf16>
    %466 = arith.truncf %447 : vector<2x32xf32> to vector<2x32xbf16>
    %cst_160 = arith.constant dense<0.000000e+00> : vector<2x32xf32>
    %467 = tpu.matmul %465, %135, %cst_160 {dimension_numbers = #tpu.dot_dimension_numbers<[1], [0], [0], [1], [0, 0, 1, 1], [], []>} : vector<2x64xbf16>, vector<64x32xbf16>, vector<2x32xf32> -> vector<2x32xf32>
    %cst_161 = arith.constant dense<0.000000e+00> : vector<2x32xf32>
    %468 = tpu.matmul %466, %147, %cst_161 {dimension_numbers = #tpu.dot_dimension_numbers<[1], [0], [0], [1], [0, 0, 1, 1], [], []>} : vector<2x32xbf16>, vector<32x32xbf16>, vector<2x32xf32> -> vector<2x32xf32>
    %469 = arith.addf %467, %468 : vector<2x32xf32>
    %470 = vector.broadcast %158 : vector<1x32xf32> to vector<2x32xf32>
    %471 = arith.addf %469, %470 : vector<2x32xf32>
    %472 = arith.negf %471 : vector<2x32xf32>
    %473 = math.exp %472 : vector<2x32xf32>
    %cst_162 = arith.constant 1.000000e+00 : f32
    %474 = vector.broadcast %cst_162 : f32 to vector<2x32xf32>
    %475 = arith.addf %474, %473 : vector<2x32xf32>
    %476 = arith.divf %474, %475 : vector<2x32xf32>
    %cst_163 = arith.constant dense<0.000000e+00> : vector<2x32xf32>
    %477 = tpu.matmul %465, %138, %cst_163 {dimension_numbers = #tpu.dot_dimension_numbers<[1], [0], [0], [1], [0, 0, 1, 1], [], []>} : vector<2x64xbf16>, vector<64x32xbf16>, vector<2x32xf32> -> vector<2x32xf32>
    %cst_164 = arith.constant dense<0.000000e+00> : vector<2x32xf32>
    %478 = tpu.matmul %466, %150, %cst_164 {dimension_numbers = #tpu.dot_dimension_numbers<[1], [0], [0], [1], [0, 0, 1, 1], [], []>} : vector<2x32xbf16>, vector<32x32xbf16>, vector<2x32xf32> -> vector<2x32xf32>
    %479 = arith.addf %477, %478 : vector<2x32xf32>
    %480 = vector.broadcast %159 : vector<1x32xf32> to vector<2x32xf32>
    %481 = arith.addf %479, %480 : vector<2x32xf32>
    %482 = arith.negf %481 : vector<2x32xf32>
    %483 = math.exp %482 : vector<2x32xf32>
    %cst_165 = arith.constant 1.000000e+00 : f32
    %484 = vector.broadcast %cst_165 : f32 to vector<2x32xf32>
    %485 = arith.addf %484, %483 : vector<2x32xf32>
    %486 = arith.divf %484, %485 : vector<2x32xf32>
    %cst_166 = arith.constant dense<0.000000e+00> : vector<2x32xf32>
    %487 = tpu.matmul %465, %141, %cst_166 {dimension_numbers = #tpu.dot_dimension_numbers<[1], [0], [0], [1], [0, 0, 1, 1], [], []>} : vector<2x64xbf16>, vector<64x32xbf16>, vector<2x32xf32> -> vector<2x32xf32>
    %cst_167 = arith.constant dense<0.000000e+00> : vector<2x32xf32>
    %488 = tpu.matmul %466, %153, %cst_167 {dimension_numbers = #tpu.dot_dimension_numbers<[1], [0], [0], [1], [0, 0, 1, 1], [], []>} : vector<2x32xbf16>, vector<32x32xbf16>, vector<2x32xf32> -> vector<2x32xf32>
    %489 = arith.addf %487, %488 : vector<2x32xf32>
    %490 = vector.broadcast %160 : vector<1x32xf32> to vector<2x32xf32>
    %491 = arith.addf %489, %490 : vector<2x32xf32>
    %492 = math.tanh %491 : vector<2x32xf32>
    %cst_168 = arith.constant dense<0.000000e+00> : vector<2x32xf32>
    %493 = tpu.matmul %465, %144, %cst_168 {dimension_numbers = #tpu.dot_dimension_numbers<[1], [0], [0], [1], [0, 0, 1, 1], [], []>} : vector<2x64xbf16>, vector<64x32xbf16>, vector<2x32xf32> -> vector<2x32xf32>
    %cst_169 = arith.constant dense<0.000000e+00> : vector<2x32xf32>
    %494 = tpu.matmul %466, %156, %cst_169 {dimension_numbers = #tpu.dot_dimension_numbers<[1], [0], [0], [1], [0, 0, 1, 1], [], []>} : vector<2x32xbf16>, vector<32x32xbf16>, vector<2x32xf32> -> vector<2x32xf32>
    %495 = arith.addf %493, %494 : vector<2x32xf32>
    %496 = vector.broadcast %161 : vector<1x32xf32> to vector<2x32xf32>
    %497 = arith.addf %495, %496 : vector<2x32xf32>
    %498 = arith.negf %497 : vector<2x32xf32>
    %499 = math.exp %498 : vector<2x32xf32>
    %cst_170 = arith.constant 1.000000e+00 : f32
    %500 = vector.broadcast %cst_170 : f32 to vector<2x32xf32>
    %501 = arith.addf %500, %499 : vector<2x32xf32>
    %502 = arith.divf %500, %501 : vector<2x32xf32>
    %503 = arith.mulf %486, %445 : vector<2x32xf32>
    %504 = arith.mulf %476, %492 : vector<2x32xf32>
    %505 = arith.addf %503, %504 : vector<2x32xf32>
    %506 = math.tanh %505 : vector<2x32xf32>
    %507 = arith.mulf %502, %506 : vector<2x32xf32>
    %508 = arith.truncf %507 : vector<2x32xf32> to vector<2x32xbf16>
    %cst_171 = arith.constant dense<0.000000e+00> : vector<2x16xf32>
    %509 = tpu.matmul %508, %132, %cst_171 {dimension_numbers = #tpu.dot_dimension_numbers<[1], [1], [0], [0], [0, 0, 1, 0], [], []>} : vector<2x32xbf16>, vector<16x32xbf16>, vector<2x16xf32> -> vector<2x16xf32>
    %cst_172 = arith.constant -1.000000e+09 : f32
    %510 = vector.broadcast %cst_172 : f32 to vector<2x16xf32>
    %511 = arith.select %7, %509, %510 : vector<2x16xi1>, vector<2x16xf32>
    %cst_173 = arith.constant dense<0xFF800000> : vector<2xf32>
    %512 = vector.multi_reduction <maximumf>, %511, %cst_173 [1] : vector<2x16xf32> to vector<2xf32>
    %513 = vector.shape_cast %512 : vector<2xf32> to vector<2x1xf32>
    %514 = vector.broadcast %513 : vector<2x1xf32> to vector<2x16xf32>
    %515 = arith.subf %511, %514 : vector<2x16xf32>
    %516 = math.exp %515 : vector<2x16xf32>
    %cst_174 = arith.constant dense<0.000000e+00> : vector<2xf32>
    %517 = vector.multi_reduction <add>, %516, %cst_174 [1] : vector<2x16xf32> to vector<2xf32>
    %518 = vector.shape_cast %517 : vector<2xf32> to vector<2x1xf32>
    %519 = tpu.reciprocal %518 {approx = true} : vector<2x1xf32> -> vector<2x1xf32>
    %520 = vector.broadcast %519 : vector<2x1xf32> to vector<2x16xf32>
    %521 = arith.mulf %516, %520 : vector<2x16xf32>
    %522 = arith.truncf %521 : vector<2x16xf32> to vector<2x16xbf16>
    %cst_175 = arith.constant dense<0.000000e+00> : vector<2x32xf32>
    %523 = tpu.matmul %522, %132, %cst_175 {dimension_numbers = #tpu.dot_dimension_numbers<[1], [0], [0], [1], [0, 0, 1, 1], [], []>} : vector<2x16xbf16>, vector<16x32xbf16>, vector<2x32xf32> -> vector<2x32xf32>
    %524 = tpu.concatenate %507, %523 in 1 : vector<2x32xf32>, vector<2x32xf32> -> vector<2x64xf32>
    %525 = arith.truncf %524 : vector<2x64xf32> to vector<2x64xbf16>
    %c0_176 = arith.constant 0 : index
    %c0_177 = arith.constant 0 : index
    %526 = vector.load %arg15[%c0_176, %c0_177] : memref<64x32xf32, #tpu.memory_space<vmem>>, vector<64x32xf32>
    %527 = arith.truncf %526 : vector<64x32xf32> to vector<64x32xbf16>
    %cst_178 = arith.constant dense<0.000000e+00> : vector<2x32xf32>
    %528 = tpu.matmul %525, %527, %cst_178 {dimension_numbers = #tpu.dot_dimension_numbers<[1], [0], [0], [1], [0, 0, 1, 1], [], []>} : vector<2x64xbf16>, vector<64x32xbf16>, vector<2x32xf32> -> vector<2x32xf32>
    %c0_179 = arith.constant 0 : index
    %c0_180 = arith.constant 0 : index
    %529 = vector.load %arg16[%c0_179, %c0_180] : memref<1x32xf32, #tpu.memory_space<vmem>>, vector<1x32xf32>
    %530 = vector.broadcast %529 : vector<1x32xf32> to vector<2x32xf32>
    %531 = arith.addf %528, %530 : vector<2x32xf32>
    %cst_181 = arith.constant 0.000000e+00 : f32
    %532 = vector.broadcast %cst_181 : f32 to vector<2x32xf32>
    %533 = arith.maximumf %531, %532 : vector<2x32xf32>
    %534 = arith.truncf %533 : vector<2x32xf32> to vector<2x32xbf16>
    %c0_182 = arith.constant 0 : index
    %c0_183 = arith.constant 0 : index
    %535 = vector.load %arg17[%c0_182, %c0_183] : memref<32x32xf32, #tpu.memory_space<vmem>>, vector<32x32xf32>
    %536 = arith.truncf %535 : vector<32x32xf32> to vector<32x32xbf16>
    %cst_184 = arith.constant dense<0.000000e+00> : vector<2x32xf32>
    %537 = tpu.matmul %534, %536, %cst_184 {dimension_numbers = #tpu.dot_dimension_numbers<[1], [0], [0], [1], [0, 0, 1, 1], [], []>} : vector<2x32xbf16>, vector<32x32xbf16>, vector<2x32xf32> -> vector<2x32xf32>
    %c0_185 = arith.constant 0 : index
    %c0_186 = arith.constant 0 : index
    %538 = vector.load %arg18[%c0_185, %c0_186] : memref<1x32xf32, #tpu.memory_space<vmem>>, vector<1x32xf32>
    %539 = vector.broadcast %538 : vector<1x32xf32> to vector<2x32xf32>
    %540 = arith.addf %537, %539 : vector<2x32xf32>
    %cst_187 = arith.constant 0.000000e+00 : f32
    %541 = vector.broadcast %cst_187 : f32 to vector<2x32xf32>
    %542 = arith.maximumf %540, %541 : vector<2x32xf32>
    %c0_188 = arith.constant 0 : index
    %c0_189 = arith.constant 0 : index
    %543 = vector.load %arg19[%c0_188, %c0_189] : memref<1x32xf32, #tpu.memory_space<vmem>>, vector<1x32xf32>
    %544 = vector.broadcast %543 : vector<1x32xf32> to vector<2x32xf32>
    %545 = arith.mulf %542, %544 : vector<2x32xf32>
    %cst_190 = arith.constant dense<0.000000e+00> : vector<2xf32>
    %546 = vector.multi_reduction <add>, %545, %cst_190 [1] : vector<2x32xf32> to vector<2xf32>
    %547 = vector.shape_cast %546 : vector<2xf32> to vector<2x1xf32>
    %c0_191 = arith.constant 0 : index
    %c0_192 = arith.constant 0 : index
    %548 = vector.load %arg20[%c0_191, %c0_192] : memref<1x1xf32, #tpu.memory_space<vmem>>, vector<1x1xf32>
    %549 = vector.broadcast %548 : vector<1x1xf32> to vector<2x1xf32>
    %550 = arith.addf %547, %549 : vector<2x1xf32>
    %c0_193 = arith.constant 0 : index
    %c0_194 = arith.constant 0 : index
    %551 = vector.load %arg21[%c0_193, %c0_194] : memref<2x1xf32, #tpu.memory_space<vmem>>, vector<2x1xf32>
    tpu.vector_store %arg21[%c0_193, %c0_194], %550 {strides = array<i32>} : memref<2x1xf32, #tpu.memory_space<vmem>>, vector<2x1xf32>,
    return
  }
}

</mosaic_0001>

<llo_original>
// kernel: tpu_custom_call.1
$region0: #{tpu_custom_call.1}
  #allocation0 [shape = 'u32[]', space=smem, size = 0x4, offset = 0x4, fixed_abs, tag = 'smem constant byte address 0x4 - core index']
  #allocation1 [shape = 'u32[144,128]{1,0:T(1,128)}', space=vmem, size = 0x12000, scoped, tag = 'internal scratch']
  #allocation2 [shape = 'f32[1,1]{1,0:T(1,128)S(1)}', space=vmem, size = 0x200, scoped, tag = 'scoped memory for tpu_custom_call.1']
  %s0 = inlined_call_operand.vmem [shape: f32[16,16], index: 0, kind: input, shape index: {}]
  %s1 = inlined_call_operand.vmem [shape: s8[16,16], index: 1, kind: input, shape index: {}]
  %s2 = inlined_call_operand.vmem [shape: s8[2,16], index: 2, kind: input, shape index: {}]
  %s3 = inlined_call_operand.vmem [shape: f32[16,32], index: 3, kind: input, shape index: {}]
  %s4 = inlined_call_operand.vmem [shape: f32[2,32], index: 4, kind: input, shape index: {}]
  %s5 = inlined_call_operand.vmem [shape: f32[1,32], index: 5, kind: input, shape index: {}]
  %s6 = inlined_call_operand.vmem [shape: f32[32,32], index: 6, kind: input, shape index: {}]
  %s7 = inlined_call_operand.vmem [shape: f32[2,32], index: 7, kind: input, shape index: {}]
  %s8 = inlined_call_operand.vmem [shape: f32[1,32], index: 8, kind: input, shape index: {}]
  %s9 = inlined_call_operand.vmem [shape: f32[32,32], index: 9, kind: input, shape index: {}]
  %s10 = inlined_call_operand.vmem [shape: f32[2,32], index: 10, kind: input, shape index: {}]
  %s11 = inlined_call_operand.vmem [shape: f32[1,32], index: 11, kind: input, shape index: {}]
  %s12 = inlined_call_operand.vmem [shape: f32[4,64,32], index: 12, kind: input, shape index: {}]
  %s13 = inlined_call_operand.vmem [shape: f32[4,32,32], index: 13, kind: input, shape index: {}]
  %s14 = inlined_call_operand.vmem [shape: f32[4,32], index: 14, kind: input, shape index: {}]
  %s15 = inlined_call_operand.vmem [shape: f32[64,32], index: 15, kind: input, shape index: {}]
  %s16 = inlined_call_operand.vmem [shape: f32[1,32], index: 16, kind: input, shape index: {}]
  %s17 = inlined_call_operand.vmem [shape: f32[32,32], index: 17, kind: input, shape index: {}]
  %s18 = inlined_call_operand.vmem [shape: f32[1,32], index: 18, kind: input, shape index: {}]
  %s19 = inlined_call_operand.vmem [shape: f32[1,32], index: 19, kind: input, shape index: {}]
  %s20 = inlined_call_operand.<no memory space> [shape: f32[1,1], index: 20, kind: input, shape index: {}]
  %s21 = inlined_call_operand.vmem [shape: f32[2,1], index: 21, kind: output, shape index: {}]
  %s22 = sld [smem:[#allocation0]]
  $region94: #{tpu_custom_call.1} parent=0
    _
  %s24 = ssub.s32 1, %s22
  %s25 = scalar_select 0, %s24, %s22
  %v26 = vstv %s20
  %27 = vst [vmem:[#allocation2] sm:$0x1] %v26
  // Predicated region
  $region2: #{tpu_custom_call.1} parent=0 // pred_check
    _
  $region3: #{tpu_custom_call.1} parent=0 // pred_check_branch
    %29 = sbr.rel (0) target = $region5
  $region4: #{tpu_custom_call.1} parent=0 // pred_region
    _
  $region5: #{tpu_custom_call.1} parent=0 // pred_fallthru
    _
  // Predicated region
  $region6: #{tpu_custom_call.1} parent=0 // pred_check
    _
  $region7: #{tpu_custom_call.1} parent=0 // pred_check_branch
    %31 = sbr.rel (0) target = $region9
  $region8: #{tpu_custom_call.1} parent=0 // pred_region
    _
  $region9: #{tpu_custom_call.1} parent=0 // pred_fallthru
    _
  // Predicated region
  $region10: #{tpu_custom_call.1} parent=0 // pred_check
    _
  $region11: #{tpu_custom_call.1} parent=0 // pred_check_branch
    %33 = sbr.rel (0) target = $region13
  $region12: #{tpu_custom_call.1} parent=0 // pred_region
    _
  $region13: #{tpu_custom_call.1} parent=0 // pred_fallthru
    _
  // Predicated region
  $region14: #{tpu_custom_call.1} parent=0 // pred_check
    _
  $region15: #{tpu_custom_call.1} parent=0 // pred_check_branch
    %35 = sbr.rel (0) target = $region17
  $region16: #{tpu_custom_call.1} parent=0 // pred_region
    _
  $region17: #{tpu_custom_call.1} parent=0 // pred_fallthru
    _
  // Predicated region
  $region18: #{tpu_custom_call.1} parent=0 // pred_check
    _
  $region19: #{tpu_custom_call.1} parent=0 // pred_check_branch
    %37 = sbr.rel (0) target = $region21
  $region20: #{tpu_custom_call.1} parent=0 // pred_region
    _
  $region21: #{tpu_custom_call.1} parent=0 // pred_fallthru
    _
  // Predicated region
  $region22: #{tpu_custom_call.1} parent=0 // pred_check
    _
  $region23: #{tpu_custom_call.1} parent=0 // pred_check_branch
    %39 = sbr.rel (0) target = $region25
  $region24: #{tpu_custom_call.1} parent=0 // pred_region
    _
  $region25: #{tpu_custom_call.1} parent=0 // pred_fallthru
    _
  // Predicated region
  $region26: #{tpu_custom_call.1} parent=0 // pred_check
    _
  $region27: #{tpu_custom_call.1} parent=0 // pred_check_branch
    %41 = sbr.rel (0) target = $region29
  $region28: #{tpu_custom_call.1} parent=0 // pred_region
    _
  $region29: #{tpu_custom_call.1} parent=0 // pred_fallthru
    _
  // Predicated region
  $region30: #{tpu_custom_call.1} parent=0 // pred_check
    _
  $region31: #{tpu_custom_call.1} parent=0 // pred_check_branch
    %43 = sbr.rel (0) target = $region33
  $region32: #{tpu_custom_call.1} parent=0 // pred_region
    _
  $region33: #{tpu_custom_call.1} parent=0 // pred_fallthru
    _
  // Predicated region
  $region34: #{tpu_custom_call.1} parent=0 // pred_check
    _
  $region35: #{tpu_custom_call.1} parent=0 // pred_check_branch
    %45 = sbr.rel (0) target = $region37
  $region36: #{tpu_custom_call.1} parent=0 // pred_region
    _
  $region37: #{tpu_custom_call.1} parent=0 // pred_fallthru
    _
  // Predicated region
  $region38: #{tpu_custom_call.1} parent=0 // pred_check
    _
  $region39: #{tpu_custom_call.1} parent=0 // pred_check_branch
    %47 = sbr.rel (0) target = $region41
  $region40: #{tpu_custom_call.1} parent=0 // pred_region
    _
  $region41: #{tpu_custom_call.1} parent=0 // pred_fallthru
    _
  // Predicated region
  $region42: #{tpu_custom_call.1} parent=0 // pred_check
    _
  $region43: #{tpu_custom_call.1} parent=0 // pred_check_branch
    %49 = sbr.rel (0) target = $region45
  $region44: #{tpu_custom_call.1} parent=0 // pred_region
    _
  $region45: #{tpu_custom_call.1} parent=0 // pred_fallthru
    _
  // Predicated region
  $region46: #{tpu_custom_call.1} parent=0 // pred_check
    _
  $region47: #{tpu_custom_call.1} parent=0 // pred_check_branch
    %51 = sbr.rel (0) target = $region49
  $region48: #{tpu_custom_call.1} parent=0 // pred_region
    _
  $region49: #{tpu_custom_call.1} parent=0 // pred_fallthru
    _
  // Predicated region
  $region50: #{tpu_custom_call.1} parent=0 // pred_check
    _
  $region51: #{tpu_custom_call.1} parent=0 // pred_check_branch
    %53 = sbr.rel (0) target = $region53
  $region52: #{tpu_custom_call.1} parent=0 // pred_region
    _
  $region53: #{tpu_custom_call.1} parent=0 // pred_fallthru
    _
  // Predicated region
  $region54: #{tpu_custom_call.1} parent=0 // pred_check
    _
  $region55: #{tpu_custom_call.1} parent=0 // pred_check_branch
    %55 = sbr.rel (0) target = $region57
  $region56: #{tpu_custom_call.1} parent=0 // pred_region
    _
  $region57: #{tpu_custom_call.1} parent=0 // pred_fallthru
    _
  // Predicated region
  $region58: #{tpu_custom_call.1} parent=0 // pred_check
    _
  $region59: #{tpu_custom_call.1} parent=0 // pred_check_branch
    %57 = sbr.rel (0) target = $region61
  $region60: #{tpu_custom_call.1} parent=0 // pred_region
    _
  $region61: #{tpu_custom_call.1} parent=0 // pred_fallthru
    _
  // Predicated region
  $region62: #{tpu_custom_call.1} parent=0 // pred_check
    _
  $region63: #{tpu_custom_call.1} parent=0 // pred_check_branch
    %59 = sbr.rel (0) target = $region65
  $region64: #{tpu_custom_call.1} parent=0 // pred_region
    _
  $region65: #{tpu_custom_call.1} parent=0 // pred_fallthru
    _
  // Predicated region
  $region66: #{tpu_custom_call.1} parent=0 // pred_check
    _
  $region67: #{tpu_custom_call.1} parent=0 // pred_check_branch
    %61 = sbr.rel (0) target = $region69
  $region68: #{tpu_custom_call.1} parent=0 // pred_region
    _
  $region69: #{tpu_custom_call.1} parent=0 // pred_fallthru
    _
  // Predicated region
  $region70: #{tpu_custom_call.1} parent=0 // pred_check
    _
  $region71: #{tpu_custom_call.1} parent=0 // pred_check_branch
    %63 = sbr.rel (0) target = $region73
  $region72: #{tpu_custom_call.1} parent=0 // pred_region
    _
  $region73: #{tpu_custom_call.1} parent=0 // pred_fallthru
    _
  // Predicated region
  $region74: #{tpu_custom_call.1} parent=0 // pred_check
    _
  $region75: #{tpu_custom_call.1} parent=0 // pred_check_branch
    %65 = sbr.rel (0) target = $region77
  $region76: #{tpu_custom_call.1} parent=0 // pred_region
    _
  $region77: #{tpu_custom_call.1} parent=0 // pred_fallthru
    _
  // Predicated region
  $region78: #{tpu_custom_call.1} parent=0 // pred_check
    _
  $region79: #{tpu_custom_call.1} parent=0 // pred_check_branch
    %67 = sbr.rel (0) target = $region81
  $region80: #{tpu_custom_call.1} parent=0 // pred_region
    _
  $region81: #{tpu_custom_call.1} parent=0 // pred_fallthru
    _
  // Predicated region
  $region82: #{tpu_custom_call.1} parent=0 // pred_check
    _
  $region83: #{tpu_custom_call.1} parent=0 // pred_check_branch
    %69 = sbr.rel (0) target = $region85
  $region84: #{tpu_custom_call.1} parent=0 // pred_region
    _
  $region85: #{tpu_custom_call.1} parent=0 // pred_fallthru
    _
  %v71 = vld [vmem:[%s1] sm:$0x3]
  %v72 = vld [vmem:[%s1 + $0x2] sm:$0x3]
  %v73 = vunpack.c.0.s8 %v71
  %v74 = vunpack.c.0.s8 %v72
  %v75 = vcvt.s32.f32 %v73
  %v76 = vcvt.s32.f32 %v74
  %vm77 = vcmp.gt.f32.partialorder %v75, 0.0
  %vm78 = vcmp.gt.f32.partialorder %v76, 0.0
  %v79 = vld [vmem:[%s2] sm:$0x1]
  %v80 = vunpack.c.0.s8 %v79
  %v81 = vcvt.s32.f32 %v80
  %vm82 = vcmp.gt.f32.partialorder %v81, 0.0
  %v83 = vld [vmem:[%s0] sm:$0xff]
  %v84 = vld [vmem:[%s0 + $0x8] sm:$0xff]
  %v85 = vpack.c.bf16 %v84, %v83
  %v86 = vld [vmem:[%s3] sm:$0xff]
  %v87 = vld [vmem:[%s3 + $0x8] sm:$0xff]
  %v88 = vpack.c.bf16 %v87, %v86
  %vm89 = vcmask 130048
  %v91 = vsel %vm89, %v85, 0
  %93 = vmatprep.subr.bf16.mxu0 0
  %94 = vmatpush1.bf16.msra.mxu0 0
  %95 = vmatprep.subr.bf16.mxu0 0
  %96 = vmatpush1.bf16.msra.mxu0 0
  %97 = vmatprep.subr.bf16.mxu0 0
  %98 = vmatpush1.bf16.msra.mxu0 0
  %99 = vmatprep.subr.bf16.mxu0 0
  %100 = vmatpush1.bf16.msra.mxu0 0
  %101 = vmatprep.subr.bf16.mxu0 0
  %102 = vmatpush1.bf16.msra.mxu0 0
  %103 = vmatprep.subr.bf16.mxu0 0
  %104 = vmatpush1.bf16.msra.mxu0 0
  %105 = vmatprep.subr.bf16.mxu0 0
  %106 = vmatpush1.bf16.msra.mxu0 0
  %107 = vmatprep.subr.bf16.mxu0 0
  %108 = vmatpush1.bf16.msra.mxu0 %v88
  %109 = vmatprep.subr.bf16.mxu0 0
  %110 = vmatpush2.bf16.msra.mxu0 0
  %111 = vmatprep.subr.bf16.mxu0 0
  %112 = vmatpush2.bf16.msra.mxu0 0
  %113 = vmatprep.subr.bf16.mxu0 0
  %114 = vmatpush2.bf16.msra.mxu0 0
  %115 = vmatprep.subr.bf16.mxu0 0
  %116 = vmatpush2.bf16.msra.mxu0 0
  %117 = vmatprep.subr.bf16.mxu0 0
  %118 = vmatpush2.bf16.msra.mxu0 0
  %119 = vmatprep.subr.bf16.mxu0 0
  %120 = vmatpush2.bf16.msra.mxu0 0
  %121 = vmatprep.subr.bf16.mxu0 0
  %122 = vmatpush2.bf16.msra.mxu0 0
  %123 = vmatprep.subr.bf16.mxu0 0
  %124 = vmatpush2.bf16.msra.mxu0 0
  %125 = vmatprep.mubr.bf16.mxu0 0
  %126 = vmatmul.mubr.bf16.gmra.mxu0 %v91
  %v127 = vpop.f32.mrf.mxu0
  %v128 = vadd.f32 0.0, %v127
  %v129 = vpop.f32.mrf.mxu0
  %v130 = vpop.f32.mrf.mxu0
  %v131 = vadd.f32 0.0, %v130
  %v132 = vpop.f32.mrf.mxu0
  %133 = vdwg.mxu0
  %v134 = vpack.c.bf16 %v131, %v128
  %v135 = vld [vmem:[%s4] sm:$0x3]
  %v136 = vlaneseq
  %v137 = vshrl.u32 %v136, 7
  %v138 = vsub.s32 1, %v137
  %v139 = vrot.slane %v135, %v138
  %v140 = vmul.f32 %v128, %v139
  %v141 = vmul.f32 %v131, %v139
  %vm142 = vcmask 261120
  %v143 = vsel %vm142, %v140, 0.0
  %144 = vadd.xlane.f32.xlu0 %v143
  %v145 = vpop.xlane.xlu0 %144
  %v146 = vsel %vm142, %v141, 0.0
  %147 = vadd.xlane.f32.xlu0 %v146
  %v148 = vpop.xlane.xlu0 %147
  %v149 = vpack.c.bf16 %v135, %v135
  %v151 = vsel %vm142, %v149, 0
  %v154 = vsel %vm142, %v134, 0
  %156 = vmatprep.subr.bf16.mxu0 0
  %157 = vmatpush1.bf16.xpose.msra.mxu0 0
  %158 = vmatprep.subr.bf16.mxu0 0
  %159 = vmatpush1.bf16.xpose.msra.mxu0 0
  %160 = vmatprep.subr.bf16.mxu0 0
  %161 = vmatpush1.bf16.xpose.msra.mxu0 0
  %162 = vmatprep.subr.bf16.mxu0 0
  %163 = vmatpush1.bf16.xpose.msra.mxu0 0
  %164 = vmatprep.subr.bf16.mxu0 0
  %165 = vmatpush1.bf16.xpose.msra.mxu0 0
  %166 = vmatprep.subr.bf16.mxu0 0
  %167 = vmatpush1.bf16.xpose.msra.mxu0 0
  %168 = vmatprep.subr.bf16.mxu0 0
  %169 = vmatpush1.bf16.xpose.msra.mxu0 0
  %170 = vmatprep.subr.bf16.mxu0 0
  %171 = vmatpush1.bf16.xpose.msra.mxu0 %v154
  %172 = vmatprep.subr.bf16.mxu0 0
  %173 = vmatpush2.bf16.xpose.msra.mxu0 0
  %174 = vmatprep.subr.bf16.mxu0 0
  %175 = vmatpush2.bf16.xpose.msra.mxu0 0
  %176 = vmatprep.subr.bf16.mxu0 0
  %177 = vmatpush2.bf16.xpose.msra.mxu0 0
  %178 = vmatprep.subr.bf16.mxu0 0
  %179 = vmatpush2.bf16.xpose.msra.mxu0 0
  %180 = vmatprep.subr.bf16.mxu0 0
  %181 = vmatpush2.bf16.xpose.msra.mxu0 0
  %182 = vmatprep.subr.bf16.mxu0 0
  %183 = vmatpush2.bf16.xpose.msra.mxu0 0
  %184 = vmatprep.subr.bf16.mxu0 0
  %185 = vmatpush2.bf16.xpose.msra.mxu0 0
  %186 = vmatprep.subr.bf16.mxu0 0
  %187 = vmatpush2.bf16.xpose.msra.mxu0 0
  %188 = vmatprep.mubr.bf16.mxu0 0
  %189 = vmatmul.mubr.bf16.gmra.mxu0 %v151
  %v190 = vpop.f32.mrf.mxu0
  %v191 = vadd.f32 0.0, %v190
  %v192 = vpop.f32.mrf.mxu0
  %v193 = vpop.f32.mrf.mxu0
  %v194 = vpop.f32.mrf.mxu0
  %195 = vdwg.mxu0
  %v196 = vlaneseq
  %v197 = vshrl.u32 %v196, 7
  %v198 = vsub.s32 0, %v197
  %v199 = vrot.slane %v191, %v198
  %v200 = vadd.f32 %v145, %v199
  %v201 = vadd.f32 %v148, %v199
  %vm202 = vcmp.gt.f32.partialorder %v200, 0.0
  %vm203 = vcmp.gt.f32.partialorder %v201, 0.0
  %v204 = vmul.f32 %v200, 0.2
  %v205 = vmul.f32 %v201, 0.2
  %v206 = vsel %vm202, %v200, %v204
  %v207 = vsel %vm203, %v201, %v205
  %v208 = vsel %vm77, %v206, -1e+09
  %v209 = vsel %vm78, %v207, -1e+09
  %v210 = vsel %vm89, %v208, -inf
  %211 = vmax.xlane.f32.xlu0 %v210
  %v212 = vpop.xlane.xlu0 %211
  %v213 = vsel %vm89, %v209, -inf
  %214 = vmax.xlane.f32.xlu0 %v213
  %v215 = vpop.xlane.xlu0 %214
  %v216 = vsub.f32 %v208, %v212
  %v217 = vsub.f32 %v209, %v215
  %v218 = vmul.f32 %v216, 1.442695
  %v219 = vpow.pop %v218
  %v220 = vmul.f32 %v217, 1.442695
  %v221 = vpow.pop %v220
  %v222 = vsel %vm89, %v219, 0.0
  %223 = vadd.xlane.f32.xlu0 %v222
  %v224 = vpop.xlane.xlu0 %223
  %v225 = vsel %vm89, %v221, 0.0
  %226 = vadd.xlane.f32.xlu0 %v225
  %v227 = vpop.xlane.xlu0 %226
  %v228 = vrcp.pop %v224
  %v229 = vrcp.pop %v227
  %v230 = vmul.f32 %v219, %v228
  %v231 = vmul.f32 %v221, %v229
  %v232 = vpack.c.bf16 %v231, %v230
  %v233 = vld [vmem:[%s5] sm:$0x1]
  %v235 = vlaneseq
  %v236 = vshrl.u32 %v235, 7
  %v237 = vsub.s32 0, %v236
  %v238 = vrot.slane %v233, %v237
  %v241 = vsel %vm89, %v232, 0
  %243 = vmatprep.subr.bf16.mxu0 0
  %244 = vmatpush1.bf16.msra.mxu0 0
  %245 = vmatprep.subr.bf16.mxu0 0
  %246 = vmatpush1.bf16.msra.mxu0 0
  %247 = vmatprep.subr.bf16.mxu0 0
  %248 = vmatpush1.bf16.msra.mxu0 0
  %249 = vmatprep.subr.bf16.mxu0 0
  %250 = vmatpush1.bf16.msra.mxu0 0
  %251 = vmatprep.subr.bf16.mxu0 0
  %252 = vmatpush1.bf16.msra.mxu0 0
  %253 = vmatprep.subr.bf16.mxu0 0
  %254 = vmatpush1.bf16.msra.mxu0 0
  %255 = vmatprep.subr.bf16.mxu0 0
  %256 = vmatpush1.bf16.msra.mxu0 0
  %257 = vmatprep.subr.bf16.mxu0 0
  %258 = vmatpush1.bf16.msra.mxu0 %v134
  %259 = vmatprep.subr.bf16.mxu0 0
  %260 = vmatpush2.bf16.msra.mxu0 0
  %261 = vmatprep.subr.bf16.mxu0 0
  %262 = vmatpush2.bf16.msra.mxu0 0
  %263 = vmatprep.subr.bf16.mxu0 0
  %264 = vmatpush2.bf16.msra.mxu0 0
  %265 = vmatprep.subr.bf16.mxu0 0
  %266 = vmatpush2.bf16.msra.mxu0 0
  %267 = vmatprep.subr.bf16.mxu0 0
  %268 = vmatpush2.bf16.msra.mxu0 0
  %269 = vmatprep.subr.bf16.mxu0 0
  %270 = vmatpush2.bf16.msra.mxu0 0
  %271 = vmatprep.subr.bf16.mxu0 0
  %272 = vmatpush2.bf16.msra.mxu0 0
  %273 = vmatprep.subr.bf16.mxu0 0
  %274 = vmatpush2.bf16.msra.mxu0 0
  %275 = vmatprep.mubr.bf16.mxu0 0
  %276 = vmatmul.mubr.bf16.gmra.mxu0 %v241
  %v277 = vpop.f32.mrf.mxu0
  %v278 = vadd.f32 %v238, %v277
  %v279 = vpop.f32.mrf.mxu0
  %v280 = vpop.f32.mrf.mxu0
  %v281 = vadd.f32 %v238, %v280
  %v282 = vpop.f32.mrf.mxu0
  %283 = vdwg.mxu0
  %v284 = vmax.f32 %v278, 0.0
  %v285 = vmax.f32 %v281, 0.0
  %v286 = vpack.c.bf16 %v285, %v284
  %v287 = vld [vmem:[%s6] sm:$0xff]
  %v288 = vld [vmem:[%s6 + $0x8] sm:$0xff]
  %v289 = vld [vmem:[%s6 + $0x10] sm:$0xff]
  %v290 = vld [vmem:[%s6 + $0x18] sm:$0xff]
  %v291 = vpack.c.bf16 %v288, %v287
  %v292 = vpack.c.bf16 %v290, %v289
  %v294 = vsel %vm142, %v286, 0
  %296 = vmatprep.subr.bf16.mxu0 0
  %297 = vmatpush1.bf16.msra.mxu0 0
  %298 = vmatprep.subr.bf16.mxu0 0
  %299 = vmatpush1.bf16.msra.mxu0 0
  %300 = vmatprep.subr.bf16.mxu0 0
  %301 = vmatpush1.bf16.msra.mxu0 0
  %302 = vmatprep.subr.bf16.mxu0 0
  %303 = vmatpush1.bf16.msra.mxu0 0
  %304 = vmatprep.subr.bf16.mxu0 0
  %305 = vmatpush1.bf16.msra.mxu0 0
  %306 = vmatprep.subr.bf16.mxu0 0
  %307 = vmatpush1.bf16.msra.mxu0 0
  %308 = vmatprep.subr.bf16.mxu0 0
  %309 = vmatpush1.bf16.msra.mxu0 %v292
  %310 = vmatprep.subr.bf16.mxu0 0
  %311 = vmatpush1.bf16.msra.mxu0 %v291
  %312 = vmatprep.subr.bf16.mxu0 0
  %313 = vmatpush2.bf16.msra.mxu0 0
  %314 = vmatprep.subr.bf16.mxu0 0
  %315 = vmatpush2.bf16.msra.mxu0 0
  %316 = vmatprep.subr.bf16.mxu0 0
  %317 = vmatpush2.bf16.msra.mxu0 0
  %318 = vmatprep.subr.bf16.mxu0 0
  %319 = vmatpush2.bf16.msra.mxu0 0
  %320 = vmatprep.subr.bf16.mxu0 0
  %321 = vmatpush2.bf16.msra.mxu0 0
  %322 = vmatprep.subr.bf16.mxu0 0
  %323 = vmatpush2.bf16.msra.mxu0 0
  %324 = vmatprep.subr.bf16.mxu0 0
  %325 = vmatpush2.bf16.msra.mxu0 0
  %326 = vmatprep.subr.bf16.mxu0 0
  %327 = vmatpush2.bf16.msra.mxu0 0
  %328 = vmatprep.mubr.bf16.mxu0 0
  %329 = vmatmul.mubr.bf16.gmra.mxu0 %v294
  %v330 = vpop.f32.mrf.mxu0
  %v331 = vadd.f32 0.0, %v330
  %v332 = vpop.f32.mrf.mxu0
  %v333 = vpop.f32.mrf.mxu0
  %v334 = vadd.f32 0.0, %v333
  %v335 = vpop.f32.mrf.mxu0
  %336 = vdwg.mxu0
  %v337 = vpack.c.bf16 %v334, %v331
  %v338 = vld [vmem:[%s7] sm:$0x3]
  %v339 = vlaneseq
  %v340 = vshrl.u32 %v339, 7
  %v341 = vsub.s32 1, %v340
  %v342 = vrot.slane %v338, %v341
  %v343 = vmul.f32 %v331, %v342
  %v344 = vmul.f32 %v334, %v342
  %v345 = vsel %vm142, %v343, 0.0
  %346 = vadd.xlane.f32.xlu0 %v345
  %v347 = vpop.xlane.xlu0 %346
  %v348 = vsel %vm142, %v344, 0.0
  %349 = vadd.xlane.f32.xlu0 %v348
  %v350 = vpop.xlane.xlu0 %349
  %v351 = vpack.c.bf16 %v338, %v338
  %v353 = vsel %vm142, %v351, 0
  %v356 = vsel %vm142, %v337, 0
  %358 = vmatprep.subr.bf16.mxu0 0
  %359 = vmatpush1.bf16.xpose.msra.mxu0 0
  %360 = vmatprep.subr.bf16.mxu0 0
  %361 = vmatpush1.bf16.xpose.msra.mxu0 0
  %362 = vmatprep.subr.bf16.mxu0 0
  %363 = vmatpush1.bf16.xpose.msra.mxu0 0
  %364 = vmatprep.subr.bf16.mxu0 0
  %365 = vmatpush1.bf16.xpose.msra.mxu0 0
  %366 = vmatprep.subr.bf16.mxu0 0
  %367 = vmatpush1.bf16.xpose.msra.mxu0 0
  %368 = vmatprep.subr.bf16.mxu0 0
  %369 = vmatpush1.bf16.xpose.msra.mxu0 0
  %370 = vmatprep.subr.bf16.mxu0 0
  %371 = vmatpush1.bf16.xpose.msra.mxu0 0
  %372 = vmatprep.subr.bf16.mxu0 0
  %373 = vmatpush1.bf16.xpose.msra.mxu0 %v356
  %374 = vmatprep.subr.bf16.mxu0 0
  %375 = vmatpush2.bf16.xpose.msra.mxu0 0
  %376 = vmatprep.subr.bf16.mxu0 0
  %377 = vmatpush2.bf16.xpose.msra.mxu0 0
  %378 = vmatprep.subr.bf16.mxu0 0
  %379 = vmatpush2.bf16.xpose.msra.mxu0 0
  %380 = vmatprep.subr.bf16.mxu0 0
  %381 = vmatpush2.bf16.xpose.msra.mxu0 0
  %382 = vmatprep.subr.bf16.mxu0 0
  %383 = vmatpush2.bf16.xpose.msra.mxu0 0
  %384 = vmatprep.subr.bf16.mxu0 0
  %385 = vmatpush2.bf16.xpose.msra.mxu0 0
  %386 = vmatprep.subr.bf16.mxu0 0
  %387 = vmatpush2.bf16.xpose.msra.mxu0 0
  %388 = vmatprep.subr.bf16.mxu0 0
  %389 = vmatpush2.bf16.xpose.msra.mxu0 0
  %390 = vmatprep.mubr.bf16.mxu0 0
  %391 = vmatmul.mubr.bf16.gmra.mxu0 %v353
  %v392 = vpop.f32.mrf.mxu0
  %v393 = vadd.f32 0.0, %v392
  %v394 = vpop.f32.mrf.mxu0
  %v395 = vpop.f32.mrf.mxu0
  %v396 = vpop.f32.mrf.mxu0
  %397 = vdwg.mxu0
  %v398 = vlaneseq
  %v399 = vshrl.u32 %v398, 7
  %v400 = vsub.s32 0, %v399
  %v401 = vrot.slane %v393, %v400
  %v402 = vadd.f32 %v347, %v401
  %v403 = vadd.f32 %v350, %v401
  %vm404 = vcmp.gt.f32.partialorder %v402, 0.0
  %vm405 = vcmp.gt.f32.partialorder %v403, 0.0
  %v406 = vmul.f32 %v402, 0.2
  %v407 = vmul.f32 %v403, 0.2
  %v408 = vsel %vm404, %v402, %v406
  %v409 = vsel %vm405, %v403, %v407
  %v410 = vsel %vm77, %v408, -1e+09
  %v411 = vsel %vm78, %v409, -1e+09
  %v412 = vsel %vm89, %v410, -inf
  %413 = vmax.xlane.f32.xlu0 %v412
  %v414 = vpop.xlane.xlu0 %413
  %v415 = vsel %vm89, %v411, -inf
  %416 = vmax.xlane.f32.xlu0 %v415
  %v417 = vpop.xlane.xlu0 %416
  %v418 = vsub.f32 %v410, %v414
  %v419 = vsub.f32 %v411, %v417
  %v420 = vmul.f32 %v418, 1.442695
  %v421 = vpow.pop %v420
  %v422 = vmul.f32 %v419, 1.442695
  %v423 = vpow.pop %v422
  %v424 = vsel %vm89, %v421, 0.0
  %425 = vadd.xlane.f32.xlu0 %v424
  %v426 = vpop.xlane.xlu0 %425
  %v427 = vsel %vm89, %v423, 0.0
  %428 = vadd.xlane.f32.xlu0 %v427
  %v429 = vpop.xlane.xlu0 %428
  %v430 = vrcp.pop %v426
  %v431 = vrcp.pop %v429
  %v432 = vmul.f32 %v421, %v430
  %v433 = vmul.f32 %v423, %v431
  %v434 = vpack.c.bf16 %v433, %v432
  %v435 = vld [vmem:[%s8] sm:$0x1]
  %v437 = vlaneseq
  %v438 = vshrl.u32 %v437, 7
  %v439 = vsub.s32 0, %v438
  %v440 = vrot.slane %v435, %v439
  %v443 = vsel %vm89, %v434, 0
  %445 = vmatprep.subr.bf16.mxu0 0
  %446 = vmatpush1.bf16.msra.mxu0 0
  %447 = vmatprep.subr.bf16.mxu0 0
  %448 = vmatpush1.bf16.msra.mxu0 0
  %449 = vmatprep.subr.bf16.mxu0 0
  %450 = vmatpush1.bf16.msra.mxu0 0
  %451 = vmatprep.subr.bf16.mxu0 0
  %452 = vmatpush1.bf16.msra.mxu0 0
  %453 = vmatprep.subr.bf16.mxu0 0
  %454 = vmatpush1.bf16.msra.mxu0 0
  %455 = vmatprep.subr.bf16.mxu0 0
  %456 = vmatpush1.bf16.msra.mxu0 0
  %457 = vmatprep.subr.bf16.mxu0 0
  %458 = vmatpush1.bf16.msra.mxu0 0
  %459 = vmatprep.subr.bf16.mxu0 0
  %460 = vmatpush1.bf16.msra.mxu0 %v337
  %461 = vmatprep.subr.bf16.mxu0 0
  %462 = vmatpush2.bf16.msra.mxu0 0
  %463 = vmatprep.subr.bf16.mxu0 0
  %464 = vmatpush2.bf16.msra.mxu0 0
  %465 = vmatprep.subr.bf16.mxu0 0
  %466 = vmatpush2.bf16.msra.mxu0 0
  %467 = vmatprep.subr.bf16.mxu0 0
  %468 = vmatpush2.bf16.msra.mxu0 0
  %469 = vmatprep.subr.bf16.mxu0 0
  %470 = vmatpush2.bf16.msra.mxu0 0
  %471 = vmatprep.subr.bf16.mxu0 0
  %472 = vmatpush2.bf16.msra.mxu0 0
  %473 = vmatprep.subr.bf16.mxu0 0
  %474 = vmatpush2.bf16.msra.mxu0 0
  %475 = vmatprep.subr.bf16.mxu0 0
  %476 = vmatpush2.bf16.msra.mxu0 0
  %477 = vmatprep.mubr.bf16.mxu0 0
  %478 = vmatmul.mubr.bf16.gmra.mxu0 %v443
  %v479 = vpop.f32.mrf.mxu0
  %v480 = vadd.f32 %v440, %v479
  %v481 = vpop.f32.mrf.mxu0
  %v482 = vpop.f32.mrf.mxu0
  %v483 = vadd.f32 %v440, %v482
  %v484 = vpop.f32.mrf.mxu0
  %485 = vdwg.mxu0
  %v486 = vmax.f32 %v480, 0.0
  %v487 = vmax.f32 %v483, 0.0
  %v488 = vpack.c.bf16 %v487, %v486
  %v489 = vld [vmem:[%s9] sm:$0xff]
  %v490 = vld [vmem:[%s9 + $0x8] sm:$0xff]
  %v491 = vld [vmem:[%s9 + $0x10] sm:$0xff]
  %v492 = vld [vmem:[%s9 + $0x18] sm:$0xff]
  %v493 = vpack.c.bf16 %v490, %v489
  %v494 = vpack.c.bf16 %v492, %v491
  %v496 = vsel %vm142, %v488, 0
  %498 = vmatprep.subr.bf16.mxu0 0
  %499 = vmatpush1.bf16.msra.mxu0 0
  %500 = vmatprep.subr.bf16.mxu0 0
  %501 = vmatpush1.bf16.msra.mxu0 0
  %502 = vmatprep.subr.bf16.mxu0 0
  %503 = vmatpush1.bf16.msra.mxu0 0
  %504 = vmatprep.subr.bf16.mxu0 0
  %505 = vmatpush1.bf16.msra.mxu0 0
  %506 = vmatprep.subr.bf16.mxu0 0
  %507 = vmatpush1.bf16.msra.mxu0 0
  %508 = vmatprep.subr.bf16.mxu0 0
  %509 = vmatpush1.bf16.msra.mxu0 0
  %510 = vmatprep.subr.bf16.mxu0 0
  %511 = vmatpush1.bf16.msra.mxu0 %v494
  %512 = vmatprep.subr.bf16.mxu0 0
  %513 = vmatpush1.bf16.msra.mxu0 %v493
  %514 = vmatprep.subr.bf16.mxu0 0
  %515 = vmatpush2.bf16.msra.mxu0 0
  %516 = vmatprep.subr.bf16.mxu0 0
  %517 = vmatpush2.bf16.msra.mxu0 0
  %518 = vmatprep.subr.bf16.mxu0 0
  %519 = vmatpush2.bf16.msra.mxu0 0
  %520 = vmatprep.subr.bf16.mxu0 0
  %521 = vmatpush2.bf16.msra.mxu0 0
  %522 = vmatprep.subr.bf16.mxu0 0
  %523 = vmatpush2.bf16.msra.mxu0 0
  %524 = vmatprep.subr.bf16.mxu0 0
  %525 = vmatpush2.bf16.msra.mxu0 0
  %526 = vmatprep.subr.bf16.mxu0 0
  %527 = vmatpush2.bf16.msra.mxu0 0
  %528 = vmatprep.subr.bf16.mxu0 0
  %529 = vmatpush2.bf16.msra.mxu0 0
  %530 = vmatprep.mubr.bf16.mxu0 0
  %531 = vmatmul.mubr.bf16.gmra.mxu0 %v496
  %v532 = vpop.f32.mrf.mxu0
  %v533 = vadd.f32 0.0, %v532
  %v534 = vpop.f32.mrf.mxu0
  %v535 = vpop.f32.mrf.mxu0
  %v536 = vadd.f32 0.0, %v535
  %v537 = vpop.f32.mrf.mxu0
  %538 = vdwg.mxu0
  %v539 = vpack.c.bf16 %v536, %v533
  %v540 = vld [vmem:[%s10] sm:$0x3]
  %v541 = vlaneseq
  %v542 = vshrl.u32 %v541, 7
  %v543 = vsub.s32 1, %v542
  %v544 = vrot.slane %v540, %v543
  %v545 = vmul.f32 %v533, %v544
  %v546 = vmul.f32 %v536, %v544
  %v547 = vsel %vm142, %v545, 0.0
  %548 = vadd.xlane.f32.xlu0 %v547
  %v549 = vpop.xlane.xlu0 %548
  %v550 = vsel %vm142, %v546, 0.0
  %551 = vadd.xlane.f32.xlu0 %v550
  %v552 = vpop.xlane.xlu0 %551
  %v553 = vpack.c.bf16 %v540, %v540
  %v555 = vsel %vm142, %v553, 0
  %v558 = vsel %vm142, %v539, 0
  %560 = vmatprep.subr.bf16.mxu0 0
  %561 = vmatpush1.bf16.xpose.msra.mxu0 0
  %562 = vmatprep.subr.bf16.mxu0 0
  %563 = vmatpush1.bf16.xpose.msra.mxu0 0
  %564 = vmatprep.subr.bf16.mxu0 0
  %565 = vmatpush1.bf16.xpose.msra.mxu0 0
  %566 = vmatprep.subr.bf16.mxu0 0
  %567 = vmatpush1.bf16.xpose.msra.mxu0 0
  %568 = vmatprep.subr.bf16.mxu0 0
  %569 = vmatpush1.bf16.xpose.msra.mxu0 0
  %570 = vmatprep.subr.bf16.mxu0 0
  %571 = vmatpush1.bf16.xpose.msra.mxu0 0
  %572 = vmatprep.subr.bf16.mxu0 0
  %573 = vmatpush1.bf16.xpose.msra.mxu0 0
  %574 = vmatprep.subr.bf16.mxu0 0
  %575 = vmatpush1.bf16.xpose.msra.mxu0 %v558
  %576 = vmatprep.subr.bf16.mxu0 0
  %577 = vmatpush2.bf16.xpose.msra.mxu0 0
  %578 = vmatprep.subr.bf16.mxu0 0
  %579 = vmatpush2.bf16.xpose.msra.mxu0 0
  %580 = vmatprep.subr.bf16.mxu0 0
  %581 = vmatpush2.bf16.xpose.msra.mxu0 0
  %582 = vmatprep.subr.bf16.mxu0 0
  %583 = vmatpush2.bf16.xpose.msra.mxu0 0
  %584 = vmatprep.subr.bf16.mxu0 0
  %585 = vmatpush2.bf16.xpose.msra.mxu0 0
  %586 = vmatprep.subr.bf16.mxu0 0
  %587 = vmatpush2.bf16.xpose.msra.mxu0 0
  %588 = vmatprep.subr.bf16.mxu0 0
  %589 = vmatpush2.bf16.xpose.msra.mxu0 0
  %590 = vmatprep.subr.bf16.mxu0 0
  %591 = vmatpush2.bf16.xpose.msra.mxu0 0
  %592 = vmatprep.mubr.bf16.mxu0 0
  %593 = vmatmul.mubr.bf16.gmra.mxu0 %v555
  %v594 = vpop.f32.mrf.mxu0
  %v595 = vadd.f32 0.0, %v594
  %v596 = vpop.f32.mrf.mxu0
  %v597 = vpop.f32.mrf.mxu0
  %v598 = vpop.f32.mrf.mxu0
  %599 = vdwg.mxu0
  %v600 = vlaneseq
  %v601 = vshrl.u32 %v600, 7
  %v602 = vsub.s32 0, %v601
  %v603 = vrot.slane %v595, %v602
  %v604 = vadd.f32 %v549, %v603
  %v605 = vadd.f32 %v552, %v603
  %vm606 = vcmp.gt.f32.partialorder %v604, 0.0
  %vm607 = vcmp.gt.f32.partialorder %v605, 0.0
  %v608 = vmul.f32 %v604, 0.2
  %v609 = vmul.f32 %v605, 0.2
  %v610 = vsel %vm606, %v604, %v608
  %v611 = vsel %vm607, %v605, %v609
  %v612 = vsel %vm77, %v610, -1e+09
  %v613 = vsel %vm78, %v611, -1e+09
  %v614 = vsel %vm89, %v612, -inf
  %615 = vmax.xlane.f32.xlu0 %v614
  %v616 = vpop.xlane.xlu0 %615
  %v617 = vsel %vm89, %v613, -inf
  %618 = vmax.xlane.f32.xlu0 %v617
  %v619 = vpop.xlane.xlu0 %618
  %v620 = vsub.f32 %v612, %v616
  %v621 = vsub.f32 %v613, %v619
  %v622 = vmul.f32 %v620, 1.442695
  %v623 = vpow.pop %v622
  %v624 = vmul.f32 %v621, 1.442695
  %v625 = vpow.pop %v624
  %v626 = vsel %vm89, %v623, 0.0
  %627 = vadd.xlane.f32.xlu0 %v626
  %v628 = vpop.xlane.xlu0 %627
  %v629 = vsel %vm89, %v625, 0.0
  %630 = vadd.xlane.f32.xlu0 %v629
  %v631 = vpop.xlane.xlu0 %630
  %v632 = vrcp.pop %v628
  %v633 = vrcp.pop %v631
  %v634 = vmul.f32 %v623, %v632
  %v635 = vmul.f32 %v625, %v633
  %v636 = vpack.c.bf16 %v635, %v634
  %v637 = vld [vmem:[%s11] sm:$0x1]
  %v639 = vlaneseq
  %v640 = vshrl.u32 %v639, 7
  %v641 = vsub.s32 0, %v640
  %v642 = vrot.slane %v637, %v641
  %v645 = vsel %vm89, %v636, 0
  %647 = vmatprep.subr.bf16.mxu0 0
  %648 = vmatpush1.bf16.msra.mxu0 0
  %649 = vmatprep.subr.bf16.mxu0 0
  %650 = vmatpush1.bf16.msra.mxu0 0
  %651 = vmatprep.subr.bf16.mxu0 0
  %652 = vmatpush1.bf16.msra.mxu0 0
  %653 = vmatprep.subr.bf16.mxu0 0
  %654 = vmatpush1.bf16.msra.mxu0 0
  %655 = vmatprep.subr.bf16.mxu0 0
  %656 = vmatpush1.bf16.msra.mxu0 0
  %657 = vmatprep.subr.bf16.mxu0 0
  %658 = vmatpush1.bf16.msra.mxu0 0
  %659 = vmatprep.subr.bf16.mxu0 0
  %660 = vmatpush1.bf16.msra.mxu0 0
  %661 = vmatprep.subr.bf16.mxu0 0
  %662 = vmatpush1.bf16.msra.mxu0 %v539
  %663 = vmatprep.subr.bf16.mxu0 0
  %664 = vmatpush2.bf16.msra.mxu0 0
  %665 = vmatprep.subr.bf16.mxu0 0
  %666 = vmatpush2.bf16.msra.mxu0 0
  %667 = vmatprep.subr.bf16.mxu0 0
  %668 = vmatpush2.bf16.msra.mxu0 0
  %669 = vmatprep.subr.bf16.mxu0 0
  %670 = vmatpush2.bf16.msra.mxu0 0
  %671 = vmatprep.subr.bf16.mxu0 0
  %672 = vmatpush2.bf16.msra.mxu0 0
  %673 = vmatprep.subr.bf16.mxu0 0
  %674 = vmatpush2.bf16.msra.mxu0 0
  %675 = vmatprep.subr.bf16.mxu0 0
  %676 = vmatpush2.bf16.msra.mxu0 0
  %677 = vmatprep.subr.bf16.mxu0 0
  %678 = vmatpush2.bf16.msra.mxu0 0
  %679 = vmatprep.mubr.bf16.mxu0 0
  %680 = vmatmul.mubr.bf16.gmra.mxu0 %v645
  %v681 = vpop.f32.mrf.mxu0
  %v682 = vadd.f32 %v642, %v681
  %v683 = vpop.f32.mrf.mxu0
  %v684 = vpop.f32.mrf.mxu0
  %v685 = vadd.f32 %v642, %v684
  %v686 = vpop.f32.mrf.mxu0
  %687 = vdwg.mxu0
  %v688 = vmax.f32 %v682, 0.0
  %v689 = vmax.f32 %v685, 0.0
  %v690 = vpack.c.bf16 %v689, %v688
  %v691 = vld [vmem:[%s12] sm:$0xff]
  %v692 = vld [vmem:[%s12 + $0x8] sm:$0xff]
  %v693 = vld [vmem:[%s12 + $0x10] sm:$0xff]
  %v694 = vld [vmem:[%s12 + $0x18] sm:$0xff]
  %v695 = vld [vmem:[%s12 + $0x20] sm:$0xff]
  %v696 = vld [vmem:[%s12 + $0x28] sm:$0xff]
  %v697 = vld [vmem:[%s12 + $0x30] sm:$0xff]
  %v698 = vld [vmem:[%s12 + $0x38] sm:$0xff]
  %v699 = vpack.c.bf16 %v692, %v691
  %v700 = vpack.c.bf16 %v694, %v693
  %v701 = vpack.c.bf16 %v696, %v695
  %v702 = vpack.c.bf16 %v698, %v697
  %s703 = scalar_lea.vmem %s12, 64
  %v704 = vld [vmem:[%s703] sm:$0xff]
  %v705 = vld [vmem:[%s703 + $0x8] sm:$0xff]
  %v706 = vld [vmem:[%s703 + $0x10] sm:$0xff]
  %v707 = vld [vmem:[%s703 + $0x18] sm:$0xff]
  %v708 = vld [vmem:[%s703 + $0x20] sm:$0xff]
  %v709 = vld [vmem:[%s703 + $0x28] sm:$0xff]
  %v710 = vld [vmem:[%s703 + $0x30] sm:$0xff]
  %v711 = vld [vmem:[%s703 + $0x38] sm:$0xff]
  %v712 = vpack.c.bf16 %v705, %v704
  %v713 = vpack.c.bf16 %v707, %v706
  %v714 = vpack.c.bf16 %v709, %v708
  %v715 = vpack.c.bf16 %v711, %v710
  %s716 = scalar_lea.vmem %s12, 128
  %v717 = vld [vmem:[%s716] sm:$0xff]
  %v718 = vld [vmem:[%s716 + $0x8] sm:$0xff]
  %v719 = vld [vmem:[%s716 + $0x10] sm:$0xff]
  %v720 = vld [vmem:[%s716 + $0x18] sm:$0xff]
  %v721 = vld [vmem:[%s716 + $0x20] sm:$0xff]
  %v722 = vld [vmem:[%s716 + $0x28] sm:$0xff]
  %v723 = vld [vmem:[%s716 + $0x30] sm:$0xff]
  %v724 = vld [vmem:[%s716 + $0x38] sm:$0xff]
  %v725 = vpack.c.bf16 %v718, %v717
  %v726 = vpack.c.bf16 %v720, %v719
  %v727 = vpack.c.bf16 %v722, %v721
  %v728 = vpack.c.bf16 %v724, %v723
  %s729 = scalar_lea.vmem %s12, 192
  %v730 = vld [vmem:[%s729] sm:$0xff]
  %v731 = vld [vmem:[%s729 + $0x8] sm:$0xff]
  %v732 = vld [vmem:[%s729 + $0x10] sm:$0xff]
  %v733 = vld [vmem:[%s729 + $0x18] sm:$0xff]
  %v734 = vld [vmem:[%s729 + $0x20] sm:$0xff]
  %v735 = vld [vmem:[%s729 + $0x28] sm:$0xff]
  %v736 = vld [vmem:[%s729 + $0x30] sm:$0xff]
  %v737 = vld [vmem:[%s729 + $0x38] sm:$0xff]
  %v738 = vpack.c.bf16 %v731, %v730
  %v739 = vpack.c.bf16 %v733, %v732
  %v740 = vpack.c.bf16 %v735, %v734
  %v741 = vpack.c.bf16 %v737, %v736
  %v742 = vld [vmem:[%s13] sm:$0xff]
  %v743 = vld [vmem:[%s13 + $0x8] sm:$0xff]
  %v744 = vld [vmem:[%s13 + $0x10] sm:$0xff]
  %v745 = vld [vmem:[%s13 + $0x18] sm:$0xff]
  %v746 = vpack.c.bf16 %v743, %v742
  %v747 = vpack.c.bf16 %v745, %v744
  %s748 = scalar_lea.vmem %s13, 32
  %v749 = vld [vmem:[%s748] sm:$0xff]
  %v750 = vld [vmem:[%s748 + $0x8] sm:$0xff]
  %v751 = vld [vmem:[%s748 + $0x10] sm:$0xff]
  %v752 = vld [vmem:[%s748 + $0x18] sm:$0xff]
  %v753 = vpack.c.bf16 %v750, %v749
  %v754 = vpack.c.bf16 %v752, %v751
  %s755 = scalar_lea.vmem %s13, 64
  %v756 = vld [vmem:[%s755] sm:$0xff]
  %v757 = vld [vmem:[%s755 + $0x8] sm:$0xff]
  %v758 = vld [vmem:[%s755 + $0x10] sm:$0xff]
  %v759 = vld [vmem:[%s755 + $0x18] sm:$0xff]
  %v760 = vpack.c.bf16 %v757, %v756
  %v761 = vpack.c.bf16 %v759, %v758
  %s762 = scalar_lea.vmem %s13, 96
  %v763 = vld [vmem:[%s762] sm:$0xff]
  %v764 = vld [vmem:[%s762 + $0x8] sm:$0xff]
  %v765 = vld [vmem:[%s762 + $0x10] sm:$0xff]
  %v766 = vld [vmem:[%s762 + $0x18] sm:$0xff]
  %v767 = vpack.c.bf16 %v764, %v763
  %v768 = vpack.c.bf16 %v766, %v765
  %v769 = vld [vmem:[%s14] sm:$0xf]
  %v771 = vsel %vm142, 0, 0
  %773 = vmatprep.subr.bf16.mxu0 0
  %774 = vmatpush1.bf16.msra.mxu0 0
  %775 = vmatprep.subr.bf16.mxu0 0
  %776 = vmatpush1.bf16.msra.mxu0 0
  %777 = vmatprep.subr.bf16.mxu0 0
  %778 = vmatpush1.bf16.msra.mxu0 0
  %779 = vmatprep.subr.bf16.mxu0 0
  %780 = vmatpush1.bf16.msra.mxu0 0
  %781 = vmatprep.subr.bf16.mxu0 0
  %782 = vmatpush1.bf16.msra.mxu0 0
  %783 = vmatprep.subr.bf16.mxu0 0
  %784 = vmatpush1.bf16.msra.mxu0 0
  %785 = vmatprep.subr.bf16.mxu0 0
  %786 = vmatpush1.bf16.msra.mxu0 %v747
  %787 = vmatprep.subr.bf16.mxu0 0
  %788 = vmatpush1.bf16.msra.mxu0 %v746
  %789 = vmatprep.subr.bf16.mxu0 0
  %790 = vmatpush2.bf16.msra.mxu0 0
  %791 = vmatprep.subr.bf16.mxu0 0
  %792 = vmatpush2.bf16.msra.mxu0 0
  %793 = vmatprep.subr.bf16.mxu0 0
  %794 = vmatpush2.bf16.msra.mxu0 0
  %795 = vmatprep.subr.bf16.mxu0 0
  %796 = vmatpush2.bf16.msra.mxu0 0
  %797 = vmatprep.subr.bf16.mxu0 0
  %798 = vmatpush2.bf16.msra.mxu0 0
  %799 = vmatprep.subr.bf16.mxu0 0
  %800 = vmatpush2.bf16.msra.mxu0 0
  %801 = vmatprep.subr.bf16.mxu0 0
  %802 = vmatpush2.bf16.msra.mxu0 0
  %803 = vmatprep.subr.bf16.mxu0 0
  %804 = vmatpush2.bf16.msra.mxu0 0
  %805 = vmatprep.mubr.bf16.mxu0 0
  %806 = vmatmul.mubr.bf16.gmra.mxu0 %v771
  %v807 = vpop.f32.mrf.mxu0
  %v808 = vadd.f32 0.0, %v807
  %v809 = vpop.f32.mrf.mxu0
  %v810 = vpop.f32.mrf.mxu0
  %v811 = vpop.f32.mrf.mxu0
  %812 = vdwg.mxu0
  %vm813 = vcmask 523264
  %v814 = vsel %vm813, 0, 0
  %816 = vmatprep.subr.bf16.mxu0 0
  %817 = vmatpush1.bf16.msra.mxu0 0
  %818 = vmatprep.subr.bf16.mxu0 0
  %819 = vmatpush1.bf16.msra.mxu0 0
  %820 = vmatprep.subr.bf16.mxu0 0
  %821 = vmatpush1.bf16.msra.mxu0 0
  %822 = vmatprep.subr.bf16.mxu0 0
  %823 = vmatpush1.bf16.msra.mxu0 0
  %824 = vmatprep.subr.bf16.mxu0 0
  %825 = vmatpush1.bf16.msra.mxu0 %v702
  %826 = vmatprep.subr.bf16.mxu0 0
  %827 = vmatpush1.bf16.msra.mxu0 %v701
  %828 = vmatprep.subr.bf16.mxu0 0
  %829 = vmatpush1.bf16.msra.mxu0 %v700
  %830 = vmatprep.subr.bf16.mxu0 0
  %831 = vmatpush1.bf16.msra.mxu0 %v699
  %832 = vmatprep.subr.bf16.mxu0 0
  %833 = vmatpush2.bf16.msra.mxu0 0
  %834 = vmatprep.subr.bf16.mxu0 0
  %835 = vmatpush2.bf16.msra.mxu0 0
  %836 = vmatprep.subr.bf16.mxu0 0
  %837 = vmatpush2.bf16.msra.mxu0 0
  %838 = vmatprep.subr.bf16.mxu0 0
  %839 = vmatpush2.bf16.msra.mxu0 0
  %840 = vmatprep.subr.bf16.mxu0 0
  %841 = vmatpush2.bf16.msra.mxu0 0
  %842 = vmatprep.subr.bf16.mxu0 0
  %843 = vmatpush2.bf16.msra.mxu0 0
  %844 = vmatprep.subr.bf16.mxu0 0
  %845 = vmatpush2.bf16.msra.mxu0 0
  %846 = vmatprep.subr.bf16.mxu0 0
  %847 = vmatpush2.bf16.msra.mxu0 0
  %848 = vmatprep.mubr.bf16.mxu0 0
  %849 = vmatmul.mubr.bf16.gmra.mxu0 %v814
  %v850 = vpop.f32.mrf.mxu0
  %v851 = vadd.f32 %v808, %v850
  %v852 = vpop.f32.mrf.mxu0
  %v853 = vpop.f32.mrf.mxu0
  %v854 = vpop.f32.mrf.mxu0
  %855 = vdwg.mxu0
  %v856 = vlaneseq
  %v857 = vshrl.u32 %v856, 7
  %v858 = vsub.s32 0, %v857
  %v859 = vrot.slane %v769, %v858
  %v860 = vadd.f32 %v851, %v859
  %v861 = vxor.u32 %v860, 2147483648
  %v862 = vmul.f32 %v861, 1.442695
  %v863 = vpow.pop %v862
  %v864 = vadd.f32 %v863, 1.0
  %v865 = vrcp.pop %v864
  %v866 = vmul.f32 1.0, %v865
  %867 = vmatprep.subr.bf16.mxu0 0
  %868 = vmatpush1.bf16.msra.mxu0 0
  %869 = vmatprep.subr.bf16.mxu0 0
  %870 = vmatpush1.bf16.msra.mxu0 0
  %871 = vmatprep.subr.bf16.mxu0 0
  %872 = vmatpush1.bf16.msra.mxu0 0
  %873 = vmatprep.subr.bf16.mxu0 0
  %874 = vmatpush1.bf16.msra.mxu0 0
  %875 = vmatprep.subr.bf16.mxu0 0
  %876 = vmatpush1.bf16.msra.mxu0 0
  %877 = vmatprep.subr.bf16.mxu0 0
  %878 = vmatpush1.bf16.msra.mxu0 0
  %879 = vmatprep.subr.bf16.mxu0 0
  %880 = vmatpush1.bf16.msra.mxu0 %v754
  %881 = vmatprep.subr.bf16.mxu0 0
  %882 = vmatpush1.bf16.msra.mxu0 %v753
  %883 = vmatprep.subr.bf16.mxu0 0
  %884 = vmatpush2.bf16.msra.mxu0 0
  %885 = vmatprep.subr.bf16.mxu0 0
  %886 = vmatpush2.bf16.msra.mxu0 0
  %887 = vmatprep.subr.bf16.mxu0 0
  %888 = vmatpush2.bf16.msra.mxu0 0
  %889 = vmatprep.subr.bf16.mxu0 0
  %890 = vmatpush2.bf16.msra.mxu0 0
  %891 = vmatprep.subr.bf16.mxu0 0
  %892 = vmatpush2.bf16.msra.mxu0 0
  %893 = vmatprep.subr.bf16.mxu0 0
  %894 = vmatpush2.bf16.msra.mxu0 0
  %895 = vmatprep.subr.bf16.mxu0 0
  %896 = vmatpush2.bf16.msra.mxu0 0
  %897 = vmatprep.subr.bf16.mxu0 0
  %898 = vmatpush2.bf16.msra.mxu0 0
  %899 = vmatprep.mubr.bf16.mxu0 0
  %900 = vmatmul.mubr.bf16.gmra.mxu0 %v771
  %v901 = vpop.f32.mrf.mxu0
  %v902 = vadd.f32 0.0, %v901
  %v903 = vpop.f32.mrf.mxu0
  %v904 = vpop.f32.mrf.mxu0
  %v905 = vpop.f32.mrf.mxu0
  %906 = vdwg.mxu0
  %907 = vmatprep.subr.bf16.mxu0 0
  %908 = vmatpush1.bf16.msra.mxu0 0
  %909 = vmatprep.subr.bf16.mxu0 0
  %910 = vmatpush1.bf16.msra.mxu0 0
  %911 = vmatprep.subr.bf16.mxu0 0
  %912 = vmatpush1.bf16.msra.mxu0 0
  %913 = vmatprep.subr.bf16.mxu0 0
  %914 = vmatpush1.bf16.msra.mxu0 0
  %915 = vmatprep.subr.bf16.mxu0 0
  %916 = vmatpush1.bf16.msra.mxu0 %v715
  %917 = vmatprep.subr.bf16.mxu0 0
  %918 = vmatpush1.bf16.msra.mxu0 %v714
  %919 = vmatprep.subr.bf16.mxu0 0
  %920 = vmatpush1.bf16.msra.mxu0 %v713
  %921 = vmatprep.subr.bf16.mxu0 0
  %922 = vmatpush1.bf16.msra.mxu0 %v712
  %923 = vmatprep.subr.bf16.mxu0 0
  %924 = vmatpush2.bf16.msra.mxu0 0
  %925 = vmatprep.subr.bf16.mxu0 0
  %926 = vmatpush2.bf16.msra.mxu0 0
  %927 = vmatprep.subr.bf16.mxu0 0
  %928 = vmatpush2.bf16.msra.mxu0 0
  %929 = vmatprep.subr.bf16.mxu0 0
  %930 = vmatpush2.bf16.msra.mxu0 0
  %931 = vmatprep.subr.bf16.mxu0 0
  %932 = vmatpush2.bf16.msra.mxu0 0
  %933 = vmatprep.subr.bf16.mxu0 0
  %934 = vmatpush2.bf16.msra.mxu0 0
  %935 = vmatprep.subr.bf16.mxu0 0
  %936 = vmatpush2.bf16.msra.mxu0 0
  %937 = vmatprep.subr.bf16.mxu0 0
  %938 = vmatpush2.bf16.msra.mxu0 0
  %939 = vmatprep.mubr.bf16.mxu0 0
  %940 = vmatmul.mubr.bf16.gmra.mxu0 %v814
  %v941 = vpop.f32.mrf.mxu0
  %v942 = vadd.f32 %v902, %v941
  %v943 = vpop.f32.mrf.mxu0
  %v944 = vpop.f32.mrf.mxu0
  %v945 = vpop.f32.mrf.mxu0
  %946 = vdwg.mxu0
  %v947 = vlaneseq
  %v948 = vshrl.u32 %v947, 7
  %v949 = vsub.s32 1, %v948
  %v950 = vrot.slane %v769, %v949
  %v951 = vadd.f32 %v942, %v950
  %v952 = vxor.u32 %v951, 2147483648
  %v953 = vmul.f32 %v952, 1.442695
  %v954 = vpow.pop %v953
  %v955 = vadd.f32 %v954, 1.0
  %v956 = vrcp.pop %v955
  %v957 = vmul.f32 1.0, %v956
  %958 = vmatprep.subr.bf16.mxu0 0
  %959 = vmatpush1.bf16.msra.mxu0 0
  %960 = vmatprep.subr.bf16.mxu0 0
  %961 = vmatpush1.bf16.msra.mxu0 0
  %962 = vmatprep.subr.bf16.mxu0 0
  %963 = vmatpush1.bf16.msra.mxu0 0
  %964 = vmatprep.subr.bf16.mxu0 0
  %965 = vmatpush1.bf16.msra.mxu0 0
  %966 = vmatprep.subr.bf16.mxu0 0
  %967 = vmatpush1.bf16.msra.mxu0 0
  %968 = vmatprep.subr.bf16.mxu0 0
  %969 = vmatpush1.bf16.msra.mxu0 0
  %970 = vmatprep.subr.bf16.mxu0 0
  %971 = vmatpush1.bf16.msra.mxu0 %v761
  %972 = vmatprep.subr.bf16.mxu0 0
  %973 = vmatpush1.bf16.msra.mxu0 %v760
  %974 = vmatprep.subr.bf16.mxu0 0
  %975 = vmatpush2.bf16.msra.mxu0 0
  %976 = vmatprep.subr.bf16.mxu0 0
  %977 = vmatpush2.bf16.msra.mxu0 0
  %978 = vmatprep.subr.bf16.mxu0 0
  %979 = vmatpush2.bf16.msra.mxu0 0
  %980 = vmatprep.subr.bf16.mxu0 0
  %981 = vmatpush2.bf16.msra.mxu0 0
  %982 = vmatprep.subr.bf16.mxu0 0
  %983 = vmatpush2.bf16.msra.mxu0 0
  %984 = vmatprep.subr.bf16.mxu0 0
  %985 = vmatpush2.bf16.msra.mxu0 0
  %986 = vmatprep.subr.bf16.mxu0 0
  %987 = vmatpush2.bf16.msra.mxu0 0
  %988 = vmatprep.subr.bf16.mxu0 0
  %989 = vmatpush2.bf16.msra.mxu0 0
  %990 = vmatprep.mubr.bf16.mxu0 0
  %991 = vmatmul.mubr.bf16.gmra.mxu0 %v771
  %v992 = vpop.f32.mrf.mxu0
  %v993 = vadd.f32 0.0, %v992
  %v994 = vpop.f32.mrf.mxu0
  %v995 = vpop.f32.mrf.mxu0
  %v996 = vpop.f32.mrf.mxu0
  %997 = vdwg.mxu0
  %998 = vmatprep.subr.bf16.mxu0 0
  %999 = vmatpush1.bf16.msra.mxu0 0
  %1000 = vmatprep.subr.bf16.mxu0 0
  %1001 = vmatpush1.bf16.msra.mxu0 0
  %1002 = vmatprep.subr.bf16.mxu0 0
  %1003 = vmatpush1.bf16.msra.mxu0 0
  %1004 = vmatprep.subr.bf16.mxu0 0
  %1005 = vmatpush1.bf16.msra.mxu0 0
  %1006 = vmatprep.subr.bf16.mxu0 0
  %1007 = vmatpush1.bf16.msra.mxu0 %v728
  %1008 = vmatprep.subr.bf16.mxu0 0
  %1009 = vmatpush1.bf16.msra.mxu0 %v727
  %1010 = vmatprep.subr.bf16.mxu0 0
  %1011 = vmatpush1.bf16.msra.mxu0 %v726
  %1012 = vmatprep.subr.bf16.mxu0 0
  %1013 = vmatpush1.bf16.msra.mxu0 %v725
  %1014 = vmatprep.subr.bf16.mxu0 0
  %1015 = vmatpush2.bf16.msra.mxu0 0
  %1016 = vmatprep.subr.bf16.mxu0 0
  %1017 = vmatpush2.bf16.msra.mxu0 0
  %1018 = vmatprep.subr.bf16.mxu0 0
  %1019 = vmatpush2.bf16.msra.mxu0 0
  %1020 = vmatprep.subr.bf16.mxu0 0
  %1021 = vmatpush2.bf16.msra.mxu0 0
  %1022 = vmatprep.subr.bf16.mxu0 0
  %1023 = vmatpush2.bf16.msra.mxu0 0
  %1024 = vmatprep.subr.bf16.mxu0 0
  %1025 = vmatpush2.bf16.msra.mxu0 0
  %1026 = vmatprep.subr.bf16.mxu0 0
  %1027 = vmatpush2.bf16.msra.mxu0 0
  %1028 = vmatprep.subr.bf16.mxu0 0
  %1029 = vmatpush2.bf16.msra.mxu0 0
  %1030 = vmatprep.mubr.bf16.mxu0 0
  %1031 = vmatmul.mubr.bf16.gmra.mxu0 %v814
  %v1032 = vpop.f32.mrf.mxu0
  %v1033 = vadd.f32 %v993, %v1032
  %v1034 = vpop.f32.mrf.mxu0
  %v1035 = vpop.f32.mrf.mxu0
  %v1036 = vpop.f32.mrf.mxu0
  %1037 = vdwg.mxu0
  %v1038 = vlaneseq
  %v1039 = vshrl.u32 %v1038, 7
  %v1040 = vsub.s32 2, %v1039
  %v1041 = vrot.slane %v769, %v1040
  %v1042 = vadd.f32 %v1033, %v1041
  %v1043 = vtanh.pop %v1042
  %1044 = vmatprep.subr.bf16.mxu0 0
  %1045 = vmatpush1.bf16.msra.mxu0 0
  %1046 = vmatprep.subr.bf16.mxu0 0
  %1047 = vmatpush1.bf16.msra.mxu0 0
  %1048 = vmatprep.subr.bf16.mxu0 0
  %1049 = vmatpush1.bf16.msra.mxu0 0
  %1050 = vmatprep.subr.bf16.mxu0 0
  %1051 = vmatpush1.bf16.msra.mxu0 0
  %1052 = vmatprep.subr.bf16.mxu0 0
  %1053 = vmatpush1.bf16.msra.mxu0 0
  %1054 = vmatprep.subr.bf16.mxu0 0
  %1055 = vmatpush1.bf16.msra.mxu0 0
  %1056 = vmatprep.subr.bf16.mxu0 0
  %1057 = vmatpush1.bf16.msra.mxu0 %v768
  %1058 = vmatprep.subr.bf16.mxu0 0
  %1059 = vmatpush1.bf16.msra.mxu0 %v767
  %1060 = vmatprep.subr.bf16.mxu0 0
  %1061 = vmatpush2.bf16.msra.mxu0 0
  %1062 = vmatprep.subr.bf16.mxu0 0
  %1063 = vmatpush2.bf16.msra.mxu0 0
  %1064 = vmatprep.subr.bf16.mxu0 0
  %1065 = vmatpush2.bf16.msra.mxu0 0
  %1066 = vmatprep.subr.bf16.mxu0 0
  %1067 = vmatpush2.bf16.msra.mxu0 0
  %1068 = vmatprep.subr.bf16.mxu0 0
  %1069 = vmatpush2.bf16.msra.mxu0 0
  %1070 = vmatprep.subr.bf16.mxu0 0
  %1071 = vmatpush2.bf16.msra.mxu0 0
  %1072 = vmatprep.subr.bf16.mxu0 0
  %1073 = vmatpush2.bf16.msra.mxu0 0
  %1074 = vmatprep.subr.bf16.mxu0 0
  %1075 = vmatpush2.bf16.msra.mxu0 0
  %1076 = vmatprep.mubr.bf16.mxu0 0
  %1077 = vmatmul.mubr.bf16.gmra.mxu0 %v771
  %v1078 = vpop.f32.mrf.mxu0
  %v1079 = vadd.f32 0.0, %v1078
  %v1080 = vpop.f32.mrf.mxu0
  %v1081 = vpop.f32.mrf.mxu0
  %v1082 = vpop.f32.mrf.mxu0
  %1083 = vdwg.mxu0
  %1084 = vmatprep.subr.bf16.mxu0 0
  %1085 = vmatpush1.bf16.msra.mxu0 0
  %1086 = vmatprep.subr.bf16.mxu0 0
  %1087 = vmatpush1.bf16.msra.mxu0 0
  %1088 = vmatprep.subr.bf16.mxu0 0
  %1089 = vmatpush1.bf16.msra.mxu0 0
  %1090 = vmatprep.subr.bf16.mxu0 0
  %1091 = vmatpush1.bf16.msra.mxu0 0
  %1092 = vmatprep.subr.bf16.mxu0 0
  %1093 = vmatpush1.bf16.msra.mxu0 %v741
  %1094 = vmatprep.subr.bf16.mxu0 0
  %1095 = vmatpush1.bf16.msra.mxu0 %v740
  %1096 = vmatprep.subr.bf16.mxu0 0
  %1097 = vmatpush1.bf16.msra.mxu0 %v739
  %1098 = vmatprep.subr.bf16.mxu0 0
  %1099 = vmatpush1.bf16.msra.mxu0 %v738
  %1100 = vmatprep.subr.bf16.mxu0 0
  %1101 = vmatpush2.bf16.msra.mxu0 0
  %1102 = vmatprep.subr.bf16.mxu0 0
  %1103 = vmatpush2.bf16.msra.mxu0 0
  %1104 = vmatprep.subr.bf16.mxu0 0
  %1105 = vmatpush2.bf16.msra.mxu0 0
  %1106 = vmatprep.subr.bf16.mxu0 0
  %1107 = vmatpush2.bf16.msra.mxu0 0
  %1108 = vmatprep.subr.bf16.mxu0 0
  %1109 = vmatpush2.bf16.msra.mxu0 0
  %1110 = vmatprep.subr.bf16.mxu0 0
  %1111 = vmatpush2.bf16.msra.mxu0 0
  %1112 = vmatprep.subr.bf16.mxu0 0
  %1113 = vmatpush2.bf16.msra.mxu0 0
  %1114 = vmatprep.subr.bf16.mxu0 0
  %1115 = vmatpush2.bf16.msra.mxu0 0
  %1116 = vmatprep.mubr.bf16.mxu0 0
  %1117 = vmatmul.mubr.bf16.gmra.mxu0 %v814
  %v1118 = vpop.f32.mrf.mxu0
  %v1119 = vadd.f32 %v1079, %v1118
  %v1120 = vpop.f32.mrf.mxu0
  %v1121 = vpop.f32.mrf.mxu0
  %v1122 = vpop.f32.mrf.mxu0
  %1123 = vdwg.mxu0
  %v1124 = vlaneseq
  %v1125 = vshrl.u32 %v1124, 7
  %v1126 = vsub.s32 3, %v1125
  %v1127 = vrot.slane %v769, %v1126
  %v1128 = vadd.f32 %v1119, %v1127
  %v1129 = vxor.u32 %v1128, 2147483648
  %v1130 = vmul.f32 %v1129, 1.442695
  %v1131 = vpow.pop %v1130
  %v1132 = vadd.f32 %v1131, 1.0
  %v1133 = vrcp.pop %v1132
  %v1134 = vmul.f32 1.0, %v1133
  %v1135 = vmul.f32 %v957, 0.0
  %v1136 = vmul.f32 %v866, %v1043
  %v1137 = vadd.f32 %v1135, %v1136
  %v1138 = vtanh.pop %v1137
  %v1139 = vmul.f32 %v1134, %v1138
  %v1140 = vpack.c.bf16 %v1139, %v1139
  %v1142 = vsel %vm142, %v1140, 0
  %v1145 = vsel %vm142, %v690, 0
  %1147 = vmatprep.subr.bf16.mxu0 0
  %1148 = vmatpush1.bf16.xpose.msra.mxu0 0
  %1149 = vmatprep.subr.bf16.mxu0 0
  %1150 = vmatpush1.bf16.xpose.msra.mxu0 0
  %1151 = vmatprep.subr.bf16.mxu0 0
  %1152 = vmatpush1.bf16.xpose.msra.mxu0 0
  %1153 = vmatprep.subr.bf16.mxu0 0
  %1154 = vmatpush1.bf16.xpose.msra.mxu0 0
  %1155 = vmatprep.subr.bf16.mxu0 0
  %1156 = vmatpush1.bf16.xpose.msra.mxu0 0
  %1157 = vmatprep.subr.bf16.mxu0 0
  %1158 = vmatpush1.bf16.xpose.msra.mxu0 0
  %1159 = vmatprep.subr.bf16.mxu0 0
  %1160 = vmatpush1.bf16.xpose.msra.mxu0 0
  %1161 = vmatprep.subr.bf16.mxu0 0
  %1162 = vmatpush1.bf16.xpose.msra.mxu0 %v1145
  %1163 = vmatprep.subr.bf16.mxu0 0
  %1164 = vmatpush2.bf16.xpose.msra.mxu0 0
  %1165 = vmatprep.subr.bf16.mxu0 0
  %1166 = vmatpush2.bf16.xpose.msra.mxu0 0
  %1167 = vmatprep.subr.bf16.mxu0 0
  %1168 = vmatpush2.bf16.xpose.msra.mxu0 0
  %1169 = vmatprep.subr.bf16.mxu0 0
  %1170 = vmatpush2.bf16.xpose.msra.mxu0 0
  %1171 = vmatprep.subr.bf16.mxu0 0
  %1172 = vmatpush2.bf16.xpose.msra.mxu0 0
  %1173 = vmatprep.subr.bf16.mxu0 0
  %1174 = vmatpush2.bf16.xpose.msra.mxu0 0
  %1175 = vmatprep.subr.bf16.mxu0 0
  %1176 = vmatpush2.bf16.xpose.msra.mxu0 0
  %1177 = vmatprep.subr.bf16.mxu0 0
  %1178 = vmatpush2.bf16.xpose.msra.mxu0 0
  %1179 = vmatprep.mubr.bf16.mxu0 0
  %1180 = vmatmul.mubr.bf16.gmra.mxu0 %v1142
  %v1181 = vpop.f32.mrf.mxu0
  %v1182 = vadd.f32 0.0, %v1181
  %v1183 = vpop.f32.mrf.mxu0
  %v1184 = vpop.f32.mrf.mxu0
  %v1185 = vpop.f32.mrf.mxu0
  %1186 = vdwg.mxu0
  %v1187 = vsel %vm82, %v1182, -1e+09
  %vm1188 = vcmask 123904
  %v1189 = vsel %vm1188, %v1187, -inf
  %1190 = vmax.xlane.f32.xlu0 %v1189
  %v1191 = vpop.xlane.xlu0 %1190
  %v1192 = vsub.f32 %v1187, %v1191
  %v1193 = vmul.f32 %v1192, 1.442695
  %v1194 = vpow.pop %v1193
  %v1195 = vsel %vm1188, %v1194, 0.0
  %1196 = vadd.xlane.f32.xlu0 %v1195
  %v1197 = vpop.xlane.xlu0 %1196
  %v1198 = vrcp.pop %v1197
  %v1199 = vmul.f32 %v1194, %v1198
  %v1200 = vpack.c.bf16 %v1199, %v1199
  %v1202 = vsel %vm89, %v1200, 0
  %1204 = vmatprep.subr.bf16.mxu0 0
  %1205 = vmatpush1.bf16.msra.mxu0 0
  %1206 = vmatprep.subr.bf16.mxu0 0
  %1207 = vmatpush1.bf16.msra.mxu0 0
  %1208 = vmatprep.subr.bf16.mxu0 0
  %1209 = vmatpush1.bf16.msra.mxu0 0
  %1210 = vmatprep.subr.bf16.mxu0 0
  %1211 = vmatpush1.bf16.msra.mxu0 0
  %1212 = vmatprep.subr.bf16.mxu0 0
  %1213 = vmatpush1.bf16.msra.mxu0 0
  %1214 = vmatprep.subr.bf16.mxu0 0
  %1215 = vmatpush1.bf16.msra.mxu0 0
  %1216 = vmatprep.subr.bf16.mxu0 0
  %1217 = vmatpush1.bf16.msra.mxu0 0
  %1218 = vmatprep.subr.bf16.mxu0 0
  %1219 = vmatpush1.bf16.msra.mxu0 %v690
  %1220 = vmatprep.subr.bf16.mxu0 0
  %1221 = vmatpush2.bf16.msra.mxu0 0
  %1222 = vmatprep.subr.bf16.mxu0 0
  %1223 = vmatpush2.bf16.msra.mxu0 0
  %1224 = vmatprep.subr.bf16.mxu0 0
  %1225 = vmatpush2.bf16.msra.mxu0 0
  %1226 = vmatprep.subr.bf16.mxu0 0
  %1227 = vmatpush2.bf16.msra.mxu0 0
  %1228 = vmatprep.subr.bf16.mxu0 0
  %1229 = vmatpush2.bf16.msra.mxu0 0
  %1230 = vmatprep.subr.bf16.mxu0 0
  %1231 = vmatpush2.bf16.msra.mxu0 0
  %1232 = vmatprep.subr.bf16.mxu0 0
  %1233 = vmatpush2.bf16.msra.mxu0 0
  %1234 = vmatprep.subr.bf16.mxu0 0
  %1235 = vmatpush2.bf16.msra.mxu0 0
  %1236 = vmatprep.mubr.bf16.mxu0 0
  %1237 = vmatmul.mubr.bf16.gmra.mxu0 %v1202
  %v1238 = vpop.f32.mrf.mxu0
  %v1239 = vadd.f32 0.0, %v1238
  %v1240 = vpop.f32.mrf.mxu0
  %v1241 = vpop.f32.mrf.mxu0
  %v1242 = vpop.f32.mrf.mxu0
  %1243 = vdwg.mxu0
  %1245 = vrot.lane.b32.xlu0 %v1239, 32
  %v1246 = vpop.permute.xlu0 %1245
  %v1248 = vsel %vm142, %v1139, %v1246
  %v1249 = vpack.c.bf16 %v1248, %v1248
  %1250 = vmatprep.subr.bf16.mxu0 0
  %1251 = vmatpush1.bf16.msra.mxu0 0
  %1252 = vmatprep.subr.bf16.mxu0 0
  %1253 = vmatpush1.bf16.msra.mxu0 0
  %1254 = vmatprep.subr.bf16.mxu0 0
  %1255 = vmatpush1.bf16.msra.mxu0 0
  %1256 = vmatprep.subr.bf16.mxu0 0
  %1257 = vmatpush1.bf16.msra.mxu0 0
  %1258 = vmatprep.subr.bf16.mxu0 0
  %1259 = vmatpush1.bf16.msra.mxu0 0
  %1260 = vmatprep.subr.bf16.mxu0 0
  %1261 = vmatpush1.bf16.msra.mxu0 0
  %1262 = vmatprep.subr.bf16.mxu0 0
  %1263 = vmatpush1.bf16.msra.mxu0 %v747
  %1264 = vmatprep.subr.bf16.mxu0 0
  %1265 = vmatpush1.bf16.msra.mxu0 %v746
  %1266 = vmatprep.subr.bf16.mxu0 0
  %1267 = vmatpush2.bf16.msra.mxu0 0
  %1268 = vmatprep.subr.bf16.mxu0 0
  %1269 = vmatpush2.bf16.msra.mxu0 0
  %1270 = vmatprep.subr.bf16.mxu0 0
  %1271 = vmatpush2.bf16.msra.mxu0 0
  %1272 = vmatprep.subr.bf16.mxu0 0
  %1273 = vmatpush2.bf16.msra.mxu0 0
  %1274 = vmatprep.subr.bf16.mxu0 0
  %1275 = vmatpush2.bf16.msra.mxu0 0
  %1276 = vmatprep.subr.bf16.mxu0 0
  %1277 = vmatpush2.bf16.msra.mxu0 0
  %1278 = vmatprep.subr.bf16.mxu0 0
  %1279 = vmatpush2.bf16.msra.mxu0 0
  %1280 = vmatprep.subr.bf16.mxu0 0
  %1281 = vmatpush2.bf16.msra.mxu0 0
  %1282 = vmatprep.mubr.bf16.mxu0 0
  %1283 = vmatmul.mubr.bf16.gmra.mxu0 %v1142
  %v1284 = vpop.f32.mrf.mxu0
  %v1285 = vadd.f32 0.0, %v1284
  %v1286 = vpop.f32.mrf.mxu0
  %v1287 = vpop.f32.mrf.mxu0
  %v1288 = vpop.f32.mrf.mxu0
  %1289 = vdwg.mxu0
  %v1291 = vsel %vm813, %v1249, 0
  %1293 = vmatprep.subr.bf16.mxu0 0
  %1294 = vmatpush1.bf16.msra.mxu0 0
  %1295 = vmatprep.subr.bf16.mxu0 0
  %1296 = vmatpush1.bf16.msra.mxu0 0
  %1297 = vmatprep.subr.bf16.mxu0 0
  %1298 = vmatpush1.bf16.msra.mxu0 0
  %1299 = vmatprep.subr.bf16.mxu0 0
  %1300 = vmatpush1.bf16.msra.mxu0 0
  %1301 = vmatprep.subr.bf16.mxu0 0
  %1302 = vmatpush1.bf16.msra.mxu0 %v702
  %1303 = vmatprep.subr.bf16.mxu0 0
  %1304 = vmatpush1.bf16.msra.mxu0 %v701
  %1305 = vmatprep.subr.bf16.mxu0 0
  %1306 = vmatpush1.bf16.msra.mxu0 %v700
  %1307 = vmatprep.subr.bf16.mxu0 0
  %1308 = vmatpush1.bf16.msra.mxu0 %v699
  %1309 = vmatprep.subr.bf16.mxu0 0
  %1310 = vmatpush2.bf16.msra.mxu0 0
  %1311 = vmatprep.subr.bf16.mxu0 0
  %1312 = vmatpush2.bf16.msra.mxu0 0
  %1313 = vmatprep.subr.bf16.mxu0 0
  %1314 = vmatpush2.bf16.msra.mxu0 0
  %1315 = vmatprep.subr.bf16.mxu0 0
  %1316 = vmatpush2.bf16.msra.mxu0 0
  %1317 = vmatprep.subr.bf16.mxu0 0
  %1318 = vmatpush2.bf16.msra.mxu0 0
  %1319 = vmatprep.subr.bf16.mxu0 0
  %1320 = vmatpush2.bf16.msra.mxu0 0
  %1321 = vmatprep.subr.bf16.mxu0 0
  %1322 = vmatpush2.bf16.msra.mxu0 0
  %1323 = vmatprep.subr.bf16.mxu0 0
  %1324 = vmatpush2.bf16.msra.mxu0 0
  %1325 = vmatprep.mubr.bf16.mxu0 0
  %1326 = vmatmul.mubr.bf16.gmra.mxu0 %v1291
  %v1327 = vpop.f32.mrf.mxu0
  %v1328 = vadd.f32 %v1285, %v1327
  %v1329 = vpop.f32.mrf.mxu0
  %v1330 = vpop.f32.mrf.mxu0
  %v1331 = vpop.f32.mrf.mxu0
  %1332 = vdwg.mxu0
  %v1333 = vadd.f32 %v1328, %v859
  %v1334 = vxor.u32 %v1333, 2147483648
  %v1335 = vmul.f32 %v1334, 1.442695
  %v1336 = vpow.pop %v1335
  %v1337 = vadd.f32 %v1336, 1.0
  %v1338 = vrcp.pop %v1337
  %v1339 = vmul.f32 1.0, %v1338
  %1340 = vmatprep.subr.bf16.mxu0 0
  %1341 = vmatpush1.bf16.msra.mxu0 0
  %1342 = vmatprep.subr.bf16.mxu0 0
  %1343 = vmatpush1.bf16.msra.mxu0 0
  %1344 = vmatprep.subr.bf16.mxu0 0
  %1345 = vmatpush1.bf16.msra.mxu0 0
  %1346 = vmatprep.subr.bf16.mxu0 0
  %1347 = vmatpush1.bf16.msra.mxu0 0
  %1348 = vmatprep.subr.bf16.mxu0 0
  %1349 = vmatpush1.bf16.msra.mxu0 0
  %1350 = vmatprep.subr.bf16.mxu0 0
  %1351 = vmatpush1.bf16.msra.mxu0 0
  %1352 = vmatprep.subr.bf16.mxu0 0
  %1353 = vmatpush1.bf16.msra.mxu0 %v754
  %1354 = vmatprep.subr.bf16.mxu0 0
  %1355 = vmatpush1.bf16.msra.mxu0 %v753
  %1356 = vmatprep.subr.bf16.mxu0 0
  %1357 = vmatpush2.bf16.msra.mxu0 0
  %1358 = vmatprep.subr.bf16.mxu0 0
  %1359 = vmatpush2.bf16.msra.mxu0 0
  %1360 = vmatprep.subr.bf16.mxu0 0
  %1361 = vmatpush2.bf16.msra.mxu0 0
  %1362 = vmatprep.subr.bf16.mxu0 0
  %1363 = vmatpush2.bf16.msra.mxu0 0
  %1364 = vmatprep.subr.bf16.mxu0 0
  %1365 = vmatpush2.bf16.msra.mxu0 0
  %1366 = vmatprep.subr.bf16.mxu0 0
  %1367 = vmatpush2.bf16.msra.mxu0 0
  %1368 = vmatprep.subr.bf16.mxu0 0
  %1369 = vmatpush2.bf16.msra.mxu0 0
  %1370 = vmatprep.subr.bf16.mxu0 0
  %1371 = vmatpush2.bf16.msra.mxu0 0
  %1372 = vmatprep.mubr.bf16.mxu0 0
  %1373 = vmatmul.mubr.bf16.gmra.mxu0 %v1142
  %v1374 = vpop.f32.mrf.mxu0
  %v1375 = vadd.f32 0.0, %v1374
  %v1376 = vpop.f32.mrf.mxu0
  %v1377 = vpop.f32.mrf.mxu0
  %v1378 = vpop.f32.mrf.mxu0
  %1379 = vdwg.mxu0
  %1380 = vmatprep.subr.bf16.mxu0 0
  %1381 = vmatpush1.bf16.msra.mxu0 0
  %1382 = vmatprep.subr.bf16.mxu0 0
  %1383 = vmatpush1.bf16.msra.mxu0 0
  %1384 = vmatprep.subr.bf16.mxu0 0
  %1385 = vmatpush1.bf16.msra.mxu0 0
  %1386 = vmatprep.subr.bf16.mxu0 0
  %1387 = vmatpush1.bf16.msra.mxu0 0
  %1388 = vmatprep.subr.bf16.mxu0 0
  %1389 = vmatpush1.bf16.msra.mxu0 %v715
  %1390 = vmatprep.subr.bf16.mxu0 0
  %1391 = vmatpush1.bf16.msra.mxu0 %v714
  %1392 = vmatprep.subr.bf16.mxu0 0
  %1393 = vmatpush1.bf16.msra.mxu0 %v713
  %1394 = vmatprep.subr.bf16.mxu0 0
  %1395 = vmatpush1.bf16.msra.mxu0 %v712
  %1396 = vmatprep.subr.bf16.mxu0 0
  %1397 = vmatpush2.bf16.msra.mxu0 0
  %1398 = vmatprep.subr.bf16.mxu0 0
  %1399 = vmatpush2.bf16.msra.mxu0 0
  %1400 = vmatprep.subr.bf16.mxu0 0
  %1401 = vmatpush2.bf16.msra.mxu0 0
  %1402 = vmatprep.subr.bf16.mxu0 0
  %1403 = vmatpush2.bf16.msra.mxu0 0
  %1404 = vmatprep.subr.bf16.mxu0 0
  %1405 = vmatpush2.bf16.msra.mxu0 0
  %1406 = vmatprep.subr.bf16.mxu0 0
  %1407 = vmatpush2.bf16.msra.mxu0 0
  %1408 = vmatprep.subr.bf16.mxu0 0
  %1409 = vmatpush2.bf16.msra.mxu0 0
  %1410 = vmatprep.subr.bf16.mxu0 0
  %1411 = vmatpush2.bf16.msra.mxu0 0
  %1412 = vmatprep.mubr.bf16.mxu0 0
  %1413 = vmatmul.mubr.bf16.gmra.mxu0 %v1291
  %v1414 = vpop.f32.mrf.mxu0
  %v1415 = vadd.f32 %v1375, %v1414
  %v1416 = vpop.f32.mrf.mxu0
  %v1417 = vpop.f32.mrf.mxu0
  %v1418 = vpop.f32.mrf.mxu0
  %1419 = vdwg.mxu0
  %v1420 = vadd.f32 %v1415, %v950
  %v1421 = vxor.u32 %v1420, 2147483648
  %v1422 = vmul.f32 %v1421, 1.442695
  %v1423 = vpow.pop %v1422
  %v1424 = vadd.f32 %v1423, 1.0
  %v1425 = vrcp.pop %v1424
  %v1426 = vmul.f32 1.0, %v1425
  %1427 = vmatprep.subr.bf16.mxu0 0
  %1428 = vmatpush1.bf16.msra.mxu0 0
  %1429 = vmatprep.subr.bf16.mxu0 0
  %1430 = vmatpush1.bf16.msra.mxu0 0
  %1431 = vmatprep.subr.bf16.mxu0 0
  %1432 = vmatpush1.bf16.msra.mxu0 0
  %1433 = vmatprep.subr.bf16.mxu0 0
  %1434 = vmatpush1.bf16.msra.mxu0 0
  %1435 = vmatprep.subr.bf16.mxu0 0
  %1436 = vmatpush1.bf16.msra.mxu0 0
  %1437 = vmatprep.subr.bf16.mxu0 0
  %1438 = vmatpush1.bf16.msra.mxu0 0
  %1439 = vmatprep.subr.bf16.mxu0 0
  %1440 = vmatpush1.bf16.msra.mxu0 %v761
  %1441 = vmatprep.subr.bf16.mxu0 0
  %1442 = vmatpush1.bf16.msra.mxu0 %v760
  %1443 = vmatprep.subr.bf16.mxu0 0
  %1444 = vmatpush2.bf16.msra.mxu0 0
  %1445 = vmatprep.subr.bf16.mxu0 0
  %1446 = vmatpush2.bf16.msra.mxu0 0
  %1447 = vmatprep.subr.bf16.mxu0 0
  %1448 = vmatpush2.bf16.msra.mxu0 0
  %1449 = vmatprep.subr.bf16.mxu0 0
  %1450 = vmatpush2.bf16.msra.mxu0 0
  %1451 = vmatprep.subr.bf16.mxu0 0
  %1452 = vmatpush2.bf16.msra.mxu0 0
  %1453 = vmatprep.subr.bf16.mxu0 0
  %1454 = vmatpush2.bf16.msra.mxu0 0
  %1455 = vmatprep.subr.bf16.mxu0 0
  %1456 = vmatpush2.bf16.msra.mxu0 0
  %1457 = vmatprep.subr.bf16.mxu0 0
  %1458 = vmatpush2.bf16.msra.mxu0 0
  %1459 = vmatprep.mubr.bf16.mxu0 0
  %1460 = vmatmul.mubr.bf16.gmra.mxu0 %v1142
  %v1461 = vpop.f32.mrf.mxu0
  %v1462 = vadd.f32 0.0, %v1461
  %v1463 = vpop.f32.mrf.mxu0
  %v1464 = vpop.f32.mrf.mxu0
  %v1465 = vpop.f32.mrf.mxu0
  %1466 = vdwg.mxu0
  %1467 = vmatprep.subr.bf16.mxu0 0
  %1468 = vmatpush1.bf16.msra.mxu0 0
  %1469 = vmatprep.subr.bf16.mxu0 0
  %1470 = vmatpush1.bf16.msra.mxu0 0
  %1471 = vmatprep.subr.bf16.mxu0 0
  %1472 = vmatpush1.bf16.msra.mxu0 0
  %1473 = vmatprep.subr.bf16.mxu0 0
  %1474 = vmatpush1.bf16.msra.mxu0 0
  %1475 = vmatprep.subr.bf16.mxu0 0
  %1476 = vmatpush1.bf16.msra.mxu0 %v728
  %1477 = vmatprep.subr.bf16.mxu0 0
  %1478 = vmatpush1.bf16.msra.mxu0 %v727
  %1479 = vmatprep.subr.bf16.mxu0 0
  %1480 = vmatpush1.bf16.msra.mxu0 %v726
  %1481 = vmatprep.subr.bf16.mxu0 0
  %1482 = vmatpush1.bf16.msra.mxu0 %v725
  %1483 = vmatprep.subr.bf16.mxu0 0
  %1484 = vmatpush2.bf16.msra.mxu0 0
  %1485 = vmatprep.subr.bf16.mxu0 0
  %1486 = vmatpush2.bf16.msra.mxu0 0
  %1487 = vmatprep.subr.bf16.mxu0 0
  %1488 = vmatpush2.bf16.msra.mxu0 0
  %1489 = vmatprep.subr.bf16.mxu0 0
  %1490 = vmatpush2.bf16.msra.mxu0 0
  %1491 = vmatprep.subr.bf16.mxu0 0
  %1492 = vmatpush2.bf16.msra.mxu0 0
  %1493 = vmatprep.subr.bf16.mxu0 0
  %1494 = vmatpush2.bf16.msra.mxu0 0
  %1495 = vmatprep.subr.bf16.mxu0 0
  %1496 = vmatpush2.bf16.msra.mxu0 0
  %1497 = vmatprep.subr.bf16.mxu0 0
  %1498 = vmatpush2.bf16.msra.mxu0 0
  %1499 = vmatprep.mubr.bf16.mxu0 0
  %1500 = vmatmul.mubr.bf16.gmra.mxu0 %v1291
  %v1501 = vpop.f32.mrf.mxu0
  %v1502 = vadd.f32 %v1462, %v1501
  %v1503 = vpop.f32.mrf.mxu0
  %v1504 = vpop.f32.mrf.mxu0
  %v1505 = vpop.f32.mrf.mxu0
  %1506 = vdwg.mxu0
  %v1507 = vadd.f32 %v1502, %v1041
  %v1508 = vtanh.pop %v1507
  %1509 = vmatprep.subr.bf16.mxu0 0
  %1510 = vmatpush1.bf16.msra.mxu0 0
  %1511 = vmatprep.subr.bf16.mxu0 0
  %1512 = vmatpush1.bf16.msra.mxu0 0
  %1513 = vmatprep.subr.bf16.mxu0 0
  %1514 = vmatpush1.bf16.msra.mxu0 0
  %1515 = vmatprep.subr.bf16.mxu0 0
  %1516 = vmatpush1.bf16.msra.mxu0 0
  %1517 = vmatprep.subr.bf16.mxu0 0
  %1518 = vmatpush1.bf16.msra.mxu0 0
  %1519 = vmatprep.subr.bf16.mxu0 0
  %1520 = vmatpush1.bf16.msra.mxu0 0
  %1521 = vmatprep.subr.bf16.mxu0 0
  %1522 = vmatpush1.bf16.msra.mxu0 %v768
  %1523 = vmatprep.subr.bf16.mxu0 0
  %1524 = vmatpush1.bf16.msra.mxu0 %v767
  %1525 = vmatprep.subr.bf16.mxu0 0
  %1526 = vmatpush2.bf16.msra.mxu0 0
  %1527 = vmatprep.subr.bf16.mxu0 0
  %1528 = vmatpush2.bf16.msra.mxu0 0
  %1529 = vmatprep.subr.bf16.mxu0 0
  %1530 = vmatpush2.bf16.msra.mxu0 0
  %1531 = vmatprep.subr.bf16.mxu0 0
  %1532 = vmatpush2.bf16.msra.mxu0 0
  %1533 = vmatprep.subr.bf16.mxu0 0
  %1534 = vmatpush2.bf16.msra.mxu0 0
  %1535 = vmatprep.subr.bf16.mxu0 0
  %1536 = vmatpush2.bf16.msra.mxu0 0
  %1537 = vmatprep.subr.bf16.mxu0 0
  %1538 = vmatpush2.bf16.msra.mxu0 0
  %1539 = vmatprep.subr.bf16.mxu0 0
  %1540 = vmatpush2.bf16.msra.mxu0 0
  %1541 = vmatprep.mubr.bf16.mxu0 0
  %1542 = vmatmul.mubr.bf16.gmra.mxu0 %v1142
  %v1543 = vpop.f32.mrf.mxu0
  %v1544 = vadd.f32 0.0, %v1543
  %v1545 = vpop.f32.mrf.mxu0
  %v1546 = vpop.f32.mrf.mxu0
  %v1547 = vpop.f32.mrf.mxu0
  %1548 = vdwg.mxu0
  %1549 = vmatprep.subr.bf16.mxu0 0
  %1550 = vmatpush1.bf16.msra.mxu0 0
  %1551 = vmatprep.subr.bf16.mxu0 0
  %1552 = vmatpush1.bf16.msra.mxu0 0
  %1553 = vmatprep.subr.bf16.mxu0 0
  %1554 = vmatpush1.bf16.msra.mxu0 0
  %1555 = vmatprep.subr.bf16.mxu0 0
  %1556 = vmatpush1.bf16.msra.mxu0 0
  %1557 = vmatprep.subr.bf16.mxu0 0
  %1558 = vmatpush1.bf16.msra.mxu0 %v741
  %1559 = vmatprep.subr.bf16.mxu0 0
  %1560 = vmatpush1.bf16.msra.mxu0 %v740
  %1561 = vmatprep.subr.bf16.mxu0 0
  %1562 = vmatpush1.bf16.msra.mxu0 %v739
  %1563 = vmatprep.subr.bf16.mxu0 0
  %1564 = vmatpush1.bf16.msra.mxu0 %v738
  %1565 = vmatprep.subr.bf16.mxu0 0
  %1566 = vmatpush2.bf16.msra.mxu0 0
  %1567 = vmatprep.subr.bf16.mxu0 0
  %1568 = vmatpush2.bf16.msra.mxu0 0
  %1569 = vmatprep.subr.bf16.mxu0 0
  %1570 = vmatpush2.bf16.msra.mxu0 0
  %1571 = vmatprep.subr.bf16.mxu0 0
  %1572 = vmatpush2.bf16.msra.mxu0 0
  %1573 = vmatprep.subr.bf16.mxu0 0
  %1574 = vmatpush2.bf16.msra.mxu0 0
  %1575 = vmatprep.subr.bf16.mxu0 0
  %1576 = vmatpush2.bf16.msra.mxu0 0
  %1577 = vmatprep.subr.bf16.mxu0 0
  %1578 = vmatpush2.bf16.msra.mxu0 0
  %1579 = vmatprep.subr.bf16.mxu0 0
  %1580 = vmatpush2.bf16.msra.mxu0 0
  %1581 = vmatprep.mubr.bf16.mxu0 0
  %1582 = vmatmul.mubr.bf16.gmra.mxu0 %v1291
  %v1583 = vpop.f32.mrf.mxu0
  %v1584 = vadd.f32 %v1544, %v1583
  %v1585 = vpop.f32.mrf.mxu0
  %v1586 = vpop.f32.mrf.mxu0
  %v1587 = vpop.f32.mrf.mxu0
  %1588 = vdwg.mxu0
  %v1589 = vadd.f32 %v1584, %v1127
  %v1590 = vxor.u32 %v1589, 2147483648
  %v1591 = vmul.f32 %v1590, 1.442695
  %v1592 = vpow.pop %v1591
  %v1593 = vadd.f32 %v1592, 1.0
  %v1594 = vrcp.pop %v1593
  %v1595 = vmul.f32 1.0, %v1594
  %v1596 = vmul.f32 %v1426, %v1137
  %v1597 = vmul.f32 %v1339, %v1508
  %v1598 = vadd.f32 %v1596, %v1597
  %v1599 = vtanh.pop %v1598
  %v1600 = vmul.f32 %v1595, %v1599
  %v1601 = vpack.c.bf16 %v1600, %v1600
  %v1603 = vsel %vm142, %v1601, 0
  %1605 = vmatprep.subr.bf16.mxu0 0
  %1606 = vmatpush1.bf16.xpose.msra.mxu0 0
  %1607 = vmatprep.subr.bf16.mxu0 0
  %1608 = vmatpush1.bf16.xpose.msra.mxu0 0
  %1609 = vmatprep.subr.bf16.mxu0 0
  %1610 = vmatpush1.bf16.xpose.msra.mxu0 0
  %1611 = vmatprep.subr.bf16.mxu0 0
  %1612 = vmatpush1.bf16.xpose.msra.mxu0 0
  %1613 = vmatprep.subr.bf16.mxu0 0
  %1614 = vmatpush1.bf16.xpose.msra.mxu0 0
  %1615 = vmatprep.subr.bf16.mxu0 0
  %1616 = vmatpush1.bf16.xpose.msra.mxu0 0
  %1617 = vmatprep.subr.bf16.mxu0 0
  %1618 = vmatpush1.bf16.xpose.msra.mxu0 0
  %1619 = vmatprep.subr.bf16.mxu0 0
  %1620 = vmatpush1.bf16.xpose.msra.mxu0 %v1145
  %1621 = vmatprep.subr.bf16.mxu0 0
  %1622 = vmatpush2.bf16.xpose.msra.mxu0 0
  %1623 = vmatprep.subr.bf16.mxu0 0
  %1624 = vmatpush2.bf16.xpose.msra.mxu0 0
  %1625 = vmatprep.subr.bf16.mxu0 0
  %1626 = vmatpush2.bf16.xpose.msra.mxu0 0
  %1627 = vmatprep.subr.bf16.mxu0 0
  %1628 = vmatpush2.bf16.xpose.msra.mxu0 0
  %1629 = vmatprep.subr.bf16.mxu0 0
  %1630 = vmatpush2.bf16.xpose.msra.mxu0 0
  %1631 = vmatprep.subr.bf16.mxu0 0
  %1632 = vmatpush2.bf16.xpose.msra.mxu0 0
  %1633 = vmatprep.subr.bf16.mxu0 0
  %1634 = vmatpush2.bf16.xpose.msra.mxu0 0
  %1635 = vmatprep.subr.bf16.mxu0 0
  %1636 = vmatpush2.bf16.xpose.msra.mxu0 0
  %1637 = vmatprep.mubr.bf16.mxu0 0
  %1638 = vmatmul.mubr.bf16.gmra.mxu0 %v1603
  %v1639 = vpop.f32.mrf.mxu0
  %v1640 = vadd.f32 0.0, %v1639
  %v1641 = vpop.f32.mrf.mxu0
  %v1642 = vpop.f32.mrf.mxu0
  %v1643 = vpop.f32.mrf.mxu0
  %1644 = vdwg.mxu0
  %v1645 = vsel %vm82, %v1640, -1e+09
  %v1646 = vsel %vm1188, %v1645, -inf
  %1647 = vmax.xlane.f32.xlu0 %v1646
  %v1648 = vpop.xlane.xlu0 %1647
  %v1649 = vsub.f32 %v1645, %v1648
  %v1650 = vmul.f32 %v1649, 1.442695
  %v1651 = vpow.pop %v1650
  %v1652 = vsel %vm1188, %v1651, 0.0
  %1653 = vadd.xlane.f32.xlu0 %v1652
  %v1654 = vpop.xlane.xlu0 %1653
  %v1655 = vrcp.pop %v1654
  %v1656 = vmul.f32 %v1651, %v1655
  %v1657 = vpack.c.bf16 %v1656, %v1656
  %v1659 = vsel %vm89, %v1657, 0
  %1661 = vmatprep.subr.bf16.mxu0 0
  %1662 = vmatpush1.bf16.msra.mxu0 0
  %1663 = vmatprep.subr.bf16.mxu0 0
  %1664 = vmatpush1.bf16.msra.mxu0 0
  %1665 = vmatprep.subr.bf16.mxu0 0
  %1666 = vmatpush1.bf16.msra.mxu0 0
  %1667 = vmatprep.subr.bf16.mxu0 0
  %1668 = vmatpush1.bf16.msra.mxu0 0
  %1669 = vmatprep.subr.bf16.mxu0 0
  %1670 = vmatpush1.bf16.msra.mxu0 0
  %1671 = vmatprep.subr.bf16.mxu0 0
  %1672 = vmatpush1.bf16.msra.mxu0 0
  %1673 = vmatprep.subr.bf16.mxu0 0
  %1674 = vmatpush1.bf16.msra.mxu0 0
  %1675 = vmatprep.subr.bf16.mxu0 0
  %1676 = vmatpush1.bf16.msra.mxu0 %v690
  %1677 = vmatprep.subr.bf16.mxu0 0
  %1678 = vmatpush2.bf16.msra.mxu0 0
  %1679 = vmatprep.subr.bf16.mxu0 0
  %1680 = vmatpush2.bf16.msra.mxu0 0
  %1681 = vmatprep.subr.bf16.mxu0 0
  %1682 = vmatpush2.bf16.msra.mxu0 0
  %1683 = vmatprep.subr.bf16.mxu0 0
  %1684 = vmatpush2.bf16.msra.mxu0 0
  %1685 = vmatprep.subr.bf16.mxu0 0
  %1686 = vmatpush2.bf16.msra.mxu0 0
  %1687 = vmatprep.subr.bf16.mxu0 0
  %1688 = vmatpush2.bf16.msra.mxu0 0
  %1689 = vmatprep.subr.bf16.mxu0 0
  %1690 = vmatpush2.bf16.msra.mxu0 0
  %1691 = vmatprep.subr.bf16.mxu0 0
  %1692 = vmatpush2.bf16.msra.mxu0 0
  %1693 = vmatprep.mubr.bf16.mxu0 0
  %1694 = vmatmul.mubr.bf16.gmra.mxu0 %v1659
  %v1695 = vpop.f32.mrf.mxu0
  %v1696 = vadd.f32 0.0, %v1695
  %v1697 = vpop.f32.mrf.mxu0
  %v1698 = vpop.f32.mrf.mxu0
  %v1699 = vpop.f32.mrf.mxu0
  %1700 = vdwg.mxu0
  %1702 = vrot.lane.b32.xlu0 %v1696, 32
  %v1703 = vpop.permute.xlu0 %1702
  %v1705 = vsel %vm142, %v1600, %v1703
  %v1706 = vpack.c.bf16 %v1705, %v1705
  %1707 = vmatprep.subr.bf16.mxu0 0
  %1708 = vmatpush1.bf16.msra.mxu0 0
  %1709 = vmatprep.subr.bf16.mxu0 0
  %1710 = vmatpush1.bf16.msra.mxu0 0
  %1711 = vmatprep.subr.bf16.mxu0 0
  %1712 = vmatpush1.bf16.msra.mxu0 0
  %1713 = vmatprep.subr.bf16.mxu0 0
  %1714 = vmatpush1.bf16.msra.mxu0 0
  %1715 = vmatprep.subr.bf16.mxu0 0
  %1716 = vmatpush1.bf16.msra.mxu0 0
  %1717 = vmatprep.subr.bf16.mxu0 0
  %1718 = vmatpush1.bf16.msra.mxu0 0
  %1719 = vmatprep.subr.bf16.mxu0 0
  %1720 = vmatpush1.bf16.msra.mxu0 %v747
  %1721 = vmatprep.subr.bf16.mxu0 0
  %1722 = vmatpush1.bf16.msra.mxu0 %v746
  %1723 = vmatprep.subr.bf16.mxu0 0
  %1724 = vmatpush2.bf16.msra.mxu0 0
  %1725 = vmatprep.subr.bf16.mxu0 0
  %1726 = vmatpush2.bf16.msra.mxu0 0
  %1727 = vmatprep.subr.bf16.mxu0 0
  %1728 = vmatpush2.bf16.msra.mxu0 0
  %1729 = vmatprep.subr.bf16.mxu0 0
  %1730 = vmatpush2.bf16.msra.mxu0 0
  %1731 = vmatprep.subr.bf16.mxu0 0
  %1732 = vmatpush2.bf16.msra.mxu0 0
  %1733 = vmatprep.subr.bf16.mxu0 0
  %1734 = vmatpush2.bf16.msra.mxu0 0
  %1735 = vmatprep.subr.bf16.mxu0 0
  %1736 = vmatpush2.bf16.msra.mxu0 0
  %1737 = vmatprep.subr.bf16.mxu0 0
  %1738 = vmatpush2.bf16.msra.mxu0 0
  %1739 = vmatprep.mubr.bf16.mxu0 0
  %1740 = vmatmul.mubr.bf16.gmra.mxu0 %v1603
  %v1741 = vpop.f32.mrf.mxu0
  %v1742 = vadd.f32 0.0, %v1741
  %v1743 = vpop.f32.mrf.mxu0
  %v1744 = vpop.f32.mrf.mxu0
  %v1745 = vpop.f32.mrf.mxu0
  %1746 = vdwg.mxu0
  %v1748 = vsel %vm813, %v1706, 0
  %1750 = vmatprep.subr.bf16.mxu0 0
  %1751 = vmatpush1.bf16.msra.mxu0 0
  %1752 = vmatprep.subr.bf16.mxu0 0
  %1753 = vmatpush1.bf16.msra.mxu0 0
  %1754 = vmatprep.subr.bf16.mxu0 0
  %1755 = vmatpush1.bf16.msra.mxu0 0
  %1756 = vmatprep.subr.bf16.mxu0 0
  %1757 = vmatpush1.bf16.msra.mxu0 0
  %1758 = vmatprep.subr.bf16.mxu0 0
  %1759 = vmatpush1.bf16.msra.mxu0 %v702
  %1760 = vmatprep.subr.bf16.mxu0 0
  %1761 = vmatpush1.bf16.msra.mxu0 %v701
  %1762 = vmatprep.subr.bf16.mxu0 0
  %1763 = vmatpush1.bf16.msra.mxu0 %v700
  %1764 = vmatprep.subr.bf16.mxu0 0
  %1765 = vmatpush1.bf16.msra.mxu0 %v699
  %1766 = vmatprep.subr.bf16.mxu0 0
  %1767 = vmatpush2.bf16.msra.mxu0 0
  %1768 = vmatprep.subr.bf16.mxu0 0
  %1769 = vmatpush2.bf16.msra.mxu0 0
  %1770 = vmatprep.subr.bf16.mxu0 0
  %1771 = vmatpush2.bf16.msra.mxu0 0
  %1772 = vmatprep.subr.bf16.mxu0 0
  %1773 = vmatpush2.bf16.msra.mxu0 0
  %1774 = vmatprep.subr.bf16.mxu0 0
  %1775 = vmatpush2.bf16.msra.mxu0 0
  %1776 = vmatprep.subr.bf16.mxu0 0
  %1777 = vmatpush2.bf16.msra.mxu0 0
  %1778 = vmatprep.subr.bf16.mxu0 0
  %1779 = vmatpush2.bf16.msra.mxu0 0
  %1780 = vmatprep.subr.bf16.mxu0 0
  %1781 = vmatpush2.bf16.msra.mxu0 0
  %1782 = vmatprep.mubr.bf16.mxu0 0
  %1783 = vmatmul.mubr.bf16.gmra.mxu0 %v1748
  %v1784 = vpop.f32.mrf.mxu0
  %v1785 = vadd.f32 %v1742, %v1784
  %v1786 = vpop.f32.mrf.mxu0
  %v1787 = vpop.f32.mrf.mxu0
  %v1788 = vpop.f32.mrf.mxu0
  %1789 = vdwg.mxu0
  %v1790 = vadd.f32 %v1785, %v859
  %v1791 = vxor.u32 %v1790, 2147483648
  %v1792 = vmul.f32 %v1791, 1.442695
  %v1793 = vpow.pop %v1792
  %v1794 = vadd.f32 %v1793, 1.0
  %v1795 = vrcp.pop %v1794
  %v1796 = vmul.f32 1.0, %v1795
  %1797 = vmatprep.subr.bf16.mxu0 0
  %1798 = vmatpush1.bf16.msra.mxu0 0
  %1799 = vmatprep.subr.bf16.mxu0 0
  %1800 = vmatpush1.bf16.msra.mxu0 0
  %1801 = vmatprep.subr.bf16.mxu0 0
  %1802 = vmatpush1.bf16.msra.mxu0 0
  %1803 = vmatprep.subr.bf16.mxu0 0
  %1804 = vmatpush1.bf16.msra.mxu0 0
  %1805 = vmatprep.subr.bf16.mxu0 0
  %1806 = vmatpush1.bf16.msra.mxu0 0
  %1807 = vmatprep.subr.bf16.mxu0 0
  %1808 = vmatpush1.bf16.msra.mxu0 0
  %1809 = vmatprep.subr.bf16.mxu0 0
  %1810 = vmatpush1.bf16.msra.mxu0 %v754
  %1811 = vmatprep.subr.bf16.mxu0 0
  %1812 = vmatpush1.bf16.msra.mxu0 %v753
  %1813 = vmatprep.subr.bf16.mxu0 0
  %1814 = vmatpush2.bf16.msra.mxu0 0
  %1815 = vmatprep.subr.bf16.mxu0 0
  %1816 = vmatpush2.bf16.msra.mxu0 0
  %1817 = vmatprep.subr.bf16.mxu0 0
  %1818 = vmatpush2.bf16.msra.mxu0 0
  %1819 = vmatprep.subr.bf16.mxu0 0
  %1820 = vmatpush2.bf16.msra.mxu0 0
  %1821 = vmatprep.subr.bf16.mxu0 0
  %1822 = vmatpush2.bf16.msra.mxu0 0
  %1823 = vmatprep.subr.bf16.mxu0 0
  %1824 = vmatpush2.bf16.msra.mxu0 0
  %1825 = vmatprep.subr.bf16.mxu0 0
  %1826 = vmatpush2.bf16.msra.mxu0 0
  %1827 = vmatprep.subr.bf16.mxu0 0
  %1828 = vmatpush2.bf16.msra.mxu0 0
  %1829 = vmatprep.mubr.bf16.mxu0 0
  %1830 = vmatmul.mubr.bf16.gmra.mxu0 %v1603
  %v1831 = vpop.f32.mrf.mxu0
  %v1832 = vadd.f32 0.0, %v1831
  %v1833 = vpop.f32.mrf.mxu0
  %v1834 = vpop.f32.mrf.mxu0
  %v1835 = vpop.f32.mrf.mxu0
  %1836 = vdwg.mxu0
  %1837 = vmatprep.subr.bf16.mxu0 0
  %1838 = vmatpush1.bf16.msra.mxu0 0
  %1839 = vmatprep.subr.bf16.mxu0 0
  %1840 = vmatpush1.bf16.msra.mxu0 0
  %1841 = vmatprep.subr.bf16.mxu0 0
  %1842 = vmatpush1.bf16.msra.mxu0 0
  %1843 = vmatprep.subr.bf16.mxu0 0
  %1844 = vmatpush1.bf16.msra.mxu0 0
  %1845 = vmatprep.subr.bf16.mxu0 0
  %1846 = vmatpush1.bf16.msra.mxu0 %v715
  %1847 = vmatprep.subr.bf16.mxu0 0
  %1848 = vmatpush1.bf16.msra.mxu0 %v714
  %1849 = vmatprep.subr.bf16.mxu0 0
  %1850 = vmatpush1.bf16.msra.mxu0 %v713
  %1851 = vmatprep.subr.bf16.mxu0 0
  %1852 = vmatpush1.bf16.msra.mxu0 %v712
  %1853 = vmatprep.subr.bf16.mxu0 0
  %1854 = vmatpush2.bf16.msra.mxu0 0
  %1855 = vmatprep.subr.bf16.mxu0 0
  %1856 = vmatpush2.bf16.msra.mxu0 0
  %1857 = vmatprep.subr.bf16.mxu0 0
  %1858 = vmatpush2.bf16.msra.mxu0 0
  %1859 = vmatprep.subr.bf16.mxu0 0
  %1860 = vmatpush2.bf16.msra.mxu0 0
  %1861 = vmatprep.subr.bf16.mxu0 0
  %1862 = vmatpush2.bf16.msra.mxu0 0
  %1863 = vmatprep.subr.bf16.mxu0 0
  %1864 = vmatpush2.bf16.msra.mxu0 0
  %1865 = vmatprep.subr.bf16.mxu0 0
  %1866 = vmatpush2.bf16.msra.mxu0 0
  %1867 = vmatprep.subr.bf16.mxu0 0
  %1868 = vmatpush2.bf16.msra.mxu0 0
  %1869 = vmatprep.mubr.bf16.mxu0 0
  %1870 = vmatmul.mubr.bf16.gmra.mxu0 %v1748
  %v1871 = vpop.f32.mrf.mxu0
  %v1872 = vadd.f32 %v1832, %v1871
  %v1873 = vpop.f32.mrf.mxu0
  %v1874 = vpop.f32.mrf.mxu0
  %v1875 = vpop.f32.mrf.mxu0
  %1876 = vdwg.mxu0
  %v1877 = vadd.f32 %v1872, %v950
  %v1878 = vxor.u32 %v1877, 2147483648
  %v1879 = vmul.f32 %v1878, 1.442695
  %v1880 = vpow.pop %v1879
  %v1881 = vadd.f32 %v1880, 1.0
  %v1882 = vrcp.pop %v1881
  %v1883 = vmul.f32 1.0, %v1882
  %1884 = vmatprep.subr.bf16.mxu0 0
  %1885 = vmatpush1.bf16.msra.mxu0 0
  %1886 = vmatprep.subr.bf16.mxu0 0
  %1887 = vmatpush1.bf16.msra.mxu0 0
  %1888 = vmatprep.subr.bf16.mxu0 0
  %1889 = vmatpush1.bf16.msra.mxu0 0
  %1890 = vmatprep.subr.bf16.mxu0 0
  %1891 = vmatpush1.bf16.msra.mxu0 0
  %1892 = vmatprep.subr.bf16.mxu0 0
  %1893 = vmatpush1.bf16.msra.mxu0 0
  %1894 = vmatprep.subr.bf16.mxu0 0
  %1895 = vmatpush1.bf16.msra.mxu0 0
  %1896 = vmatprep.subr.bf16.mxu0 0
  %1897 = vmatpush1.bf16.msra.mxu0 %v761
  %1898 = vmatprep.subr.bf16.mxu0 0
  %1899 = vmatpush1.bf16.msra.mxu0 %v760
  %1900 = vmatprep.subr.bf16.mxu0 0
  %1901 = vmatpush2.bf16.msra.mxu0 0
  %1902 = vmatprep.subr.bf16.mxu0 0
  %1903 = vmatpush2.bf16.msra.mxu0 0
  %1904 = vmatprep.subr.bf16.mxu0 0
  %1905 = vmatpush2.bf16.msra.mxu0 0
  %1906 = vmatprep.subr.bf16.mxu0 0
  %1907 = vmatpush2.bf16.msra.mxu0 0
  %1908 = vmatprep.subr.bf16.mxu0 0
  %1909 = vmatpush2.bf16.msra.mxu0 0
  %1910 = vmatprep.subr.bf16.mxu0 0
  %1911 = vmatpush2.bf16.msra.mxu0 0
  %1912 = vmatprep.subr.bf16.mxu0 0
  %1913 = vmatpush2.bf16.msra.mxu0 0
  %1914 = vmatprep.subr.bf16.mxu0 0
  %1915 = vmatpush2.bf16.msra.mxu0 0
  %1916 = vmatprep.mubr.bf16.mxu0 0
  %1917 = vmatmul.mubr.bf16.gmra.mxu0 %v1603
  %v1918 = vpop.f32.mrf.mxu0
  %v1919 = vadd.f32 0.0, %v1918
  %v1920 = vpop.f32.mrf.mxu0
  %v1921 = vpop.f32.mrf.mxu0
  %v1922 = vpop.f32.mrf.mxu0
  %1923 = vdwg.mxu0
  %1924 = vmatprep.subr.bf16.mxu0 0
  %1925 = vmatpush1.bf16.msra.mxu0 0
  %1926 = vmatprep.subr.bf16.mxu0 0
  %1927 = vmatpush1.bf16.msra.mxu0 0
  %1928 = vmatprep.subr.bf16.mxu0 0
  %1929 = vmatpush1.bf16.msra.mxu0 0
  %1930 = vmatprep.subr.bf16.mxu0 0
  %1931 = vmatpush1.bf16.msra.mxu0 0
  %1932 = vmatprep.subr.bf16.mxu0 0
  %1933 = vmatpush1.bf16.msra.mxu0 %v728
  %1934 = vmatprep.subr.bf16.mxu0 0
  %1935 = vmatpush1.bf16.msra.mxu0 %v727
  %1936 = vmatprep.subr.bf16.mxu0 0
  %1937 = vmatpush1.bf16.msra.mxu0 %v726
  %1938 = vmatprep.subr.bf16.mxu0 0
  %1939 = vmatpush1.bf16.msra.mxu0 %v725
  %1940 = vmatprep.subr.bf16.mxu0 0
  %1941 = vmatpush2.bf16.msra.mxu0 0
  %1942 = vmatprep.subr.bf16.mxu0 0
  %1943 = vmatpush2.bf16.msra.mxu0 0
  %1944 = vmatprep.subr.bf16.mxu0 0
  %1945 = vmatpush2.bf16.msra.mxu0 0
  %1946 = vmatprep.subr.bf16.mxu0 0
  %1947 = vmatpush2.bf16.msra.mxu0 0
  %1948 = vmatprep.subr.bf16.mxu0 0
  %1949 = vmatpush2.bf16.msra.mxu0 0
  %1950 = vmatprep.subr.bf16.mxu0 0
  %1951 = vmatpush2.bf16.msra.mxu0 0
  %1952 = vmatprep.subr.bf16.mxu0 0
  %1953 = vmatpush2.bf16.msra.mxu0 0
  %1954 = vmatprep.subr.bf16.mxu0 0
  %1955 = vmatpush2.bf16.msra.mxu0 0
  %1956 = vmatprep.mubr.bf16.mxu0 0
  %1957 = vmatmul.mubr.bf16.gmra.mxu0 %v1748
  %v1958 = vpop.f32.mrf.mxu0
  %v1959 = vadd.f32 %v1919, %v1958
  %v1960 = vpop.f32.mrf.mxu0
  %v1961 = vpop.f32.mrf.mxu0
  %v1962 = vpop.f32.mrf.mxu0
  %1963 = vdwg.mxu0
  %v1964 = vadd.f32 %v1959, %v1041
  %v1965 = vtanh.pop %v1964
  %1966 = vmatprep.subr.bf16.mxu0 0
  %1967 = vmatpush1.bf16.msra.mxu0 0
  %1968 = vmatprep.subr.bf16.mxu0 0
  %1969 = vmatpush1.bf16.msra.mxu0 0
  %1970 = vmatprep.subr.bf16.mxu0 0
  %1971 = vmatpush1.bf16.msra.mxu0 0
  %1972 = vmatprep.subr.bf16.mxu0 0
  %1973 = vmatpush1.bf16.msra.mxu0 0
  %1974 = vmatprep.subr.bf16.mxu0 0
  %1975 = vmatpush1.bf16.msra.mxu0 0
  %1976 = vmatprep.subr.bf16.mxu0 0
  %1977 = vmatpush1.bf16.msra.mxu0 0
  %1978 = vmatprep.subr.bf16.mxu0 0
  %1979 = vmatpush1.bf16.msra.mxu0 %v768
  %1980 = vmatprep.subr.bf16.mxu0 0
  %1981 = vmatpush1.bf16.msra.mxu0 %v767
  %1982 = vmatprep.subr.bf16.mxu0 0
  %1983 = vmatpush2.bf16.msra.mxu0 0
  %1984 = vmatprep.subr.bf16.mxu0 0
  %1985 = vmatpush2.bf16.msra.mxu0 0
  %1986 = vmatprep.subr.bf16.mxu0 0
  %1987 = vmatpush2.bf16.msra.mxu0 0
  %1988 = vmatprep.subr.bf16.mxu0 0
  %1989 = vmatpush2.bf16.msra.mxu0 0
  %1990 = vmatprep.subr.bf16.mxu0 0
  %1991 = vmatpush2.bf16.msra.mxu0 0
  %1992 = vmatprep.subr.bf16.mxu0 0
  %1993 = vmatpush2.bf16.msra.mxu0 0
  %1994 = vmatprep.subr.bf16.mxu0 0
  %1995 = vmatpush2.bf16.msra.mxu0 0
  %1996 = vmatprep.subr.bf16.mxu0 0
  %1997 = vmatpush2.bf16.msra.mxu0 0
  %1998 = vmatprep.mubr.bf16.mxu0 0
  %1999 = vmatmul.mubr.bf16.gmra.mxu0 %v1603
  %v2000 = vpop.f32.mrf.mxu0
  %v2001 = vadd.f32 0.0, %v2000
  %v2002 = vpop.f32.mrf.mxu0
  %v2003 = vpop.f32.mrf.mxu0
  %v2004 = vpop.f32.mrf.mxu0
  %2005 = vdwg.mxu0
  %2006 = vmatprep.subr.bf16.mxu0 0
  %2007 = vmatpush1.bf16.msra.mxu0 0
  %2008 = vmatprep.subr.bf16.mxu0 0
  %2009 = vmatpush1.bf16.msra.mxu0 0
  %2010 = vmatprep.subr.bf16.mxu0 0
  %2011 = vmatpush1.bf16.msra.mxu0 0
  %2012 = vmatprep.subr.bf16.mxu0 0
  %2013 = vmatpush1.bf16.msra.mxu0 0
  %2014 = vmatprep.subr.bf16.mxu0 0
  %2015 = vmatpush1.bf16.msra.mxu0 %v741
  %2016 = vmatprep.subr.bf16.mxu0 0
  %2017 = vmatpush1.bf16.msra.mxu0 %v740
  %2018 = vmatprep.subr.bf16.mxu0 0
  %2019 = vmatpush1.bf16.msra.mxu0 %v739
  %2020 = vmatprep.subr.bf16.mxu0 0
  %2021 = vmatpush1.bf16.msra.mxu0 %v738
  %2022 = vmatprep.subr.bf16.mxu0 0
  %2023 = vmatpush2.bf16.msra.mxu0 0
  %2024 = vmatprep.subr.bf16.mxu0 0
  %2025 = vmatpush2.bf16.msra.mxu0 0
  %2026 = vmatprep.subr.bf16.mxu0 0
  %2027 = vmatpush2.bf16.msra.mxu0 0
  %2028 = vmatprep.subr.bf16.mxu0 0
  %2029 = vmatpush2.bf16.msra.mxu0 0
  %2030 = vmatprep.subr.bf16.mxu0 0
  %2031 = vmatpush2.bf16.msra.mxu0 0
  %2032 = vmatprep.subr.bf16.mxu0 0
  %2033 = vmatpush2.bf16.msra.mxu0 0
  %2034 = vmatprep.subr.bf16.mxu0 0
  %2035 = vmatpush2.bf16.msra.mxu0 0
  %2036 = vmatprep.subr.bf16.mxu0 0
  %2037 = vmatpush2.bf16.msra.mxu0 0
  %2038 = vmatprep.mubr.bf16.mxu0 0
  %2039 = vmatmul.mubr.bf16.gmra.mxu0 %v1748
  %v2040 = vpop.f32.mrf.mxu0
  %v2041 = vadd.f32 %v2001, %v2040
  %v2042 = vpop.f32.mrf.mxu0
  %v2043 = vpop.f32.mrf.mxu0
  %v2044 = vpop.f32.mrf.mxu0
  %2045 = vdwg.mxu0
  %v2046 = vadd.f32 %v2041, %v1127
  %v2047 = vxor.u32 %v2046, 2147483648
  %v2048 = vmul.f32 %v2047, 1.442695
  %v2049 = vpow.pop %v2048
  %v2050 = vadd.f32 %v2049, 1.0
  %v2051 = vrcp.pop %v2050
  %v2052 = vmul.f32 1.0, %v2051
  %v2053 = vmul.f32 %v1883, %v1598
  %v2054 = vmul.f32 %v1796, %v1965
  %v2055 = vadd.f32 %v2053, %v2054
  %v2056 = vtanh.pop %v2055
  %v2057 = vmul.f32 %v2052, %v2056
  %v2058 = vpack.c.bf16 %v2057, %v2057
  %v2060 = vsel %vm142, %v2058, 0
  %2062 = vmatprep.subr.bf16.mxu0 0
  %2063 = vmatpush1.bf16.xpose.msra.mxu0 0
  %2064 = vmatprep.subr.bf16.mxu0 0
  %2065 = vmatpush1.bf16.xpose.msra.mxu0 0
  %2066 = vmatprep.subr.bf16.mxu0 0
  %2067 = vmatpush1.bf16.xpose.msra.mxu0 0
  %2068 = vmatprep.subr.bf16.mxu0 0
  %2069 = vmatpush1.bf16.xpose.msra.mxu0 0
  %2070 = vmatprep.subr.bf16.mxu0 0
  %2071 = vmatpush1.bf16.xpose.msra.mxu0 0
  %2072 = vmatprep.subr.bf16.mxu0 0
  %2073 = vmatpush1.bf16.xpose.msra.mxu0 0
  %2074 = vmatprep.subr.bf16.mxu0 0
  %2075 = vmatpush1.bf16.xpose.msra.mxu0 0
  %2076 = vmatprep.subr.bf16.mxu0 0
  %2077 = vmatpush1.bf16.xpose.msra.mxu0 %v1145
  %2078 = vmatprep.subr.bf16.mxu0 0
  %2079 = vmatpush2.bf16.xpose.msra.mxu0 0
  %2080 = vmatprep.subr.bf16.mxu0 0
  %2081 = vmatpush2.bf16.xpose.msra.mxu0 0
  %2082 = vmatprep.subr.bf16.mxu0 0
  %2083 = vmatpush2.bf16.xpose.msra.mxu0 0
  %2084 = vmatprep.subr.bf16.mxu0 0
  %2085 = vmatpush2.bf16.xpose.msra.mxu0 0
  %2086 = vmatprep.subr.bf16.mxu0 0
  %2087 = vmatpush2.bf16.xpose.msra.mxu0 0
  %2088 = vmatprep.subr.bf16.mxu0 0
  %2089 = vmatpush2.bf16.xpose.msra.mxu0 0
  %2090 = vmatprep.subr.bf16.mxu0 0
  %2091 = vmatpush2.bf16.xpose.msra.mxu0 0
  %2092 = vmatprep.subr.bf16.mxu0 0
  %2093 = vmatpush2.bf16.xpose.msra.mxu0 0
  %2094 = vmatprep.mubr.bf16.mxu0 0
  %2095 = vmatmul.mubr.bf16.gmra.mxu0 %v2060
  %v2096 = vpop.f32.mrf.mxu0
  %v2097 = vadd.f32 0.0, %v2096
  %v2098 = vpop.f32.mrf.mxu0
  %v2099 = vpop.f32.mrf.mxu0
  %v2100 = vpop.f32.mrf.mxu0
  %2101 = vdwg.mxu0
  %v2102 = vsel %vm82, %v2097, -1e+09
  %v2103 = vsel %vm1188, %v2102, -inf
  %2104 = vmax.xlane.f32.xlu0 %v2103
  %v2105 = vpop.xlane.xlu0 %2104
  %v2106 = vsub.f32 %v2102, %v2105
  %v2107 = vmul.f32 %v2106, 1.442695
  %v2108 = vpow.pop %v2107
  %v2109 = vsel %vm1188, %v2108, 0.0
  %2110 = vadd.xlane.f32.xlu0 %v2109
  %v2111 = vpop.xlane.xlu0 %2110
  %v2112 = vrcp.pop %v2111
  %v2113 = vmul.f32 %v2108, %v2112
  %v2114 = vpack.c.bf16 %v2113, %v2113
  %v2116 = vsel %vm89, %v2114, 0
  %2118 = vmatprep.subr.bf16.mxu0 0
  %2119 = vmatpush1.bf16.msra.mxu0 0
  %2120 = vmatprep.subr.bf16.mxu0 0
  %2121 = vmatpush1.bf16.msra.mxu0 0
  %2122 = vmatprep.subr.bf16.mxu0 0
  %2123 = vmatpush1.bf16.msra.mxu0 0
  %2124 = vmatprep.subr.bf16.mxu0 0
  %2125 = vmatpush1.bf16.msra.mxu0 0
  %2126 = vmatprep.subr.bf16.mxu0 0
  %2127 = vmatpush1.bf16.msra.mxu0 0
  %2128 = vmatprep.subr.bf16.mxu0 0
  %2129 = vmatpush1.bf16.msra.mxu0 0
  %2130 = vmatprep.subr.bf16.mxu0 0
  %2131 = vmatpush1.bf16.msra.mxu0 0
  %2132 = vmatprep.subr.bf16.mxu0 0
  %2133 = vmatpush1.bf16.msra.mxu0 %v690
  %2134 = vmatprep.subr.bf16.mxu0 0
  %2135 = vmatpush2.bf16.msra.mxu0 0
  %2136 = vmatprep.subr.bf16.mxu0 0
  %2137 = vmatpush2.bf16.msra.mxu0 0
  %2138 = vmatprep.subr.bf16.mxu0 0
  %2139 = vmatpush2.bf16.msra.mxu0 0
  %2140 = vmatprep.subr.bf16.mxu0 0
  %2141 = vmatpush2.bf16.msra.mxu0 0
  %2142 = vmatprep.subr.bf16.mxu0 0
  %2143 = vmatpush2.bf16.msra.mxu0 0
  %2144 = vmatprep.subr.bf16.mxu0 0
  %2145 = vmatpush2.bf16.msra.mxu0 0
  %2146 = vmatprep.subr.bf16.mxu0 0
  %2147 = vmatpush2.bf16.msra.mxu0 0
  %2148 = vmatprep.subr.bf16.mxu0 0
  %2149 = vmatpush2.bf16.msra.mxu0 0
  %2150 = vmatprep.mubr.bf16.mxu0 0
  %2151 = vmatmul.mubr.bf16.gmra.mxu0 %v2116
  %v2152 = vpop.f32.mrf.mxu0
  %v2153 = vadd.f32 0.0, %v2152
  %v2154 = vpop.f32.mrf.mxu0
  %v2155 = vpop.f32.mrf.mxu0
  %v2156 = vpop.f32.mrf.mxu0
  %2157 = vdwg.mxu0
  %2159 = vrot.lane.b32.xlu0 %v2153, 32
  %v2160 = vpop.permute.xlu0 %2159
  %v2162 = vsel %vm142, %v2057, %v2160
  %v2163 = vpack.c.bf16 %v2162, %v2162
  %2164 = vmatprep.subr.bf16.mxu0 0
  %2165 = vmatpush1.bf16.msra.mxu0 0
  %2166 = vmatprep.subr.bf16.mxu0 0
  %2167 = vmatpush1.bf16.msra.mxu0 0
  %2168 = vmatprep.subr.bf16.mxu0 0
  %2169 = vmatpush1.bf16.msra.mxu0 0
  %2170 = vmatprep.subr.bf16.mxu0 0
  %2171 = vmatpush1.bf16.msra.mxu0 0
  %2172 = vmatprep.subr.bf16.mxu0 0
  %2173 = vmatpush1.bf16.msra.mxu0 0
  %2174 = vmatprep.subr.bf16.mxu0 0
  %2175 = vmatpush1.bf16.msra.mxu0 0
  %2176 = vmatprep.subr.bf16.mxu0 0
  %2177 = vmatpush1.bf16.msra.mxu0 %v747
  %2178 = vmatprep.subr.bf16.mxu0 0
  %2179 = vmatpush1.bf16.msra.mxu0 %v746
  %2180 = vmatprep.subr.bf16.mxu0 0
  %2181 = vmatpush2.bf16.msra.mxu0 0
  %2182 = vmatprep.subr.bf16.mxu0 0
  %2183 = vmatpush2.bf16.msra.mxu0 0
  %2184 = vmatprep.subr.bf16.mxu0 0
  %2185 = vmatpush2.bf16.msra.mxu0 0
  %2186 = vmatprep.subr.bf16.mxu0 0
  %2187 = vmatpush2.bf16.msra.mxu0 0
  %2188 = vmatprep.subr.bf16.mxu0 0
  %2189 = vmatpush2.bf16.msra.mxu0 0
  %2190 = vmatprep.subr.bf16.mxu0 0
  %2191 = vmatpush2.bf16.msra.mxu0 0
  %2192 = vmatprep.subr.bf16.mxu0 0
  %2193 = vmatpush2.bf16.msra.mxu0 0
  %2194 = vmatprep.subr.bf16.mxu0 0
  %2195 = vmatpush2.bf16.msra.mxu0 0
  %2196 = vmatprep.mubr.bf16.mxu0 0
  %2197 = vmatmul.mubr.bf16.gmra.mxu0 %v2060
  %v2198 = vpop.f32.mrf.mxu0
  %v2199 = vadd.f32 0.0, %v2198
  %v2200 = vpop.f32.mrf.mxu0
  %v2201 = vpop.f32.mrf.mxu0
  %v2202 = vpop.f32.mrf.mxu0
  %2203 = vdwg.mxu0
  %v2205 = vsel %vm813, %v2163, 0
  %2207 = vmatprep.subr.bf16.mxu0 0
  %2208 = vmatpush1.bf16.msra.mxu0 0
  %2209 = vmatprep.subr.bf16.mxu0 0
  %2210 = vmatpush1.bf16.msra.mxu0 0
  %2211 = vmatprep.subr.bf16.mxu0 0
  %2212 = vmatpush1.bf16.msra.mxu0 0
  %2213 = vmatprep.subr.bf16.mxu0 0
  %2214 = vmatpush1.bf16.msra.mxu0 0
  %2215 = vmatprep.subr.bf16.mxu0 0
  %2216 = vmatpush1.bf16.msra.mxu0 %v702
  %2217 = vmatprep.subr.bf16.mxu0 0
  %2218 = vmatpush1.bf16.msra.mxu0 %v701
  %2219 = vmatprep.subr.bf16.mxu0 0
  %2220 = vmatpush1.bf16.msra.mxu0 %v700
  %2221 = vmatprep.subr.bf16.mxu0 0
  %2222 = vmatpush1.bf16.msra.mxu0 %v699
  %2223 = vmatprep.subr.bf16.mxu0 0
  %2224 = vmatpush2.bf16.msra.mxu0 0
  %2225 = vmatprep.subr.bf16.mxu0 0
  %2226 = vmatpush2.bf16.msra.mxu0 0
  %2227 = vmatprep.subr.bf16.mxu0 0
  %2228 = vmatpush2.bf16.msra.mxu0 0
  %2229 = vmatprep.subr.bf16.mxu0 0
  %2230 = vmatpush2.bf16.msra.mxu0 0
  %2231 = vmatprep.subr.bf16.mxu0 0
  %2232 = vmatpush2.bf16.msra.mxu0 0
  %2233 = vmatprep.subr.bf16.mxu0 0
  %2234 = vmatpush2.bf16.msra.mxu0 0
  %2235 = vmatprep.subr.bf16.mxu0 0
  %2236 = vmatpush2.bf16.msra.mxu0 0
  %2237 = vmatprep.subr.bf16.mxu0 0
  %2238 = vmatpush2.bf16.msra.mxu0 0
  %2239 = vmatprep.mubr.bf16.mxu0 0
  %2240 = vmatmul.mubr.bf16.gmra.mxu0 %v2205
  %v2241 = vpop.f32.mrf.mxu0
  %v2242 = vadd.f32 %v2199, %v2241
  %v2243 = vpop.f32.mrf.mxu0
  %v2244 = vpop.f32.mrf.mxu0
  %v2245 = vpop.f32.mrf.mxu0
  %2246 = vdwg.mxu0
  %v2247 = vadd.f32 %v2242, %v859
  %v2248 = vxor.u32 %v2247, 2147483648
  %v2249 = vmul.f32 %v2248, 1.442695
  %v2250 = vpow.pop %v2249
  %v2251 = vadd.f32 %v2250, 1.0
  %v2252 = vrcp.pop %v2251
  %v2253 = vmul.f32 1.0, %v2252
  %2254 = vmatprep.subr.bf16.mxu0 0
  %2255 = vmatpush1.bf16.msra.mxu0 0
  %2256 = vmatprep.subr.bf16.mxu0 0
  %2257 = vmatpush1.bf16.msra.mxu0 0
  %2258 = vmatprep.subr.bf16.mxu0 0
  %2259 = vmatpush1.bf16.msra.mxu0 0
  %2260 = vmatprep.subr.bf16.mxu0 0
  %2261 = vmatpush1.bf16.msra.mxu0 0
  %2262 = vmatprep.subr.bf16.mxu0 0
  %2263 = vmatpush1.bf16.msra.mxu0 0
  %2264 = vmatprep.subr.bf16.mxu0 0
  %2265 = vmatpush1.bf16.msra.mxu0 0
  %2266 = vmatprep.subr.bf16.mxu0 0
  %2267 = vmatpush1.bf16.msra.mxu0 %v754
  %2268 = vmatprep.subr.bf16.mxu0 0
  %2269 = vmatpush1.bf16.msra.mxu0 %v753
  %2270 = vmatprep.subr.bf16.mxu0 0
  %2271 = vmatpush2.bf16.msra.mxu0 0
  %2272 = vmatprep.subr.bf16.mxu0 0
  %2273 = vmatpush2.bf16.msra.mxu0 0
  %2274 = vmatprep.subr.bf16.mxu0 0
  %2275 = vmatpush2.bf16.msra.mxu0 0
  %2276 = vmatprep.subr.bf16.mxu0 0
  %2277 = vmatpush2.bf16.msra.mxu0 0
  %2278 = vmatprep.subr.bf16.mxu0 0
  %2279 = vmatpush2.bf16.msra.mxu0 0
  %2280 = vmatprep.subr.bf16.mxu0 0
  %2281 = vmatpush2.bf16.msra.mxu0 0
  %2282 = vmatprep.subr.bf16.mxu0 0
  %2283 = vmatpush2.bf16.msra.mxu0 0
  %2284 = vmatprep.subr.bf16.mxu0 0
  %2285 = vmatpush2.bf16.msra.mxu0 0
  %2286 = vmatprep.mubr.bf16.mxu0 0
  %2287 = vmatmul.mubr.bf16.gmra.mxu0 %v2060
  %v2288 = vpop.f32.mrf.mxu0
  %v2289 = vadd.f32 0.0, %v2288
  %v2290 = vpop.f32.mrf.mxu0
  %v2291 = vpop.f32.mrf.mxu0
  %v2292 = vpop.f32.mrf.mxu0
  %2293 = vdwg.mxu0
  %2294 = vmatprep.subr.bf16.mxu0 0
  %2295 = vmatpush1.bf16.msra.mxu0 0
  %2296 = vmatprep.subr.bf16.mxu0 0
  %2297 = vmatpush1.bf16.msra.mxu0 0
  %2298 = vmatprep.subr.bf16.mxu0 0
  %2299 = vmatpush1.bf16.msra.mxu0 0
  %2300 = vmatprep.subr.bf16.mxu0 0
  %2301 = vmatpush1.bf16.msra.mxu0 0
  %2302 = vmatprep.subr.bf16.mxu0 0
  %2303 = vmatpush1.bf16.msra.mxu0 %v715
  %2304 = vmatprep.subr.bf16.mxu0 0
  %2305 = vmatpush1.bf16.msra.mxu0 %v714
  %2306 = vmatprep.subr.bf16.mxu0 0
  %2307 = vmatpush1.bf16.msra.mxu0 %v713
  %2308 = vmatprep.subr.bf16.mxu0 0
  %2309 = vmatpush1.bf16.msra.mxu0 %v712
  %2310 = vmatprep.subr.bf16.mxu0 0
  %2311 = vmatpush2.bf16.msra.mxu0 0
  %2312 = vmatprep.subr.bf16.mxu0 0
  %2313 = vmatpush2.bf16.msra.mxu0 0
  %2314 = vmatprep.subr.bf16.mxu0 0
  %2315 = vmatpush2.bf16.msra.mxu0 0
  %2316 = vmatprep.subr.bf16.mxu0 0
  %2317 = vmatpush2.bf16.msra.mxu0 0
  %2318 = vmatprep.subr.bf16.mxu0 0
  %2319 = vmatpush2.bf16.msra.mxu0 0
  %2320 = vmatprep.subr.bf16.mxu0 0
  %2321 = vmatpush2.bf16.msra.mxu0 0
  %2322 = vmatprep.subr.bf16.mxu0 0
  %2323 = vmatpush2.bf16.msra.mxu0 0
  %2324 = vmatprep.subr.bf16.mxu0 0
  %2325 = vmatpush2.bf16.msra.mxu0 0
  %2326 = vmatprep.mubr.bf16.mxu0 0
  %2327 = vmatmul.mubr.bf16.gmra.mxu0 %v2205
  %v2328 = vpop.f32.mrf.mxu0
  %v2329 = vadd.f32 %v2289, %v2328
  %v2330 = vpop.f32.mrf.mxu0
  %v2331 = vpop.f32.mrf.mxu0
  %v2332 = vpop.f32.mrf.mxu0
  %2333 = vdwg.mxu0
  %v2334 = vadd.f32 %v2329, %v950
  %v2335 = vxor.u32 %v2334, 2147483648
  %v2336 = vmul.f32 %v2335, 1.442695
  %v2337 = vpow.pop %v2336
  %v2338 = vadd.f32 %v2337, 1.0
  %v2339 = vrcp.pop %v2338
  %v2340 = vmul.f32 1.0, %v2339
  %2341 = vmatprep.subr.bf16.mxu0 0
  %2342 = vmatpush1.bf16.msra.mxu0 0
  %2343 = vmatprep.subr.bf16.mxu0 0
  %2344 = vmatpush1.bf16.msra.mxu0 0
  %2345 = vmatprep.subr.bf16.mxu0 0
  %2346 = vmatpush1.bf16.msra.mxu0 0
  %2347 = vmatprep.subr.bf16.mxu0 0
  %2348 = vmatpush1.bf16.msra.mxu0 0
  %2349 = vmatprep.subr.bf16.mxu0 0
  %2350 = vmatpush1.bf16.msra.mxu0 0
  %2351 = vmatprep.subr.bf16.mxu0 0
  %2352 = vmatpush1.bf16.msra.mxu0 0
  %2353 = vmatprep.subr.bf16.mxu0 0
  %2354 = vmatpush1.bf16.msra.mxu0 %v761
  %2355 = vmatprep.subr.bf16.mxu0 0
  %2356 = vmatpush1.bf16.msra.mxu0 %v760
  %2357 = vmatprep.subr.bf16.mxu0 0
  %2358 = vmatpush2.bf16.msra.mxu0 0
  %2359 = vmatprep.subr.bf16.mxu0 0
  %2360 = vmatpush2.bf16.msra.mxu0 0
  %2361 = vmatprep.subr.bf16.mxu0 0
  %2362 = vmatpush2.bf16.msra.mxu0 0
  %2363 = vmatprep.subr.bf16.mxu0 0
  %2364 = vmatpush2.bf16.msra.mxu0 0
  %2365 = vmatprep.subr.bf16.mxu0 0
  %2366 = vmatpush2.bf16.msra.mxu0 0
  %2367 = vmatprep.subr.bf16.mxu0 0
  %2368 = vmatpush2.bf16.msra.mxu0 0
  %2369 = vmatprep.subr.bf16.mxu0 0
  %2370 = vmatpush2.bf16.msra.mxu0 0
  %2371 = vmatprep.subr.bf16.mxu0 0
  %2372 = vmatpush2.bf16.msra.mxu0 0
  %2373 = vmatprep.mubr.bf16.mxu0 0
  %2374 = vmatmul.mubr.bf16.gmra.mxu0 %v2060
  %v2375 = vpop.f32.mrf.mxu0
  %v2376 = vadd.f32 0.0, %v2375
  %v2377 = vpop.f32.mrf.mxu0
  %v2378 = vpop.f32.mrf.mxu0
  %v2379 = vpop.f32.mrf.mxu0
  %2380 = vdwg.mxu0
  %2381 = vmatprep.subr.bf16.mxu0 0
  %2382 = vmatpush1.bf16.msra.mxu0 0
  %2383 = vmatprep.subr.bf16.mxu0 0
  %2384 = vmatpush1.bf16.msra.mxu0 0
  %2385 = vmatprep.subr.bf16.mxu0 0
  %2386 = vmatpush1.bf16.msra.mxu0 0
  %2387 = vmatprep.subr.bf16.mxu0 0
  %2388 = vmatpush1.bf16.msra.mxu0 0
  %2389 = vmatprep.subr.bf16.mxu0 0
  %2390 = vmatpush1.bf16.msra.mxu0 %v728
  %2391 = vmatprep.subr.bf16.mxu0 0
  %2392 = vmatpush1.bf16.msra.mxu0 %v727
  %2393 = vmatprep.subr.bf16.mxu0 0
  %2394 = vmatpush1.bf16.msra.mxu0 %v726
  %2395 = vmatprep.subr.bf16.mxu0 0
  %2396 = vmatpush1.bf16.msra.mxu0 %v725
  %2397 = vmatprep.subr.bf16.mxu0 0
  %2398 = vmatpush2.bf16.msra.mxu0 0
  %2399 = vmatprep.subr.bf16.mxu0 0
  %2400 = vmatpush2.bf16.msra.mxu0 0
  %2401 = vmatprep.subr.bf16.mxu0 0
  %2402 = vmatpush2.bf16.msra.mxu0 0
  %2403 = vmatprep.subr.bf16.mxu0 0
  %2404 = vmatpush2.bf16.msra.mxu0 0
  %2405 = vmatprep.subr.bf16.mxu0 0
  %2406 = vmatpush2.bf16.msra.mxu0 0
  %2407 = vmatprep.subr.bf16.mxu0 0
  %2408 = vmatpush2.bf16.msra.mxu0 0
  %2409 = vmatprep.subr.bf16.mxu0 0
  %2410 = vmatpush2.bf16.msra.mxu0 0
  %2411 = vmatprep.subr.bf16.mxu0 0
  %2412 = vmatpush2.bf16.msra.mxu0 0
  %2413 = vmatprep.mubr.bf16.mxu0 0
  %2414 = vmatmul.mubr.bf16.gmra.mxu0 %v2205
  %v2415 = vpop.f32.mrf.mxu0
  %v2416 = vadd.f32 %v2376, %v2415
  %v2417 = vpop.f32.mrf.mxu0
  %v2418 = vpop.f32.mrf.mxu0
  %v2419 = vpop.f32.mrf.mxu0
  %2420 = vdwg.mxu0
  %v2421 = vadd.f32 %v2416, %v1041
  %v2422 = vtanh.pop %v2421
  %2423 = vmatprep.subr.bf16.mxu0 0
  %2424 = vmatpush1.bf16.msra.mxu0 0
  %2425 = vmatprep.subr.bf16.mxu0 0
  %2426 = vmatpush1.bf16.msra.mxu0 0
  %2427 = vmatprep.subr.bf16.mxu0 0
  %2428 = vmatpush1.bf16.msra.mxu0 0
  %2429 = vmatprep.subr.bf16.mxu0 0
  %2430 = vmatpush1.bf16.msra.mxu0 0
  %2431 = vmatprep.subr.bf16.mxu0 0
  %2432 = vmatpush1.bf16.msra.mxu0 0
  %2433 = vmatprep.subr.bf16.mxu0 0
  %2434 = vmatpush1.bf16.msra.mxu0 0
  %2435 = vmatprep.subr.bf16.mxu0 0
  %2436 = vmatpush1.bf16.msra.mxu0 %v768
  %2437 = vmatprep.subr.bf16.mxu0 0
  %2438 = vmatpush1.bf16.msra.mxu0 %v767
  %2439 = vmatprep.subr.bf16.mxu0 0
  %2440 = vmatpush2.bf16.msra.mxu0 0
  %2441 = vmatprep.subr.bf16.mxu0 0
  %2442 = vmatpush2.bf16.msra.mxu0 0
  %2443 = vmatprep.subr.bf16.mxu0 0
  %2444 = vmatpush2.bf16.msra.mxu0 0
  %2445 = vmatprep.subr.bf16.mxu0 0
  %2446 = vmatpush2.bf16.msra.mxu0 0
  %2447 = vmatprep.subr.bf16.mxu0 0
  %2448 = vmatpush2.bf16.msra.mxu0 0
  %2449 = vmatprep.subr.bf16.mxu0 0
  %2450 = vmatpush2.bf16.msra.mxu0 0
  %2451 = vmatprep.subr.bf16.mxu0 0
  %2452 = vmatpush2.bf16.msra.mxu0 0
  %2453 = vmatprep.subr.bf16.mxu0 0
  %2454 = vmatpush2.bf16.msra.mxu0 0
  %2455 = vmatprep.mubr.bf16.mxu0 0
  %2456 = vmatmul.mubr.bf16.gmra.mxu0 %v2060
  %v2457 = vpop.f32.mrf.mxu0
  %v2458 = vadd.f32 0.0, %v2457
  %v2459 = vpop.f32.mrf.mxu0
  %v2460 = vpop.f32.mrf.mxu0
  %v2461 = vpop.f32.mrf.mxu0
  %2462 = vdwg.mxu0
  %2463 = vmatprep.subr.bf16.mxu0 0
  %2464 = vmatpush1.bf16.msra.mxu0 0
  %2465 = vmatprep.subr.bf16.mxu0 0
  %2466 = vmatpush1.bf16.msra.mxu0 0
  %2467 = vmatprep.subr.bf16.mxu0 0
  %2468 = vmatpush1.bf16.msra.mxu0 0
  %2469 = vmatprep.subr.bf16.mxu0 0
  %2470 = vmatpush1.bf16.msra.mxu0 0
  %2471 = vmatprep.subr.bf16.mxu0 0
  %2472 = vmatpush1.bf16.msra.mxu0 %v741
  %2473 = vmatprep.subr.bf16.mxu0 0
  %2474 = vmatpush1.bf16.msra.mxu0 %v740
  %2475 = vmatprep.subr.bf16.mxu0 0
  %2476 = vmatpush1.bf16.msra.mxu0 %v739
  %2477 = vmatprep.subr.bf16.mxu0 0
  %2478 = vmatpush1.bf16.msra.mxu0 %v738
  %2479 = vmatprep.subr.bf16.mxu0 0
  %2480 = vmatpush2.bf16.msra.mxu0 0
  %2481 = vmatprep.subr.bf16.mxu0 0
  %2482 = vmatpush2.bf16.msra.mxu0 0
  %2483 = vmatprep.subr.bf16.mxu0 0
  %2484 = vmatpush2.bf16.msra.mxu0 0
  %2485 = vmatprep.subr.bf16.mxu0 0
  %2486 = vmatpush2.bf16.msra.mxu0 0
  %2487 = vmatprep.subr.bf16.mxu0 0
  %2488 = vmatpush2.bf16.msra.mxu0 0
  %2489 = vmatprep.subr.bf16.mxu0 0
  %2490 = vmatpush2.bf16.msra.mxu0 0
  %2491 = vmatprep.subr.bf16.mxu0 0
  %2492 = vmatpush2.bf16.msra.mxu0 0
  %2493 = vmatprep.subr.bf16.mxu0 0
  %2494 = vmatpush2.bf16.msra.mxu0 0
  %2495 = vmatprep.mubr.bf16.mxu0 0
  %2496 = vmatmul.mubr.bf16.gmra.mxu0 %v2205
  %v2497 = vpop.f32.mrf.mxu0
  %v2498 = vadd.f32 %v2458, %v2497
  %v2499 = vpop.f32.mrf.mxu0
  %v2500 = vpop.f32.mrf.mxu0
  %v2501 = vpop.f32.mrf.mxu0
  %2502 = vdwg.mxu0
  %v2503 = vadd.f32 %v2498, %v1127
  %v2504 = vxor.u32 %v2503, 2147483648
  %v2505 = vmul.f32 %v2504, 1.442695
  %v2506 = vpow.pop %v2505
  %v2507 = vadd.f32 %v2506, 1.0
  %v2508 = vrcp.pop %v2507
  %v2509 = vmul.f32 1.0, %v2508
  %v2510 = vmul.f32 %v2340, %v2055
  %v2511 = vmul.f32 %v2253, %v2422
  %v2512 = vadd.f32 %v2510, %v2511
  %v2513 = vtanh.pop %v2512
  %v2514 = vmul.f32 %v2509, %v2513
  %v2515 = vpack.c.bf16 %v2514, %v2514
  %v2517 = vsel %vm142, %v2515, 0
  %2519 = vmatprep.subr.bf16.mxu0 0
  %2520 = vmatpush1.bf16.xpose.msra.mxu0 0
  %2521 = vmatprep.subr.bf16.mxu0 0
  %2522 = vmatpush1.bf16.xpose.msra.mxu0 0
  %2523 = vmatprep.subr.bf16.mxu0 0
  %2524 = vmatpush1.bf16.xpose.msra.mxu0 0
  %2525 = vmatprep.subr.bf16.mxu0 0
  %2526 = vmatpush1.bf16.xpose.msra.mxu0 0
  %2527 = vmatprep.subr.bf16.mxu0 0
  %2528 = vmatpush1.bf16.xpose.msra.mxu0 0
  %2529 = vmatprep.subr.bf16.mxu0 0
  %2530 = vmatpush1.bf16.xpose.msra.mxu0 0
  %2531 = vmatprep.subr.bf16.mxu0 0
  %2532 = vmatpush1.bf16.xpose.msra.mxu0 0
  %2533 = vmatprep.subr.bf16.mxu0 0
  %2534 = vmatpush1.bf16.xpose.msra.mxu0 %v1145
  %2535 = vmatprep.subr.bf16.mxu0 0
  %2536 = vmatpush2.bf16.xpose.msra.mxu0 0
  %2537 = vmatprep.subr.bf16.mxu0 0
  %2538 = vmatpush2.bf16.xpose.msra.mxu0 0
  %2539 = vmatprep.subr.bf16.mxu0 0
  %2540 = vmatpush2.bf16.xpose.msra.mxu0 0
  %2541 = vmatprep.subr.bf16.mxu0 0
  %2542 = vmatpush2.bf16.xpose.msra.mxu0 0
  %2543 = vmatprep.subr.bf16.mxu0 0
  %2544 = vmatpush2.bf16.xpose.msra.mxu0 0
  %2545 = vmatprep.subr.bf16.mxu0 0
  %2546 = vmatpush2.bf16.xpose.msra.mxu0 0
  %2547 = vmatprep.subr.bf16.mxu0 0
  %2548 = vmatpush2.bf16.xpose.msra.mxu0 0
  %2549 = vmatprep.subr.bf16.mxu0 0
  %2550 = vmatpush2.bf16.xpose.msra.mxu0 0
  %2551 = vmatprep.mubr.bf16.mxu0 0
  %2552 = vmatmul.mubr.bf16.gmra.mxu0 %v2517
  %v2553 = vpop.f32.mrf.mxu0
  %v2554 = vadd.f32 0.0, %v2553
  %v2555 = vpop.f32.mrf.mxu0
  %v2556 = vpop.f32.mrf.mxu0
  %v2557 = vpop.f32.mrf.mxu0
  %2558 = vdwg.mxu0
  %v2559 = vsel %vm82, %v2554, -1e+09
  %v2560 = vsel %vm1188, %v2559, -inf
  %2561 = vmax.xlane.f32.xlu0 %v2560
  %v2562 = vpop.xlane.xlu0 %2561
  %v2563 = vsub.f32 %v2559, %v2562
  %v2564 = vmul.f32 %v2563, 1.442695
  %v2565 = vpow.pop %v2564
  %v2566 = vsel %vm1188, %v2565, 0.0
  %2567 = vadd.xlane.f32.xlu0 %v2566
  %v2568 = vpop.xlane.xlu0 %2567
  %v2569 = vrcp.pop %v2568
  %v2570 = vmul.f32 %v2565, %v2569
  %v2571 = vpack.c.bf16 %v2570, %v2570
  %v2573 = vsel %vm89, %v2571, 0
  %2575 = vmatprep.subr.bf16.mxu0 0
  %2576 = vmatpush1.bf16.msra.mxu0 0
  %2577 = vmatprep.subr.bf16.mxu0 0
  %2578 = vmatpush1.bf16.msra.mxu0 0
  %2579 = vmatprep.subr.bf16.mxu0 0
  %2580 = vmatpush1.bf16.msra.mxu0 0
  %2581 = vmatprep.subr.bf16.mxu0 0
  %2582 = vmatpush1.bf16.msra.mxu0 0
  %2583 = vmatprep.subr.bf16.mxu0 0
  %2584 = vmatpush1.bf16.msra.mxu0 0
  %2585 = vmatprep.subr.bf16.mxu0 0
  %2586 = vmatpush1.bf16.msra.mxu0 0
  %2587 = vmatprep.subr.bf16.mxu0 0
  %2588 = vmatpush1.bf16.msra.mxu0 0
  %2589 = vmatprep.subr.bf16.mxu0 0
  %2590 = vmatpush1.bf16.msra.mxu0 %v690
  %2591 = vmatprep.subr.bf16.mxu0 0
  %2592 = vmatpush2.bf16.msra.mxu0 0
  %2593 = vmatprep.subr.bf16.mxu0 0
  %2594 = vmatpush2.bf16.msra.mxu0 0
  %2595 = vmatprep.subr.bf16.mxu0 0
  %2596 = vmatpush2.bf16.msra.mxu0 0
  %2597 = vmatprep.subr.bf16.mxu0 0
  %2598 = vmatpush2.bf16.msra.mxu0 0
  %2599 = vmatprep.subr.bf16.mxu0 0
  %2600 = vmatpush2.bf16.msra.mxu0 0
  %2601 = vmatprep.subr.bf16.mxu0 0
  %2602 = vmatpush2.bf16.msra.mxu0 0
  %2603 = vmatprep.subr.bf16.mxu0 0
  %2604 = vmatpush2.bf16.msra.mxu0 0
  %2605 = vmatprep.subr.bf16.mxu0 0
  %2606 = vmatpush2.bf16.msra.mxu0 0
  %2607 = vmatprep.mubr.bf16.mxu0 0
  %2608 = vmatmul.mubr.bf16.gmra.mxu0 %v2573
  %v2609 = vpop.f32.mrf.mxu0
  %v2610 = vadd.f32 0.0, %v2609
  %v2611 = vpop.f32.mrf.mxu0
  %v2612 = vpop.f32.mrf.mxu0
  %v2613 = vpop.f32.mrf.mxu0
  %2614 = vdwg.mxu0
  %2616 = vrot.lane.b32.xlu0 %v2610, 32
  %v2617 = vpop.permute.xlu0 %2616
  %v2619 = vsel %vm142, %v2514, %v2617
  %v2620 = vpack.c.bf16 %v2619, %v2619
  %2621 = vmatprep.subr.bf16.mxu0 0
  %2622 = vmatpush1.bf16.msra.mxu0 0
  %2623 = vmatprep.subr.bf16.mxu0 0
  %2624 = vmatpush1.bf16.msra.mxu0 0
  %2625 = vmatprep.subr.bf16.mxu0 0
  %2626 = vmatpush1.bf16.msra.mxu0 0
  %2627 = vmatprep.subr.bf16.mxu0 0
  %2628 = vmatpush1.bf16.msra.mxu0 0
  %2629 = vmatprep.subr.bf16.mxu0 0
  %2630 = vmatpush1.bf16.msra.mxu0 0
  %2631 = vmatprep.subr.bf16.mxu0 0
  %2632 = vmatpush1.bf16.msra.mxu0 0
  %2633 = vmatprep.subr.bf16.mxu0 0
  %2634 = vmatpush1.bf16.msra.mxu0 %v747
  %2635 = vmatprep.subr.bf16.mxu0 0
  %2636 = vmatpush1.bf16.msra.mxu0 %v746
  %2637 = vmatprep.subr.bf16.mxu0 0
  %2638 = vmatpush2.bf16.msra.mxu0 0
  %2639 = vmatprep.subr.bf16.mxu0 0
  %2640 = vmatpush2.bf16.msra.mxu0 0
  %2641 = vmatprep.subr.bf16.mxu0 0
  %2642 = vmatpush2.bf16.msra.mxu0 0
  %2643 = vmatprep.subr.bf16.mxu0 0
  %2644 = vmatpush2.bf16.msra.mxu0 0
  %2645 = vmatprep.subr.bf16.mxu0 0
  %2646 = vmatpush2.bf16.msra.mxu0 0
  %2647 = vmatprep.subr.bf16.mxu0 0
  %2648 = vmatpush2.bf16.msra.mxu0 0
  %2649 = vmatprep.subr.bf16.mxu0 0
  %2650 = vmatpush2.bf16.msra.mxu0 0
  %2651 = vmatprep.subr.bf16.mxu0 0
  %2652 = vmatpush2.bf16.msra.mxu0 0
  %2653 = vmatprep.mubr.bf16.mxu0 0
  %2654 = vmatmul.mubr.bf16.gmra.mxu0 %v2517
  %v2655 = vpop.f32.mrf.mxu0
  %v2656 = vadd.f32 0.0, %v2655
  %v2657 = vpop.f32.mrf.mxu0
  %v2658 = vpop.f32.mrf.mxu0
  %v2659 = vpop.f32.mrf.mxu0
  %2660 = vdwg.mxu0
  %v2662 = vsel %vm813, %v2620, 0
  %2664 = vmatprep.subr.bf16.mxu0 0
  %2665 = vmatpush1.bf16.msra.mxu0 0
  %2666 = vmatprep.subr.bf16.mxu0 0
  %2667 = vmatpush1.bf16.msra.mxu0 0
  %2668 = vmatprep.subr.bf16.mxu0 0
  %2669 = vmatpush1.bf16.msra.mxu0 0
  %2670 = vmatprep.subr.bf16.mxu0 0
  %2671 = vmatpush1.bf16.msra.mxu0 0
  %2672 = vmatprep.subr.bf16.mxu0 0
  %2673 = vmatpush1.bf16.msra.mxu0 %v702
  %2674 = vmatprep.subr.bf16.mxu0 0
  %2675 = vmatpush1.bf16.msra.mxu0 %v701
  %2676 = vmatprep.subr.bf16.mxu0 0
  %2677 = vmatpush1.bf16.msra.mxu0 %v700
  %2678 = vmatprep.subr.bf16.mxu0 0
  %2679 = vmatpush1.bf16.msra.mxu0 %v699
  %2680 = vmatprep.subr.bf16.mxu0 0
  %2681 = vmatpush2.bf16.msra.mxu0 0
  %2682 = vmatprep.subr.bf16.mxu0 0
  %2683 = vmatpush2.bf16.msra.mxu0 0
  %2684 = vmatprep.subr.bf16.mxu0 0
  %2685 = vmatpush2.bf16.msra.mxu0 0
  %2686 = vmatprep.subr.bf16.mxu0 0
  %2687 = vmatpush2.bf16.msra.mxu0 0
  %2688 = vmatprep.subr.bf16.mxu0 0
  %2689 = vmatpush2.bf16.msra.mxu0 0
  %2690 = vmatprep.subr.bf16.mxu0 0
  %2691 = vmatpush2.bf16.msra.mxu0 0
  %2692 = vmatprep.subr.bf16.mxu0 0
  %2693 = vmatpush2.bf16.msra.mxu0 0
  %2694 = vmatprep.subr.bf16.mxu0 0
  %2695 = vmatpush2.bf16.msra.mxu0 0
  %2696 = vmatprep.mubr.bf16.mxu0 0
  %2697 = vmatmul.mubr.bf16.gmra.mxu0 %v2662
  %v2698 = vpop.f32.mrf.mxu0
  %v2699 = vadd.f32 %v2656, %v2698
  %v2700 = vpop.f32.mrf.mxu0
  %v2701 = vpop.f32.mrf.mxu0
  %v2702 = vpop.f32.mrf.mxu0
  %2703 = vdwg.mxu0
  %v2704 = vadd.f32 %v2699, %v859
  %v2705 = vxor.u32 %v2704, 2147483648
  %v2706 = vmul.f32 %v2705, 1.442695
  %v2707 = vpow.pop %v2706
  %v2708 = vadd.f32 %v2707, 1.0
  %v2709 = vrcp.pop %v2708
  %v2710 = vmul.f32 1.0, %v2709
  %2711 = vmatprep.subr.bf16.mxu0 0
  %2712 = vmatpush1.bf16.msra.mxu0 0
  %2713 = vmatprep.subr.bf16.mxu0 0
  %2714 = vmatpush1.bf16.msra.mxu0 0
  %2715 = vmatprep.subr.bf16.mxu0 0
  %2716 = vmatpush1.bf16.msra.mxu0 0
  %2717 = vmatprep.subr.bf16.mxu0 0
  %2718 = vmatpush1.bf16.msra.mxu0 0
  %2719 = vmatprep.subr.bf16.mxu0 0
  %2720 = vmatpush1.bf16.msra.mxu0 0
  %2721 = vmatprep.subr.bf16.mxu0 0
  %2722 = vmatpush1.bf16.msra.mxu0 0
  %2723 = vmatprep.subr.bf16.mxu0 0
  %2724 = vmatpush1.bf16.msra.mxu0 %v754
  %2725 = vmatprep.subr.bf16.mxu0 0
  %2726 = vmatpush1.bf16.msra.mxu0 %v753
  %2727 = vmatprep.subr.bf16.mxu0 0
  %2728 = vmatpush2.bf16.msra.mxu0 0
  %2729 = vmatprep.subr.bf16.mxu0 0
  %2730 = vmatpush2.bf16.msra.mxu0 0
  %2731 = vmatprep.subr.bf16.mxu0 0
  %2732 = vmatpush2.bf16.msra.mxu0 0
  %2733 = vmatprep.subr.bf16.mxu0 0
  %2734 = vmatpush2.bf16.msra.mxu0 0
  %2735 = vmatprep.subr.bf16.mxu0 0
  %2736 = vmatpush2.bf16.msra.mxu0 0
  %2737 = vmatprep.subr.bf16.mxu0 0
  %2738 = vmatpush2.bf16.msra.mxu0 0
  %2739 = vmatprep.subr.bf16.mxu0 0
  %2740 = vmatpush2.bf16.msra.mxu0 0
  %2741 = vmatprep.subr.bf16.mxu0 0
  %2742 = vmatpush2.bf16.msra.mxu0 0
  %2743 = vmatprep.mubr.bf16.mxu0 0
  %2744 = vmatmul.mubr.bf16.gmra.mxu0 %v2517
  %v2745 = vpop.f32.mrf.mxu0
  %v2746 = vadd.f32 0.0, %v2745
  %v2747 = vpop.f32.mrf.mxu0
  %v2748 = vpop.f32.mrf.mxu0
  %v2749 = vpop.f32.mrf.mxu0
  %2750 = vdwg.mxu0
  %2751 = vmatprep.subr.bf16.mxu0 0
  %2752 = vmatpush1.bf16.msra.mxu0 0
  %2753 = vmatprep.subr.bf16.mxu0 0
  %2754 = vmatpush1.bf16.msra.mxu0 0
  %2755 = vmatprep.subr.bf16.mxu0 0
  %2756 = vmatpush1.bf16.msra.mxu0 0
  %2757 = vmatprep.subr.bf16.mxu0 0
  %2758 = vmatpush1.bf16.msra.mxu0 0
  %2759 = vmatprep.subr.bf16.mxu0 0
  %2760 = vmatpush1.bf16.msra.mxu0 %v715
  %2761 = vmatprep.subr.bf16.mxu0 0
  %2762 = vmatpush1.bf16.msra.mxu0 %v714
  %2763 = vmatprep.subr.bf16.mxu0 0
  %2764 = vmatpush1.bf16.msra.mxu0 %v713
  %2765 = vmatprep.subr.bf16.mxu0 0
  %2766 = vmatpush1.bf16.msra.mxu0 %v712
  %2767 = vmatprep.subr.bf16.mxu0 0
  %2768 = vmatpush2.bf16.msra.mxu0 0
  %2769 = vmatprep.subr.bf16.mxu0 0
  %2770 = vmatpush2.bf16.msra.mxu0 0
  %2771 = vmatprep.subr.bf16.mxu0 0
  %2772 = vmatpush2.bf16.msra.mxu0 0
  %2773 = vmatprep.subr.bf16.mxu0 0
  %2774 = vmatpush2.bf16.msra.mxu0 0
  %2775 = vmatprep.subr.bf16.mxu0 0
  %2776 = vmatpush2.bf16.msra.mxu0 0
  %2777 = vmatprep.subr.bf16.mxu0 0
  %2778 = vmatpush2.bf16.msra.mxu0 0
  %2779 = vmatprep.subr.bf16.mxu0 0
  %2780 = vmatpush2.bf16.msra.mxu0 0
  %2781 = vmatprep.subr.bf16.mxu0 0
  %2782 = vmatpush2.bf16.msra.mxu0 0
  %2783 = vmatprep.mubr.bf16.mxu0 0
  %2784 = vmatmul.mubr.bf16.gmra.mxu0 %v2662
  %v2785 = vpop.f32.mrf.mxu0
  %v2786 = vadd.f32 %v2746, %v2785
  %v2787 = vpop.f32.mrf.mxu0
  %v2788 = vpop.f32.mrf.mxu0
  %v2789 = vpop.f32.mrf.mxu0
  %2790 = vdwg.mxu0
  %v2791 = vadd.f32 %v2786, %v950
  %v2792 = vxor.u32 %v2791, 2147483648
  %v2793 = vmul.f32 %v2792, 1.442695
  %v2794 = vpow.pop %v2793
  %v2795 = vadd.f32 %v2794, 1.0
  %v2796 = vrcp.pop %v2795
  %v2797 = vmul.f32 1.0, %v2796
  %2798 = vmatprep.subr.bf16.mxu0 0
  %2799 = vmatpush1.bf16.msra.mxu0 0
  %2800 = vmatprep.subr.bf16.mxu0 0
  %2801 = vmatpush1.bf16.msra.mxu0 0
  %2802 = vmatprep.subr.bf16.mxu0 0
  %2803 = vmatpush1.bf16.msra.mxu0 0
  %2804 = vmatprep.subr.bf16.mxu0 0
  %2805 = vmatpush1.bf16.msra.mxu0 0
  %2806 = vmatprep.subr.bf16.mxu0 0
  %2807 = vmatpush1.bf16.msra.mxu0 0
  %2808 = vmatprep.subr.bf16.mxu0 0
  %2809 = vmatpush1.bf16.msra.mxu0 0
  %2810 = vmatprep.subr.bf16.mxu0 0
  %2811 = vmatpush1.bf16.msra.mxu0 %v761
  %2812 = vmatprep.subr.bf16.mxu0 0
  %2813 = vmatpush1.bf16.msra.mxu0 %v760
  %2814 = vmatprep.subr.bf16.mxu0 0
  %2815 = vmatpush2.bf16.msra.mxu0 0
  %2816 = vmatprep.subr.bf16.mxu0 0
  %2817 = vmatpush2.bf16.msra.mxu0 0
  %2818 = vmatprep.subr.bf16.mxu0 0
  %2819 = vmatpush2.bf16.msra.mxu0 0
  %2820 = vmatprep.subr.bf16.mxu0 0
  %2821 = vmatpush2.bf16.msra.mxu0 0
  %2822 = vmatprep.subr.bf16.mxu0 0
  %2823 = vmatpush2.bf16.msra.mxu0 0
  %2824 = vmatprep.subr.bf16.mxu0 0
  %2825 = vmatpush2.bf16.msra.mxu0 0
  %2826 = vmatprep.subr.bf16.mxu0 0
  %2827 = vmatpush2.bf16.msra.mxu0 0
  %2828 = vmatprep.subr.bf16.mxu0 0
  %2829 = vmatpush2.bf16.msra.mxu0 0
  %2830 = vmatprep.mubr.bf16.mxu0 0
  %2831 = vmatmul.mubr.bf16.gmra.mxu0 %v2517
  %v2832 = vpop.f32.mrf.mxu0
  %v2833 = vadd.f32 0.0, %v2832
  %v2834 = vpop.f32.mrf.mxu0
  %v2835 = vpop.f32.mrf.mxu0
  %v2836 = vpop.f32.mrf.mxu0
  %2837 = vdwg.mxu0
  %2838 = vmatprep.subr.bf16.mxu0 0
  %2839 = vmatpush1.bf16.msra.mxu0 0
  %2840 = vmatprep.subr.bf16.mxu0 0
  %2841 = vmatpush1.bf16.msra.mxu0 0
  %2842 = vmatprep.subr.bf16.mxu0 0
  %2843 = vmatpush1.bf16.msra.mxu0 0
  %2844 = vmatprep.subr.bf16.mxu0 0
  %2845 = vmatpush1.bf16.msra.mxu0 0
  %2846 = vmatprep.subr.bf16.mxu0 0
  %2847 = vmatpush1.bf16.msra.mxu0 %v728
  %2848 = vmatprep.subr.bf16.mxu0 0
  %2849 = vmatpush1.bf16.msra.mxu0 %v727
  %2850 = vmatprep.subr.bf16.mxu0 0
  %2851 = vmatpush1.bf16.msra.mxu0 %v726
  %2852 = vmatprep.subr.bf16.mxu0 0
  %2853 = vmatpush1.bf16.msra.mxu0 %v725
  %2854 = vmatprep.subr.bf16.mxu0 0
  %2855 = vmatpush2.bf16.msra.mxu0 0
  %2856 = vmatprep.subr.bf16.mxu0 0
  %2857 = vmatpush2.bf16.msra.mxu0 0
  %2858 = vmatprep.subr.bf16.mxu0 0
  %2859 = vmatpush2.bf16.msra.mxu0 0
  %2860 = vmatprep.subr.bf16.mxu0 0
  %2861 = vmatpush2.bf16.msra.mxu0 0
  %2862 = vmatprep.subr.bf16.mxu0 0
  %2863 = vmatpush2.bf16.msra.mxu0 0
  %2864 = vmatprep.subr.bf16.mxu0 0
  %2865 = vmatpush2.bf16.msra.mxu0 0
  %2866 = vmatprep.subr.bf16.mxu0 0
  %2867 = vmatpush2.bf16.msra.mxu0 0
  %2868 = vmatprep.subr.bf16.mxu0 0
  %2869 = vmatpush2.bf16.msra.mxu0 0
  %2870 = vmatprep.mubr.bf16.mxu0 0
  %2871 = vmatmul.mubr.bf16.gmra.mxu0 %v2662
  %v2872 = vpop.f32.mrf.mxu0
  %v2873 = vadd.f32 %v2833, %v2872
  %v2874 = vpop.f32.mrf.mxu0
  %v2875 = vpop.f32.mrf.mxu0
  %v2876 = vpop.f32.mrf.mxu0
  %2877 = vdwg.mxu0
  %v2878 = vadd.f32 %v2873, %v1041
  %v2879 = vtanh.pop %v2878
  %2880 = vmatprep.subr.bf16.mxu0 0
  %2881 = vmatpush1.bf16.msra.mxu0 0
  %2882 = vmatprep.subr.bf16.mxu0 0
  %2883 = vmatpush1.bf16.msra.mxu0 0
  %2884 = vmatprep.subr.bf16.mxu0 0
  %2885 = vmatpush1.bf16.msra.mxu0 0
  %2886 = vmatprep.subr.bf16.mxu0 0
  %2887 = vmatpush1.bf16.msra.mxu0 0
  %2888 = vmatprep.subr.bf16.mxu0 0
  %2889 = vmatpush1.bf16.msra.mxu0 0
  %2890 = vmatprep.subr.bf16.mxu0 0
  %2891 = vmatpush1.bf16.msra.mxu0 0
  %2892 = vmatprep.subr.bf16.mxu0 0
  %2893 = vmatpush1.bf16.msra.mxu0 %v768
  %2894 = vmatprep.subr.bf16.mxu0 0
  %2895 = vmatpush1.bf16.msra.mxu0 %v767
  %2896 = vmatprep.subr.bf16.mxu0 0
  %2897 = vmatpush2.bf16.msra.mxu0 0
  %2898 = vmatprep.subr.bf16.mxu0 0
  %2899 = vmatpush2.bf16.msra.mxu0 0
  %2900 = vmatprep.subr.bf16.mxu0 0
  %2901 = vmatpush2.bf16.msra.mxu0 0
  %2902 = vmatprep.subr.bf16.mxu0 0
  %2903 = vmatpush2.bf16.msra.mxu0 0
  %2904 = vmatprep.subr.bf16.mxu0 0
  %2905 = vmatpush2.bf16.msra.mxu0 0
  %2906 = vmatprep.subr.bf16.mxu0 0
  %2907 = vmatpush2.bf16.msra.mxu0 0
  %2908 = vmatprep.subr.bf16.mxu0 0
  %2909 = vmatpush2.bf16.msra.mxu0 0
  %2910 = vmatprep.subr.bf16.mxu0 0
  %2911 = vmatpush2.bf16.msra.mxu0 0
  %2912 = vmatprep.mubr.bf16.mxu0 0
  %2913 = vmatmul.mubr.bf16.gmra.mxu0 %v2517
  %v2914 = vpop.f32.mrf.mxu0
  %v2915 = vadd.f32 0.0, %v2914
  %v2916 = vpop.f32.mrf.mxu0
  %v2917 = vpop.f32.mrf.mxu0
  %v2918 = vpop.f32.mrf.mxu0
  %2919 = vdwg.mxu0
  %2920 = vmatprep.subr.bf16.mxu0 0
  %2921 = vmatpush1.bf16.msra.mxu0 0
  %2922 = vmatprep.subr.bf16.mxu0 0
  %2923 = vmatpush1.bf16.msra.mxu0 0
  %2924 = vmatprep.subr.bf16.mxu0 0
  %2925 = vmatpush1.bf16.msra.mxu0 0
  %2926 = vmatprep.subr.bf16.mxu0 0
  %2927 = vmatpush1.bf16.msra.mxu0 0
  %2928 = vmatprep.subr.bf16.mxu0 0
  %2929 = vmatpush1.bf16.msra.mxu0 %v741
  %2930 = vmatprep.subr.bf16.mxu0 0
  %2931 = vmatpush1.bf16.msra.mxu0 %v740
  %2932 = vmatprep.subr.bf16.mxu0 0
  %2933 = vmatpush1.bf16.msra.mxu0 %v739
  %2934 = vmatprep.subr.bf16.mxu0 0
  %2935 = vmatpush1.bf16.msra.mxu0 %v738
  %2936 = vmatprep.subr.bf16.mxu0 0
  %2937 = vmatpush2.bf16.msra.mxu0 0
  %2938 = vmatprep.subr.bf16.mxu0 0
  %2939 = vmatpush2.bf16.msra.mxu0 0
  %2940 = vmatprep.subr.bf16.mxu0 0
  %2941 = vmatpush2.bf16.msra.mxu0 0
  %2942 = vmatprep.subr.bf16.mxu0 0
  %2943 = vmatpush2.bf16.msra.mxu0 0
  %2944 = vmatprep.subr.bf16.mxu0 0
  %2945 = vmatpush2.bf16.msra.mxu0 0
  %2946 = vmatprep.subr.bf16.mxu0 0
  %2947 = vmatpush2.bf16.msra.mxu0 0
  %2948 = vmatprep.subr.bf16.mxu0 0
  %2949 = vmatpush2.bf16.msra.mxu0 0
  %2950 = vmatprep.subr.bf16.mxu0 0
  %2951 = vmatpush2.bf16.msra.mxu0 0
  %2952 = vmatprep.mubr.bf16.mxu0 0
  %2953 = vmatmul.mubr.bf16.gmra.mxu0 %v2662
  %v2954 = vpop.f32.mrf.mxu0
  %v2955 = vadd.f32 %v2915, %v2954
  %v2956 = vpop.f32.mrf.mxu0
  %v2957 = vpop.f32.mrf.mxu0
  %v2958 = vpop.f32.mrf.mxu0
  %2959 = vdwg.mxu0
  %v2960 = vadd.f32 %v2955, %v1127
  %v2961 = vxor.u32 %v2960, 2147483648
  %v2962 = vmul.f32 %v2961, 1.442695
  %v2963 = vpow.pop %v2962
  %v2964 = vadd.f32 %v2963, 1.0
  %v2965 = vrcp.pop %v2964
  %v2966 = vmul.f32 1.0, %v2965
  %v2967 = vmul.f32 %v2797, %v2512
  %v2968 = vmul.f32 %v2710, %v2879
  %v2969 = vadd.f32 %v2967, %v2968
  %v2970 = vtanh.pop %v2969
  %v2971 = vmul.f32 %v2966, %v2970
  %v2972 = vpack.c.bf16 %v2971, %v2971
  %v2974 = vsel %vm142, %v2972, 0
  %2976 = vmatprep.subr.bf16.mxu0 0
  %2977 = vmatpush1.bf16.xpose.msra.mxu0 0
  %2978 = vmatprep.subr.bf16.mxu0 0
  %2979 = vmatpush1.bf16.xpose.msra.mxu0 0
  %2980 = vmatprep.subr.bf16.mxu0 0
  %2981 = vmatpush1.bf16.xpose.msra.mxu0 0
  %2982 = vmatprep.subr.bf16.mxu0 0
  %2983 = vmatpush1.bf16.xpose.msra.mxu0 0
  %2984 = vmatprep.subr.bf16.mxu0 0
  %2985 = vmatpush1.bf16.xpose.msra.mxu0 0
  %2986 = vmatprep.subr.bf16.mxu0 0
  %2987 = vmatpush1.bf16.xpose.msra.mxu0 0
  %2988 = vmatprep.subr.bf16.mxu0 0
  %2989 = vmatpush1.bf16.xpose.msra.mxu0 0
  %2990 = vmatprep.subr.bf16.mxu0 0
  %2991 = vmatpush1.bf16.xpose.msra.mxu0 %v1145
  %2992 = vmatprep.subr.bf16.mxu0 0
  %2993 = vmatpush2.bf16.xpose.msra.mxu0 0
  %2994 = vmatprep.subr.bf16.mxu0 0
  %2995 = vmatpush2.bf16.xpose.msra.mxu0 0
  %2996 = vmatprep.subr.bf16.mxu0 0
  %2997 = vmatpush2.bf16.xpose.msra.mxu0 0
  %2998 = vmatprep.subr.bf16.mxu0 0
  %2999 = vmatpush2.bf16.xpose.msra.mxu0 0
  %3000 = vmatprep.subr.bf16.mxu0 0
  %3001 = vmatpush2.bf16.xpose.msra.mxu0 0
  %3002 = vmatprep.subr.bf16.mxu0 0
  %3003 = vmatpush2.bf16.xpose.msra.mxu0 0
  %3004 = vmatprep.subr.bf16.mxu0 0
  %3005 = vmatpush2.bf16.xpose.msra.mxu0 0
  %3006 = vmatprep.subr.bf16.mxu0 0
  %3007 = vmatpush2.bf16.xpose.msra.mxu0 0
  %3008 = vmatprep.mubr.bf16.mxu0 0
  %3009 = vmatmul.mubr.bf16.gmra.mxu0 %v2974
  %v3010 = vpop.f32.mrf.mxu0
  %v3011 = vadd.f32 0.0, %v3010
  %v3012 = vpop.f32.mrf.mxu0
  %v3013 = vpop.f32.mrf.mxu0
  %v3014 = vpop.f32.mrf.mxu0
  %3015 = vdwg.mxu0
  %v3016 = vsel %vm82, %v3011, -1e+09
  %v3017 = vsel %vm1188, %v3016, -inf
  %3018 = vmax.xlane.f32.xlu0 %v3017
  %v3019 = vpop.xlane.xlu0 %3018
  %v3020 = vsub.f32 %v3016, %v3019
  %v3021 = vmul.f32 %v3020, 1.442695
  %v3022 = vpow.pop %v3021
  %v3023 = vsel %vm1188, %v3022, 0.0
  %3024 = vadd.xlane.f32.xlu0 %v3023
  %v3025 = vpop.xlane.xlu0 %3024
  %v3026 = vrcp.pop %v3025
  %v3027 = vmul.f32 %v3022, %v3026
  %v3028 = vpack.c.bf16 %v3027, %v3027
  %v3030 = vsel %vm89, %v3028, 0
  %3032 = vmatprep.subr.bf16.mxu0 0
  %3033 = vmatpush1.bf16.msra.mxu0 0
  %3034 = vmatprep.subr.bf16.mxu0 0
  %3035 = vmatpush1.bf16.msra.mxu0 0
  %3036 = vmatprep.subr.bf16.mxu0 0
  %3037 = vmatpush1.bf16.msra.mxu0 0
  %3038 = vmatprep.subr.bf16.mxu0 0
  %3039 = vmatpush1.bf16.msra.mxu0 0
  %3040 = vmatprep.subr.bf16.mxu0 0
  %3041 = vmatpush1.bf16.msra.mxu0 0
  %3042 = vmatprep.subr.bf16.mxu0 0
  %3043 = vmatpush1.bf16.msra.mxu0 0
  %3044 = vmatprep.subr.bf16.mxu0 0
  %3045 = vmatpush1.bf16.msra.mxu0 0
  %3046 = vmatprep.subr.bf16.mxu0 0
  %3047 = vmatpush1.bf16.msra.mxu0 %v690
  %3048 = vmatprep.subr.bf16.mxu0 0
  %3049 = vmatpush2.bf16.msra.mxu0 0
  %3050 = vmatprep.subr.bf16.mxu0 0
  %3051 = vmatpush2.bf16.msra.mxu0 0
  %3052 = vmatprep.subr.bf16.mxu0 0
  %3053 = vmatpush2.bf16.msra.mxu0 0
  %3054 = vmatprep.subr.bf16.mxu0 0
  %3055 = vmatpush2.bf16.msra.mxu0 0
  %3056 = vmatprep.subr.bf16.mxu0 0
  %3057 = vmatpush2.bf16.msra.mxu0 0
  %3058 = vmatprep.subr.bf16.mxu0 0
  %3059 = vmatpush2.bf16.msra.mxu0 0
  %3060 = vmatprep.subr.bf16.mxu0 0
  %3061 = vmatpush2.bf16.msra.mxu0 0
  %3062 = vmatprep.subr.bf16.mxu0 0
  %3063 = vmatpush2.bf16.msra.mxu0 0
  %3064 = vmatprep.mubr.bf16.mxu0 0
  %3065 = vmatmul.mubr.bf16.gmra.mxu0 %v3030
  %v3066 = vpop.f32.mrf.mxu0
  %v3067 = vadd.f32 0.0, %v3066
  %v3068 = vpop.f32.mrf.mxu0
  %v3069 = vpop.f32.mrf.mxu0
  %v3070 = vpop.f32.mrf.mxu0
  %3071 = vdwg.mxu0
  %3073 = vrot.lane.b32.xlu0 %v3067, 32
  %v3074 = vpop.permute.xlu0 %3073
  %v3076 = vsel %vm142, %v2971, %v3074
  %v3077 = vpack.c.bf16 %v3076, %v3076
  %3078 = vmatprep.subr.bf16.mxu0 0
  %3079 = vmatpush1.bf16.msra.mxu0 0
  %3080 = vmatprep.subr.bf16.mxu0 0
  %3081 = vmatpush1.bf16.msra.mxu0 0
  %3082 = vmatprep.subr.bf16.mxu0 0
  %3083 = vmatpush1.bf16.msra.mxu0 0
  %3084 = vmatprep.subr.bf16.mxu0 0
  %3085 = vmatpush1.bf16.msra.mxu0 0
  %3086 = vmatprep.subr.bf16.mxu0 0
  %3087 = vmatpush1.bf16.msra.mxu0 0
  %3088 = vmatprep.subr.bf16.mxu0 0
  %3089 = vmatpush1.bf16.msra.mxu0 0
  %3090 = vmatprep.subr.bf16.mxu0 0
  %3091 = vmatpush1.bf16.msra.mxu0 %v747
  %3092 = vmatprep.subr.bf16.mxu0 0
  %3093 = vmatpush1.bf16.msra.mxu0 %v746
  %3094 = vmatprep.subr.bf16.mxu0 0
  %3095 = vmatpush2.bf16.msra.mxu0 0
  %3096 = vmatprep.subr.bf16.mxu0 0
  %3097 = vmatpush2.bf16.msra.mxu0 0
  %3098 = vmatprep.subr.bf16.mxu0 0
  %3099 = vmatpush2.bf16.msra.mxu0 0
  %3100 = vmatprep.subr.bf16.mxu0 0
  %3101 = vmatpush2.bf16.msra.mxu0 0
  %3102 = vmatprep.subr.bf16.mxu0 0
  %3103 = vmatpush2.bf16.msra.mxu0 0
  %3104 = vmatprep.subr.bf16.mxu0 0
  %3105 = vmatpush2.bf16.msra.mxu0 0
  %3106 = vmatprep.subr.bf16.mxu0 0
  %3107 = vmatpush2.bf16.msra.mxu0 0
  %3108 = vmatprep.subr.bf16.mxu0 0
  %3109 = vmatpush2.bf16.msra.mxu0 0
  %3110 = vmatprep.mubr.bf16.mxu0 0
  %3111 = vmatmul.mubr.bf16.gmra.mxu0 %v2974
  %v3112 = vpop.f32.mrf.mxu0
  %v3113 = vadd.f32 0.0, %v3112
  %v3114 = vpop.f32.mrf.mxu0
  %v3115 = vpop.f32.mrf.mxu0
  %v3116 = vpop.f32.mrf.mxu0
  %3117 = vdwg.mxu0
  %v3119 = vsel %vm813, %v3077, 0
  %3121 = vmatprep.subr.bf16.mxu0 0
  %3122 = vmatpush1.bf16.msra.mxu0 0
  %3123 = vmatprep.subr.bf16.mxu0 0
  %3124 = vmatpush1.bf16.msra.mxu0 0
  %3125 = vmatprep.subr.bf16.mxu0 0
  %3126 = vmatpush1.bf16.msra.mxu0 0
  %3127 = vmatprep.subr.bf16.mxu0 0
  %3128 = vmatpush1.bf16.msra.mxu0 0
  %3129 = vmatprep.subr.bf16.mxu0 0
  %3130 = vmatpush1.bf16.msra.mxu0 %v702
  %3131 = vmatprep.subr.bf16.mxu0 0
  %3132 = vmatpush1.bf16.msra.mxu0 %v701
  %3133 = vmatprep.subr.bf16.mxu0 0
  %3134 = vmatpush1.bf16.msra.mxu0 %v700
  %3135 = vmatprep.subr.bf16.mxu0 0
  %3136 = vmatpush1.bf16.msra.mxu0 %v699
  %3137 = vmatprep.subr.bf16.mxu0 0
  %3138 = vmatpush2.bf16.msra.mxu0 0
  %3139 = vmatprep.subr.bf16.mxu0 0
  %3140 = vmatpush2.bf16.msra.mxu0 0
  %3141 = vmatprep.subr.bf16.mxu0 0
  %3142 = vmatpush2.bf16.msra.mxu0 0
  %3143 = vmatprep.subr.bf16.mxu0 0
  %3144 = vmatpush2.bf16.msra.mxu0 0
  %3145 = vmatprep.subr.bf16.mxu0 0
  %3146 = vmatpush2.bf16.msra.mxu0 0
  %3147 = vmatprep.subr.bf16.mxu0 0
  %3148 = vmatpush2.bf16.msra.mxu0 0
  %3149 = vmatprep.subr.bf16.mxu0 0
  %3150 = vmatpush2.bf16.msra.mxu0 0
  %3151 = vmatprep.subr.bf16.mxu0 0
  %3152 = vmatpush2.bf16.msra.mxu0 0
  %3153 = vmatprep.mubr.bf16.mxu0 0
  %3154 = vmatmul.mubr.bf16.gmra.mxu0 %v3119
  %v3155 = vpop.f32.mrf.mxu0
  %v3156 = vadd.f32 %v3113, %v3155
  %v3157 = vpop.f32.mrf.mxu0
  %v3158 = vpop.f32.mrf.mxu0
  %v3159 = vpop.f32.mrf.mxu0
  %3160 = vdwg.mxu0
  %v3161 = vadd.f32 %v3156, %v859
  %v3162 = vxor.u32 %v3161, 2147483648
  %v3163 = vmul.f32 %v3162, 1.442695
  %v3164 = vpow.pop %v3163
  %v3165 = vadd.f32 %v3164, 1.0
  %v3166 = vrcp.pop %v3165
  %v3167 = vmul.f32 1.0, %v3166
  %3168 = vmatprep.subr.bf16.mxu0 0
  %3169 = vmatpush1.bf16.msra.mxu0 0
  %3170 = vmatprep.subr.bf16.mxu0 0
  %3171 = vmatpush1.bf16.msra.mxu0 0
  %3172 = vmatprep.subr.bf16.mxu0 0
  %3173 = vmatpush1.bf16.msra.mxu0 0
  %3174 = vmatprep.subr.bf16.mxu0 0
  %3175 = vmatpush1.bf16.msra.mxu0 0
  %3176 = vmatprep.subr.bf16.mxu0 0
  %3177 = vmatpush1.bf16.msra.mxu0 0
  %3178 = vmatprep.subr.bf16.mxu0 0
  %3179 = vmatpush1.bf16.msra.mxu0 0
  %3180 = vmatprep.subr.bf16.mxu0 0
  %3181 = vmatpush1.bf16.msra.mxu0 %v754
  %3182 = vmatprep.subr.bf16.mxu0 0
  %3183 = vmatpush1.bf16.msra.mxu0 %v753
  %3184 = vmatprep.subr.bf16.mxu0 0
  %3185 = vmatpush2.bf16.msra.mxu0 0
  %3186 = vmatprep.subr.bf16.mxu0 0
  %3187 = vmatpush2.bf16.msra.mxu0 0
  %3188 = vmatprep.subr.bf16.mxu0 0
  %3189 = vmatpush2.bf16.msra.mxu0 0
  %3190 = vmatprep.subr.bf16.mxu0 0
  %3191 = vmatpush2.bf16.msra.mxu0 0
  %3192 = vmatprep.subr.bf16.mxu0 0
  %3193 = vmatpush2.bf16.msra.mxu0 0
  %3194 = vmatprep.subr.bf16.mxu0 0
  %3195 = vmatpush2.bf16.msra.mxu0 0
  %3196 = vmatprep.subr.bf16.mxu0 0
  %3197 = vmatpush2.bf16.msra.mxu0 0
  %3198 = vmatprep.subr.bf16.mxu0 0
  %3199 = vmatpush2.bf16.msra.mxu0 0
  %3200 = vmatprep.mubr.bf16.mxu0 0
  %3201 = vmatmul.mubr.bf16.gmra.mxu0 %v2974
  %v3202 = vpop.f32.mrf.mxu0
  %v3203 = vadd.f32 0.0, %v3202
  %v3204 = vpop.f32.mrf.mxu0
  %v3205 = vpop.f32.mrf.mxu0
  %v3206 = vpop.f32.mrf.mxu0
  %3207 = vdwg.mxu0
  %3208 = vmatprep.subr.bf16.mxu0 0
  %3209 = vmatpush1.bf16.msra.mxu0 0
  %3210 = vmatprep.subr.bf16.mxu0 0
  %3211 = vmatpush1.bf16.msra.mxu0 0
  %3212 = vmatprep.subr.bf16.mxu0 0
  %3213 = vmatpush1.bf16.msra.mxu0 0
  %3214 = vmatprep.subr.bf16.mxu0 0
  %3215 = vmatpush1.bf16.msra.mxu0 0
  %3216 = vmatprep.subr.bf16.mxu0 0
  %3217 = vmatpush1.bf16.msra.mxu0 %v715
  %3218 = vmatprep.subr.bf16.mxu0 0
  %3219 = vmatpush1.bf16.msra.mxu0 %v714
  %3220 = vmatprep.subr.bf16.mxu0 0
  %3221 = vmatpush1.bf16.msra.mxu0 %v713
  %3222 = vmatprep.subr.bf16.mxu0 0
  %3223 = vmatpush1.bf16.msra.mxu0 %v712
  %3224 = vmatprep.subr.bf16.mxu0 0
  %3225 = vmatpush2.bf16.msra.mxu0 0
  %3226 = vmatprep.subr.bf16.mxu0 0
  %3227 = vmatpush2.bf16.msra.mxu0 0
  %3228 = vmatprep.subr.bf16.mxu0 0
  %3229 = vmatpush2.bf16.msra.mxu0 0
  %3230 = vmatprep.subr.bf16.mxu0 0
  %3231 = vmatpush2.bf16.msra.mxu0 0
  %3232 = vmatprep.subr.bf16.mxu0 0
  %3233 = vmatpush2.bf16.msra.mxu0 0
  %3234 = vmatprep.subr.bf16.mxu0 0
  %3235 = vmatpush2.bf16.msra.mxu0 0
  %3236 = vmatprep.subr.bf16.mxu0 0
  %3237 = vmatpush2.bf16.msra.mxu0 0
  %3238 = vmatprep.subr.bf16.mxu0 0
  %3239 = vmatpush2.bf16.msra.mxu0 0
  %3240 = vmatprep.mubr.bf16.mxu0 0
  %3241 = vmatmul.mubr.bf16.gmra.mxu0 %v3119
  %v3242 = vpop.f32.mrf.mxu0
  %v3243 = vadd.f32 %v3203, %v3242
  %v3244 = vpop.f32.mrf.mxu0
  %v3245 = vpop.f32.mrf.mxu0
  %v3246 = vpop.f32.mrf.mxu0
  %3247 = vdwg.mxu0
  %v3248 = vadd.f32 %v3243, %v950
  %v3249 = vxor.u32 %v3248, 2147483648
  %v3250 = vmul.f32 %v3249, 1.442695
  %v3251 = vpow.pop %v3250
  %v3252 = vadd.f32 %v3251, 1.0
  %v3253 = vrcp.pop %v3252
  %v3254 = vmul.f32 1.0, %v3253
  %3255 = vmatprep.subr.bf16.mxu0 0
  %3256 = vmatpush1.bf16.msra.mxu0 0
  %3257 = vmatprep.subr.bf16.mxu0 0
  %3258 = vmatpush1.bf16.msra.mxu0 0
  %3259 = vmatprep.subr.bf16.mxu0 0
  %3260 = vmatpush1.bf16.msra.mxu0 0
  %3261 = vmatprep.subr.bf16.mxu0 0
  %3262 = vmatpush1.bf16.msra.mxu0 0
  %3263 = vmatprep.subr.bf16.mxu0 0
  %3264 = vmatpush1.bf16.msra.mxu0 0
  %3265 = vmatprep.subr.bf16.mxu0 0
  %3266 = vmatpush1.bf16.msra.mxu0 0
  %3267 = vmatprep.subr.bf16.mxu0 0
  %3268 = vmatpush1.bf16.msra.mxu0 %v761
  %3269 = vmatprep.subr.bf16.mxu0 0
  %3270 = vmatpush1.bf16.msra.mxu0 %v760
  %3271 = vmatprep.subr.bf16.mxu0 0
  %3272 = vmatpush2.bf16.msra.mxu0 0
  %3273 = vmatprep.subr.bf16.mxu0 0
  %3274 = vmatpush2.bf16.msra.mxu0 0
  %3275 = vmatprep.subr.bf16.mxu0 0
  %3276 = vmatpush2.bf16.msra.mxu0 0
  %3277 = vmatprep.subr.bf16.mxu0 0
  %3278 = vmatpush2.bf16.msra.mxu0 0
  %3279 = vmatprep.subr.bf16.mxu0 0
  %3280 = vmatpush2.bf16.msra.mxu0 0
  %3281 = vmatprep.subr.bf16.mxu0 0
  %3282 = vmatpush2.bf16.msra.mxu0 0
  %3283 = vmatprep.subr.bf16.mxu0 0
  %3284 = vmatpush2.bf16.msra.mxu0 0
  %3285 = vmatprep.subr.bf16.mxu0 0
  %3286 = vmatpush2.bf16.msra.mxu0 0
  %3287 = vmatprep.mubr.bf16.mxu0 0
  %3288 = vmatmul.mubr.bf16.gmra.mxu0 %v2974
  %v3289 = vpop.f32.mrf.mxu0
  %v3290 = vadd.f32 0.0, %v3289
  %v3291 = vpop.f32.mrf.mxu0
  %v3292 = vpop.f32.mrf.mxu0
  %v3293 = vpop.f32.mrf.mxu0
  %3294 = vdwg.mxu0
  %3295 = vmatprep.subr.bf16.mxu0 0
  %3296 = vmatpush1.bf16.msra.mxu0 0
  %3297 = vmatprep.subr.bf16.mxu0 0
  %3298 = vmatpush1.bf16.msra.mxu0 0
  %3299 = vmatprep.subr.bf16.mxu0 0
  %3300 = vmatpush1.bf16.msra.mxu0 0
  %3301 = vmatprep.subr.bf16.mxu0 0
  %3302 = vmatpush1.bf16.msra.mxu0 0
  %3303 = vmatprep.subr.bf16.mxu0 0
  %3304 = vmatpush1.bf16.msra.mxu0 %v728
  %3305 = vmatprep.subr.bf16.mxu0 0
  %3306 = vmatpush1.bf16.msra.mxu0 %v727
  %3307 = vmatprep.subr.bf16.mxu0 0
  %3308 = vmatpush1.bf16.msra.mxu0 %v726
  %3309 = vmatprep.subr.bf16.mxu0 0
  %3310 = vmatpush1.bf16.msra.mxu0 %v725
  %3311 = vmatprep.subr.bf16.mxu0 0
  %3312 = vmatpush2.bf16.msra.mxu0 0
  %3313 = vmatprep.subr.bf16.mxu0 0
  %3314 = vmatpush2.bf16.msra.mxu0 0
  %3315 = vmatprep.subr.bf16.mxu0 0
  %3316 = vmatpush2.bf16.msra.mxu0 0
  %3317 = vmatprep.subr.bf16.mxu0 0
  %3318 = vmatpush2.bf16.msra.mxu0 0
  %3319 = vmatprep.subr.bf16.mxu0 0
  %3320 = vmatpush2.bf16.msra.mxu0 0
  %3321 = vmatprep.subr.bf16.mxu0 0
  %3322 = vmatpush2.bf16.msra.mxu0 0
  %3323 = vmatprep.subr.bf16.mxu0 0
  %3324 = vmatpush2.bf16.msra.mxu0 0
  %3325 = vmatprep.subr.bf16.mxu0 0
  %3326 = vmatpush2.bf16.msra.mxu0 0
  %3327 = vmatprep.mubr.bf16.mxu0 0
  %3328 = vmatmul.mubr.bf16.gmra.mxu0 %v3119
  %v3329 = vpop.f32.mrf.mxu0
  %v3330 = vadd.f32 %v3290, %v3329
  %v3331 = vpop.f32.mrf.mxu0
  %v3332 = vpop.f32.mrf.mxu0
  %v3333 = vpop.f32.mrf.mxu0
  %3334 = vdwg.mxu0
  %v3335 = vadd.f32 %v3330, %v1041
  %v3336 = vtanh.pop %v3335
  %3337 = vmatprep.subr.bf16.mxu0 0
  %3338 = vmatpush1.bf16.msra.mxu0 0
  %3339 = vmatprep.subr.bf16.mxu0 0
  %3340 = vmatpush1.bf16.msra.mxu0 0
  %3341 = vmatprep.subr.bf16.mxu0 0
  %3342 = vmatpush1.bf16.msra.mxu0 0
  %3343 = vmatprep.subr.bf16.mxu0 0
  %3344 = vmatpush1.bf16.msra.mxu0 0
  %3345 = vmatprep.subr.bf16.mxu0 0
  %3346 = vmatpush1.bf16.msra.mxu0 0
  %3347 = vmatprep.subr.bf16.mxu0 0
  %3348 = vmatpush1.bf16.msra.mxu0 0
  %3349 = vmatprep.subr.bf16.mxu0 0
  %3350 = vmatpush1.bf16.msra.mxu0 %v768
  %3351 = vmatprep.subr.bf16.mxu0 0
  %3352 = vmatpush1.bf16.msra.mxu0 %v767
  %3353 = vmatprep.subr.bf16.mxu0 0
  %3354 = vmatpush2.bf16.msra.mxu0 0
  %3355 = vmatprep.subr.bf16.mxu0 0
  %3356 = vmatpush2.bf16.msra.mxu0 0
  %3357 = vmatprep.subr.bf16.mxu0 0
  %3358 = vmatpush2.bf16.msra.mxu0 0
  %3359 = vmatprep.subr.bf16.mxu0 0
  %3360 = vmatpush2.bf16.msra.mxu0 0
  %3361 = vmatprep.subr.bf16.mxu0 0
  %3362 = vmatpush2.bf16.msra.mxu0 0
  %3363 = vmatprep.subr.bf16.mxu0 0
  %3364 = vmatpush2.bf16.msra.mxu0 0
  %3365 = vmatprep.subr.bf16.mxu0 0
  %3366 = vmatpush2.bf16.msra.mxu0 0
  %3367 = vmatprep.subr.bf16.mxu0 0
  %3368 = vmatpush2.bf16.msra.mxu0 0
  %3369 = vmatprep.mubr.bf16.mxu0 0
  %3370 = vmatmul.mubr.bf16.gmra.mxu0 %v2974
  %v3371 = vpop.f32.mrf.mxu0
  %v3372 = vadd.f32 0.0, %v3371
  %v3373 = vpop.f32.mrf.mxu0
  %v3374 = vpop.f32.mrf.mxu0
  %v3375 = vpop.f32.mrf.mxu0
  %3376 = vdwg.mxu0
  %3377 = vmatprep.subr.bf16.mxu0 0
  %3378 = vmatpush1.bf16.msra.mxu0 0
  %3379 = vmatprep.subr.bf16.mxu0 0
  %3380 = vmatpush1.bf16.msra.mxu0 0
  %3381 = vmatprep.subr.bf16.mxu0 0
  %3382 = vmatpush1.bf16.msra.mxu0 0
  %3383 = vmatprep.subr.bf16.mxu0 0
  %3384 = vmatpush1.bf16.msra.mxu0 0
  %3385 = vmatprep.subr.bf16.mxu0 0
  %3386 = vmatpush1.bf16.msra.mxu0 %v741
  %3387 = vmatprep.subr.bf16.mxu0 0
  %3388 = vmatpush1.bf16.msra.mxu0 %v740
  %3389 = vmatprep.subr.bf16.mxu0 0
  %3390 = vmatpush1.bf16.msra.mxu0 %v739
  %3391 = vmatprep.subr.bf16.mxu0 0
  %3392 = vmatpush1.bf16.msra.mxu0 %v738
  %3393 = vmatprep.subr.bf16.mxu0 0
  %3394 = vmatpush2.bf16.msra.mxu0 0
  %3395 = vmatprep.subr.bf16.mxu0 0
  %3396 = vmatpush2.bf16.msra.mxu0 0
  %3397 = vmatprep.subr.bf16.mxu0 0
  %3398 = vmatpush2.bf16.msra.mxu0 0
  %3399 = vmatprep.subr.bf16.mxu0 0
  %3400 = vmatpush2.bf16.msra.mxu0 0
  %3401 = vmatprep.subr.bf16.mxu0 0
  %3402 = vmatpush2.bf16.msra.mxu0 0
  %3403 = vmatprep.subr.bf16.mxu0 0
  %3404 = vmatpush2.bf16.msra.mxu0 0
  %3405 = vmatprep.subr.bf16.mxu0 0
  %3406 = vmatpush2.bf16.msra.mxu0 0
  %3407 = vmatprep.subr.bf16.mxu0 0
  %3408 = vmatpush2.bf16.msra.mxu0 0
  %3409 = vmatprep.mubr.bf16.mxu0 0
  %3410 = vmatmul.mubr.bf16.gmra.mxu0 %v3119
  %v3411 = vpop.f32.mrf.mxu0
  %v3412 = vadd.f32 %v3372, %v3411
  %v3413 = vpop.f32.mrf.mxu0
  %v3414 = vpop.f32.mrf.mxu0
  %v3415 = vpop.f32.mrf.mxu0
  %3416 = vdwg.mxu0
  %v3417 = vadd.f32 %v3412, %v1127
  %v3418 = vxor.u32 %v3417, 2147483648
  %v3419 = vmul.f32 %v3418, 1.442695
  %v3420 = vpow.pop %v3419
  %v3421 = vadd.f32 %v3420, 1.0
  %v3422 = vrcp.pop %v3421
  %v3423 = vmul.f32 1.0, %v3422
  %v3424 = vmul.f32 %v3254, %v2969
  %v3425 = vmul.f32 %v3167, %v3336
  %v3426 = vadd.f32 %v3424, %v3425
  %v3427 = vtanh.pop %v3426
  %v3428 = vmul.f32 %v3423, %v3427
  %v3429 = vpack.c.bf16 %v3428, %v3428
  %v3431 = vsel %vm142, %v3429, 0
  %3433 = vmatprep.subr.bf16.mxu0 0
  %3434 = vmatpush1.bf16.xpose.msra.mxu0 0
  %3435 = vmatprep.subr.bf16.mxu0 0
  %3436 = vmatpush1.bf16.xpose.msra.mxu0 0
  %3437 = vmatprep.subr.bf16.mxu0 0
  %3438 = vmatpush1.bf16.xpose.msra.mxu0 0
  %3439 = vmatprep.subr.bf16.mxu0 0
  %3440 = vmatpush1.bf16.xpose.msra.mxu0 0
  %3441 = vmatprep.subr.bf16.mxu0 0
  %3442 = vmatpush1.bf16.xpose.msra.mxu0 0
  %3443 = vmatprep.subr.bf16.mxu0 0
  %3444 = vmatpush1.bf16.xpose.msra.mxu0 0
  %3445 = vmatprep.subr.bf16.mxu0 0
  %3446 = vmatpush1.bf16.xpose.msra.mxu0 0
  %3447 = vmatprep.subr.bf16.mxu0 0
  %3448 = vmatpush1.bf16.xpose.msra.mxu0 %v1145
  %3449 = vmatprep.subr.bf16.mxu0 0
  %3450 = vmatpush2.bf16.xpose.msra.mxu0 0
  %3451 = vmatprep.subr.bf16.mxu0 0
  %3452 = vmatpush2.bf16.xpose.msra.mxu0 0
  %3453 = vmatprep.subr.bf16.mxu0 0
  %3454 = vmatpush2.bf16.xpose.msra.mxu0 0
  %3455 = vmatprep.subr.bf16.mxu0 0
  %3456 = vmatpush2.bf16.xpose.msra.mxu0 0
  %3457 = vmatprep.subr.bf16.mxu0 0
  %3458 = vmatpush2.bf16.xpose.msra.mxu0 0
  %3459 = vmatprep.subr.bf16.mxu0 0
  %3460 = vmatpush2.bf16.xpose.msra.mxu0 0
  %3461 = vmatprep.subr.bf16.mxu0 0
  %3462 = vmatpush2.bf16.xpose.msra.mxu0 0
  %3463 = vmatprep.subr.bf16.mxu0 0
  %3464 = vmatpush2.bf16.xpose.msra.mxu0 0
  %3465 = vmatprep.mubr.bf16.mxu0 0
  %3466 = vmatmul.mubr.bf16.gmra.mxu0 %v3431
  %v3467 = vpop.f32.mrf.mxu0
  %v3468 = vadd.f32 0.0, %v3467
  %v3469 = vpop.f32.mrf.mxu0
  %v3470 = vpop.f32.mrf.mxu0
  %v3471 = vpop.f32.mrf.mxu0
  %3472 = vdwg.mxu0
  %v3473 = vsel %vm82, %v3468, -1e+09
  %v3474 = vsel %vm1188, %v3473, -inf
  %3475 = vmax.xlane.f32.xlu0 %v3474
  %v3476 = vpop.xlane.xlu0 %3475
  %v3477 = vsub.f32 %v3473, %v3476
  %v3478 = vmul.f32 %v3477, 1.442695
  %v3479 = vpow.pop %v3478
  %v3480 = vsel %vm1188, %v3479, 0.0
  %3481 = vadd.xlane.f32.xlu0 %v3480
  %v3482 = vpop.xlane.xlu0 %3481
  %v3483 = vrcp.pop %v3482
  %v3484 = vmul.f32 %v3479, %v3483
  %v3485 = vpack.c.bf16 %v3484, %v3484
  %v3487 = vsel %vm89, %v3485, 0
  %3489 = vmatprep.subr.bf16.mxu0 0
  %3490 = vmatpush1.bf16.msra.mxu0 0
  %3491 = vmatprep.subr.bf16.mxu0 0
  %3492 = vmatpush1.bf16.msra.mxu0 0
  %3493 = vmatprep.subr.bf16.mxu0 0
  %3494 = vmatpush1.bf16.msra.mxu0 0
  %3495 = vmatprep.subr.bf16.mxu0 0
  %3496 = vmatpush1.bf16.msra.mxu0 0
  %3497 = vmatprep.subr.bf16.mxu0 0
  %3498 = vmatpush1.bf16.msra.mxu0 0
  %3499 = vmatprep.subr.bf16.mxu0 0
  %3500 = vmatpush1.bf16.msra.mxu0 0
  %3501 = vmatprep.subr.bf16.mxu0 0
  %3502 = vmatpush1.bf16.msra.mxu0 0
  %3503 = vmatprep.subr.bf16.mxu0 0
  %3504 = vmatpush1.bf16.msra.mxu0 %v690
  %3505 = vmatprep.subr.bf16.mxu0 0
  %3506 = vmatpush2.bf16.msra.mxu0 0
  %3507 = vmatprep.subr.bf16.mxu0 0
  %3508 = vmatpush2.bf16.msra.mxu0 0
  %3509 = vmatprep.subr.bf16.mxu0 0
  %3510 = vmatpush2.bf16.msra.mxu0 0
  %3511 = vmatprep.subr.bf16.mxu0 0
  %3512 = vmatpush2.bf16.msra.mxu0 0
  %3513 = vmatprep.subr.bf16.mxu0 0
  %3514 = vmatpush2.bf16.msra.mxu0 0
  %3515 = vmatprep.subr.bf16.mxu0 0
  %3516 = vmatpush2.bf16.msra.mxu0 0
  %3517 = vmatprep.subr.bf16.mxu0 0
  %3518 = vmatpush2.bf16.msra.mxu0 0
  %3519 = vmatprep.subr.bf16.mxu0 0
  %3520 = vmatpush2.bf16.msra.mxu0 0
  %3521 = vmatprep.mubr.bf16.mxu0 0
  %3522 = vmatmul.mubr.bf16.gmra.mxu0 %v3487
  %v3523 = vpop.f32.mrf.mxu0
  %v3524 = vadd.f32 0.0, %v3523
  %v3525 = vpop.f32.mrf.mxu0
  %v3526 = vpop.f32.mrf.mxu0
  %v3527 = vpop.f32.mrf.mxu0
  %3528 = vdwg.mxu0
  %3530 = vrot.lane.b32.xlu0 %v3524, 32
  %v3531 = vpop.permute.xlu0 %3530
  %v3533 = vsel %vm142, %v3428, %v3531
  %v3534 = vpack.c.bf16 %v3533, %v3533
  %v3535 = vld [vmem:[%s15] sm:$0xff]
  %v3536 = vld [vmem:[%s15 + $0x8] sm:$0xff]
  %v3537 = vld [vmem:[%s15 + $0x10] sm:$0xff]
  %v3538 = vld [vmem:[%s15 + $0x18] sm:$0xff]
  %v3539 = vld [vmem:[%s15 + $0x20] sm:$0xff]
  %v3540 = vld [vmem:[%s15 + $0x28] sm:$0xff]
  %v3541 = vld [vmem:[%s15 + $0x30] sm:$0xff]
  %v3542 = vld [vmem:[%s15 + $0x38] sm:$0xff]
  %v3543 = vpack.c.bf16 %v3536, %v3535
  %v3544 = vpack.c.bf16 %v3538, %v3537
  %v3545 = vpack.c.bf16 %v3540, %v3539
  %v3546 = vpack.c.bf16 %v3542, %v3541
  %v3547 = vld [vmem:[%s16] sm:$0x1]
  %v3549 = vlaneseq
  %v3550 = vshrl.u32 %v3549, 7
  %v3551 = vsub.s32 0, %v3550
  %v3552 = vrot.slane %v3547, %v3551
  %v3555 = vsel %vm813, %v3534, 0
  %3557 = vmatprep.subr.bf16.mxu0 0
  %3558 = vmatpush1.bf16.msra.mxu0 0
  %3559 = vmatprep.subr.bf16.mxu0 0
  %3560 = vmatpush1.bf16.msra.mxu0 0
  %3561 = vmatprep.subr.bf16.mxu0 0
  %3562 = vmatpush1.bf16.msra.mxu0 0
  %3563 = vmatprep.subr.bf16.mxu0 0
  %3564 = vmatpush1.bf16.msra.mxu0 0
  %3565 = vmatprep.subr.bf16.mxu0 0
  %3566 = vmatpush1.bf16.msra.mxu0 %v3546
  %3567 = vmatprep.subr.bf16.mxu0 0
  %3568 = vmatpush1.bf16.msra.mxu0 %v3545
  %3569 = vmatprep.subr.bf16.mxu0 0
  %3570 = vmatpush1.bf16.msra.mxu0 %v3544
  %3571 = vmatprep.subr.bf16.mxu0 0
  %3572 = vmatpush1.bf16.msra.mxu0 %v3543
  %3573 = vmatprep.subr.bf16.mxu0 0
  %3574 = vmatpush2.bf16.msra.mxu0 0
  %3575 = vmatprep.subr.bf16.mxu0 0
  %3576 = vmatpush2.bf16.msra.mxu0 0
  %3577 = vmatprep.subr.bf16.mxu0 0
  %3578 = vmatpush2.bf16.msra.mxu0 0
  %3579 = vmatprep.subr.bf16.mxu0 0
  %3580 = vmatpush2.bf16.msra.mxu0 0
  %3581 = vmatprep.subr.bf16.mxu0 0
  %3582 = vmatpush2.bf16.msra.mxu0 0
  %3583 = vmatprep.subr.bf16.mxu0 0
  %3584 = vmatpush2.bf16.msra.mxu0 0
  %3585 = vmatprep.subr.bf16.mxu0 0
  %3586 = vmatpush2.bf16.msra.mxu0 0
  %3587 = vmatprep.subr.bf16.mxu0 0
  %3588 = vmatpush2.bf16.msra.mxu0 0
  %3589 = vmatprep.mubr.bf16.mxu0 0
  %3590 = vmatmul.mubr.bf16.gmra.mxu0 %v3555
  %v3591 = vpop.f32.mrf.mxu0
  %v3592 = vadd.f32 %v3552, %v3591
  %v3593 = vpop.f32.mrf.mxu0
  %v3594 = vpop.f32.mrf.mxu0
  %v3595 = vpop.f32.mrf.mxu0
  %3596 = vdwg.mxu0
  %v3597 = vmax.f32 %v3592, 0.0
  %v3598 = vpack.c.bf16 %v3597, %v3597
  %v3599 = vld [vmem:[%s17] sm:$0xff]
  %v3600 = vld [vmem:[%s17 + $0x8] sm:$0xff]
  %v3601 = vld [vmem:[%s17 + $0x10] sm:$0xff]
  %v3602 = vld [vmem:[%s17 + $0x18] sm:$0xff]
  %v3603 = vpack.c.bf16 %v3600, %v3599
  %v3604 = vpack.c.bf16 %v3602, %v3601
  %v3605 = vld [vmem:[%s18] sm:$0x1]
  %v3607 = vlaneseq
  %v3608 = vshrl.u32 %v3607, 7
  %v3609 = vsub.s32 0, %v3608
  %v3610 = vrot.slane %v3605, %v3609
  %v3613 = vsel %vm142, %v3598, 0
  %3615 = vmatprep.subr.bf16.mxu0 0
  %3616 = vmatpush1.bf16.msra.mxu0 0
  %3617 = vmatprep.subr.bf16.mxu0 0
  %3618 = vmatpush1.bf16.msra.mxu0 0
  %3619 = vmatprep.subr.bf16.mxu0 0
  %3620 = vmatpush1.bf16.msra.mxu0 0
  %3621 = vmatprep.subr.bf16.mxu0 0
  %3622 = vmatpush1.bf16.msra.mxu0 0
  %3623 = vmatprep.subr.bf16.mxu0 0
  %3624 = vmatpush1.bf16.msra.mxu0 0
  %3625 = vmatprep.subr.bf16.mxu0 0
  %3626 = vmatpush1.bf16.msra.mxu0 0
  %3627 = vmatprep.subr.bf16.mxu0 0
  %3628 = vmatpush1.bf16.msra.mxu0 %v3604
  %3629 = vmatprep.subr.bf16.mxu0 0
  %3630 = vmatpush1.bf16.msra.mxu0 %v3603
  %3631 = vmatprep.subr.bf16.mxu0 0
  %3632 = vmatpush2.bf16.msra.mxu0 0
  %3633 = vmatprep.subr.bf16.mxu0 0
  %3634 = vmatpush2.bf16.msra.mxu0 0
  %3635 = vmatprep.subr.bf16.mxu0 0
  %3636 = vmatpush2.bf16.msra.mxu0 0
  %3637 = vmatprep.subr.bf16.mxu0 0
  %3638 = vmatpush2.bf16.msra.mxu0 0
  %3639 = vmatprep.subr.bf16.mxu0 0
  %3640 = vmatpush2.bf16.msra.mxu0 0
  %3641 = vmatprep.subr.bf16.mxu0 0
  %3642 = vmatpush2.bf16.msra.mxu0 0
  %3643 = vmatprep.subr.bf16.mxu0 0
  %3644 = vmatpush2.bf16.msra.mxu0 0
  %3645 = vmatprep.subr.bf16.mxu0 0
  %3646 = vmatpush2.bf16.msra.mxu0 0
  %3647 = vmatprep.mubr.bf16.mxu0 0
  %3648 = vmatmul.mubr.bf16.gmra.mxu0 %v3613
  %v3649 = vpop.f32.mrf.mxu0
  %v3650 = vadd.f32 %v3610, %v3649
  %v3651 = vpop.f32.mrf.mxu0
  %v3652 = vpop.f32.mrf.mxu0
  %v3653 = vpop.f32.mrf.mxu0
  %3654 = vdwg.mxu0
  %v3655 = vmax.f32 %v3650, 0.0
  %v3656 = vld [vmem:[%s19] sm:$0x1]
  %v3658 = vlaneseq
  %v3659 = vshrl.u32 %v3658, 7
  %v3660 = vsub.s32 0, %v3659
  %v3661 = vrot.slane %v3656, %v3660
  %v3663 = vmul.f32 %v3655, %v3661
  %vm3664 = vcmask 254976
  %v3665 = vsel %vm3664, %v3663, 0.0
  %3666 = vadd.xlane.f32.xlu0 %v3665
  %v3667 = vpop.xlane.xlu0 %3666
  %v3668 = vld [vmem:[#allocation2] sm:$0x1]
  %v3670 = vlaneseq
  %v3671 = vshrl.u32 %v3670, 7
  %v3672 = vsub.s32 0, %v3671
  %v3673 = vrot.slane %v3668, %v3672
  %v3675 = vadd.f32 %v3667, %v3673
  %vm3676 = vcmask 1024
  %3677 = vst.msk [vmem:[%s21] sm:$0x3] %vm3676, %v3675
  // Predicated region
  $region86: #{tpu_custom_call.1} parent=0 // pred_check
    _
  $region87: #{tpu_custom_call.1} parent=0 // pred_check_branch
    %3679 = sbr.rel (0) target = $region89
  $region88: #{tpu_custom_call.1} parent=0 // pred_region
    _
  $region89: #{tpu_custom_call.1} parent=0 // pred_fallthru
    _
  // Predicated region
  $region90: #{tpu_custom_call.1} parent=0 // pred_check
    _
  $region91: #{tpu_custom_call.1} parent=0 // pred_check_branch
    %3681 = sbr.rel (0) target = $region93
  $region92: #{tpu_custom_call.1} parent=0 // pred_region
    _
  $region93: #{tpu_custom_call.1} parent=0 // pred_fallthru
    _

</llo_original>
